<compile_context>
chip_gen: v6e
topology: v6e:2x2x1
jax: 0.10.0
libtpu: 0.0.40
codegen_flags: <defaults>
</compile_context>

<pallas_src>
import functools

import jax
import jax.numpy as jnp
from jax import lax
from jax.experimental import pallas as pl
from jax.experimental.pallas import tpu as pltpu

_EPS = 1e-5          # BatchNorm3d eps
_NEG_SLOPE = 0.1     # LeakyReLU negative slope
_K = 7               # sSE conv1 kernel size
_PAD = 3             # sSE conv1 padding


# --------------------------------------------------------------------------
# Fused forward kernel for one batch element.
# --------------------------------------------------------------------------
def _cs_se_kernel(x_ref, w1_ref, b1_ref, w2_ref, b2_ref, tmat_ref, mask_ref,
                  chan_ref, scal_ref, o_ref, gate_ref, *, w_dim):
    _, C, D, HW = x_ref.shape
    Dr = tmat_ref.shape[0] // (_K * _K)           # D rounded up to 8
    f32 = jnp.float32

    # ------------- cSE: global avg/max pool + 2-layer MLP gate -------------
    xv = x_ref[0].astype(f32)                     # (C, D, HW)
    sum_d = jnp.sum(xv, axis=1)                   # (C, HW)  sublane reduce
    max_d = jnp.max(xv, axis=1)                   # (C, HW)
    ssum = jnp.sum(sum_d, axis=1, keepdims=True)  # (C, 1)   lane reduce
    smax = jnp.max(max_d, axis=1, keepdims=True)  # (C, 1)
    pooled = jnp.concatenate([ssum * (1.0 / (D * HW)), smax], axis=1)  # (C, 2)

    a1 = jnp.dot(w1_ref[...], pooled, preferred_element_type=f32) + b1_ref[...]
    h1 = jnp.maximum(a1, _NEG_SLOPE * a1)         # LeakyReLU(0.1)
    a2 = jnp.dot(w2_ref[...], h1, preferred_element_type=f32) + b2_ref[...]
    gate_ref[...] = jax.nn.sigmoid(a2[:, 0:1] + a2[:, 1:2])           # (C, 1)

    # ------------- sSE squeeze maps in ONE sweep over channels -------------
    conv_b = scal_ref[0]
    conv1_b = scal_ref[1]

    def red_body(c, carry):
        xs, xm, xc = carry
        slab = x_ref[0, c].astype(f32)            # (D, HW)
        w_c = chan_ref[4, c]                      # 1x1x1 conv weight (scalar)
        return xs + slab, jnp.maximum(xm, slab), xc + slab * w_c

    zeros_dh = jnp.zeros((D, HW), f32)
    xsum, xmax, xconv = lax.fori_loop(
        0, C, red_body,
        (zeros_dh, jnp.full((D, HW), -jnp.inf, f32), zeros_dh))
    xavg = xsum * (1.0 / C)
    xconv = xconv + conv_b

    # D-padded stack of the three squeeze maps (3-row zero halo each;
    # H/W zero padding handled via the per-tap lane masks below).
    zp = jnp.zeros((_PAD, HW), f32)
    padded = jnp.concatenate(
        [zp, xavg, zp, zp, xmax, zp, zp, xconv, zp], axis=0)   # (3*Dp, HW)

    # 7x7x7 conv: ONE banded matmul for all 49 (kh, kw) taps on the MXU,
    # then lane-roll + mask + accumulate each tap's (Dr, HW) output slice.
    big = jnp.dot(tmat_ref[...], padded, preferred_element_type=f32)  # (49*Dr, HW)

    acc = jnp.zeros((Dr, HW), f32)
    for t in range(_K * _K):
        kh, kw = divmod(t, _K)
        s = (kh - _PAD) * w_dim + (kw - _PAD)     # flat (h, w) lane shift
        eff = (-s) % HW
        contrib = big[t * Dr:(t + 1) * Dr, :]     # sublane-aligned static slice
        if eff:
            contrib = jnp.roll(contrib, eff, axis=1)
        acc = acc + contrib * mask_ref[t:t + 1, :]
    sq = jax.nn.sigmoid(acc[:D, :] + conv1_b)     # (D, HW) spatial gate

    # ------------- fused BN + gates + elementwise max (per channel) --------
    def apply_body(c, carry):
        slab = x_ref[0, c].astype(f32)            # (D, HW)
        g = gate_ref[pl.ds(c, 1), :]              # (1, 1) channel gate
        sc_c = chan_ref[0, c]
        sh_c = chan_ref[1, c]
        sc_s = chan_ref[2, c]
        sh_s = chan_ref[3, c]
        cse = (slab * sc_c + sh_c) * g
        sse = (slab * sc_s + sh_s) * sq
        o_ref[0, c] = jnp.maximum(cse, sse).astype(o_ref.dtype)
        return carry

    lax.fori_loop(0, C, apply_body, 0)


# --------------------------------------------------------------------------
# Wrapper: parameter folding / packing + pallas_call.
# --------------------------------------------------------------------------
def channel_spatial_se_3d(x, params):
    B, C, D, H, W = x.shape
    HW = H * W
    Dp = D + 2 * _PAD
    Dr = ((D + 7) // 8) * 8
    f32 = jnp.float32
    Cr = params["fc1_w"].shape[0]

    def bn_fold(g, b, m, v):
        scale = g / jnp.sqrt(v + _EPS)
        return scale.astype(f32), (b - m * scale).astype(f32)

    sc_c, sh_c = bn_fold(params["gamma_c"], params["beta_c"],
                         params["mean_c"], params["var_c"])
    sc_s, sh_s = bn_fold(params["gamma_s"], params["beta_s"],
                         params["mean_s"], params["var_s"])
    # Per-channel scalars in SMEM: rows = [sc_c, sh_c, sc_s, sh_s, conv_w].
    chan = jnp.stack([sc_c, sh_c, sc_s, sh_s,
                      params["conv_w"].astype(f32)], axis=0)          # (5, C)

    w1 = params["fc1_w"].astype(f32)                                  # (Cr, C)
    b1 = params["fc1_b"].reshape(Cr, 1).astype(f32)
    w2 = params["fc2_w"].astype(f32)                                  # (C, Cr)
    b2 = params["fc2_b"].reshape(C, 1).astype(f32)

    # Banded tap matrices for ALL taps stacked on the M axis:
    #   big_tmat[t*Dr + d, m*Dp + p] = conv1_w[0, m, p - d, kh, kw]  (t = kh*7+kw)
    w7 = params["conv1_w"][0].astype(f32)                             # (3, 7, 7, 7)
    band = (jnp.arange(Dp)[None, None, :] ==
            (jnp.arange(D)[None, :, None] + jnp.arange(_K)[:, None, None])
            ).astype(f32)                                             # (7, D, Dp)
    tmat = jnp.einsum("mkhw,kdp->hwdmp", w7, band,
                      precision=lax.Precision.HIGHEST)                # (7,7,D,3,Dp)
    tmat = tmat.reshape(_K, _K, D, 3 * Dp)
    tmat = jnp.pad(tmat, ((0, 0), (0, 0), (0, Dr - D), (0, 0)))
    big_tmat = tmat.reshape(_K * _K * Dr, 3 * Dp)                     # (49*Dr, 3*Dp)

    # Compact 2-D validity masks for the 49 (kh, kw) lane shifts (h/w zero pad).
    off = jnp.arange(_K) - _PAD
    hh = jnp.arange(H)[None, :] + off[:, None]                        # (7, H)
    ww = jnp.arange(W)[None, :] + off[:, None]                        # (7, W)
    valid = ((hh >= 0) & (hh < H))[:, None, :, None] & \
            ((ww >= 0) & (ww < W))[None, :, None, :]                  # (7,7,H,W)
    mask2 = valid.reshape(_K * _K, HW).astype(f32)                    # (49, HW)

    scal = jnp.stack([params["conv_b"][0],
                      params["conv1_b"][0]]).astype(f32)              # (2,)

    x3 = x.reshape(B, C, D, HW)

    def vspec(a):
        zeros = (0,) * a.ndim
        return pl.BlockSpec(a.shape, lambda b: zeros)

    smem_spec = pl.BlockSpec(memory_space=pltpu.MemorySpace.SMEM)

    # --- VMEM limit with headroom derived from the device's actual VMEM. ---
    cap = 128 << 20
    try:
        cap = int(getattr(pltpu.get_tpu_info(), "vmem_capacity_bytes", cap))
    except Exception:
        pass
    ceiling = max(32 << 20, min(int(cap * 0.85), cap - (8 << 20)))
    blk = C * D * HW * x.dtype.itemsize
    need = (4 * blk + C * D * HW * 4                     # 2x in + 2x out + f32 temp
            + int(big_tmat.size + mask2.size + w1.size + w2.size
                  + b1.size + b2.size) * 4
            + (49 * Dr + 3 * Dp + 8 * Dr + 4 * C) * HW * 4
            + (4 << 20))
    vmem_limit = int(min(ceiling, max(32 << 20, need)))

    grid_spec = pltpu.PrefetchScalarGridSpec(
        num_scalar_prefetch=0,
        grid=(B,),
        in_specs=[pl.BlockSpec((1, C, D, HW), lambda b: (b, 0, 0, 0)),
                  vspec(w1), vspec(b1), vspec(w2), vspec(b2),
                  vspec(big_tmat), vspec(mask2),
                  smem_spec, smem_spec],
        out_specs=pl.BlockSpec((1, C, D, HW), lambda b: (b, 0, 0, 0)),
        scratch_shapes=[pltpu.VMEM((C, 1), f32)])

    out = pl.pallas_call(
        functools.partial(_cs_se_kernel, w_dim=W),
        out_shape=jax.ShapeDtypeStruct((B, C, D, HW), x.dtype),
        grid_spec=grid_spec,
        compiler_params=pltpu.CompilerParams(
            dimension_semantics=("parallel",),
            vmem_limit_bytes=vmem_limit),
    )(x3, w1, b1, w2, b2, big_tmat, mask2, chan, scal)
    return out.reshape(B, C, D, H, W)


# --------------------------------------------------------------------------
# Deterministic parameter init (shapes from the module's __init__).
# --------------------------------------------------------------------------
def init_params(key, C, reduction_ratio=2):
    Cr = C // reduction_ratio
    ks = jax.random.split(key, 16)
    n = lambda k, shape, s=0.2: s * jax.random.normal(k, shape, jnp.float32)
    return {
        # cSE
        "fc1_w": n(ks[0], (Cr, C)),
        "fc1_b": n(ks[1], (Cr,)),
        "fc2_w": n(ks[2], (C, Cr)),
        "fc2_b": n(ks[3], (C,)),
        "gamma_c": 1.0 + n(ks[4], (C,), 0.1),
        "beta_c": n(ks[5], (C,), 0.1),
        "mean_c": n(ks[6], (C,), 0.1),
        "var_c": 1.0 + 0.5 * jax.random.uniform(ks[7], (C,), jnp.float32),
        # sSE
        "conv_w": n(ks[8], (C,)),                 # Conv3d(C, 1, 1) weight
        "conv_b": n(ks[9], (1,)),
        "conv1_w": n(ks[10], (1, 3, _K, _K, _K), 0.05),
        "conv1_b": n(ks[11], (1,)),
        "gamma_s": 1.0 + n(ks[12], (C,), 0.1),
        "beta_s": n(ks[13], (C,), 0.1),
        "mean_s": n(ks[14], (C,), 0.1),
        "var_s": 1.0 + 0.5 * jax.random.uniform(ks[15], (C,), jnp.float32),
    }


# --------------------------------------------------------------------------
# Pure-JAX reference (correctness check).
# --------------------------------------------------------------------------
def reference(x, p):
    # cSE
    s_avg = jnp.mean(x, axis=(2, 3, 4))
    s_max = jnp.max(x, axis=(2, 3, 4))

    def fc(v):
        a1 = v @ p["fc1_w"].T + p["fc1_b"]
        h1 = jnp.maximum(a1, _NEG_SLOPE * a1)
        return h1 @ p["fc2_w"].T + p["fc2_b"]

    gate = jax.nn.sigmoid(fc(s_avg) + fc(s_max))                 # (B, C)

    def bn(t, g, b, m, v):
        g = g[None, :, None, None, None]
        b = b[None, :, None, None, None]
        m = m[None, :, None, None, None]
        v = v[None, :, None, None, None]
        return (t - m) / jnp.sqrt(v + _EPS) * g + b

    cse = bn(x, p["gamma_c"], p["beta_c"], p["mean_c"], p["var_c"]) \
        * gate[:, :, None, None, None]

    # sSE
    xconv = jnp.einsum("bcdhw,c->bdhw", x, p["conv_w"],
                       precision=lax.Precision.HIGHEST) + p["conv_b"][0]
    xavg = jnp.mean(x, axis=1)
    xmax = jnp.max(x, axis=1)
    maps = jnp.stack([xavg, xmax, xconv], axis=1)                # (B,3,D,H,W)
    conv = lax.conv_general_dilated(
        maps, p["conv1_w"], window_strides=(1, 1, 1),
        padding=[(_PAD, _PAD)] * 3,
        dimension_numbers=("NCDHW", "OIDHW", "NCDHW"),
        precision=lax.Precision.HIGHEST) + p["conv1_b"][0]
    sq = jax.nn.sigmoid(conv)                                    # (B,1,D,H,W)
    sse = bn(x, p["gamma_s"], p["beta_s"], p["mean_s"], p["var_s"]) * sq
    return jnp.maximum(cse, sse)


if __name__ == "__main__":
    B, C, D, H, W = 2, 8, 8, 16, 16
    key = jax.random.PRNGKey(0)
    kx, kp = jax.random.split(key)
    x = jax.random.normal(kx, (B, C, D, H, W), jnp.float32)
    params = init_params(kp, C)

    out = jax.block_until_ready(channel_spatial_se_3d(x, params))

    with jax.default_matmul_precision("highest"):
        ref = reference(x, params)
    ref = jax.block_until_ready(ref)

    err = float(jnp.max(jnp.abs(out - ref)))
    if not bool(jnp.allclose(out, ref, atol=2e-2, rtol=2e-2)):
        raise AssertionError(
            f"Pallas kernel mismatch vs JAX reference (max abs err {err})")
    print("KERNEL_OK")
</pallas_src>

<mosaic_0001>
module attributes {stable_mosaic.version = 11 : i64} {
  func.func @_cs_se_kernel(%arg0: i32, %arg1: memref<1x8x8x256xf32, #tpu.memory_space<vmem>>, %arg2: memref<4x8xf32, #tpu.memory_space<vmem>>, %arg3: memref<4x1xf32, #tpu.memory_space<vmem>>, %arg4: memref<8x4xf32, #tpu.memory_space<vmem>>, %arg5: memref<8x1xf32, #tpu.memory_space<vmem>>, %arg6: memref<392x42xf32, #tpu.memory_space<vmem>>, %arg7: memref<49x256xf32, #tpu.memory_space<vmem>>, %arg8: memref<5x8xf32, #tpu.memory_space<smem>>, %arg9: memref<2xf32, #tpu.memory_space<smem>>, %arg10: memref<1x8x8x256xf32, #tpu.memory_space<vmem>>, %arg11: memref<8x1xf32, #tpu.memory_space<vmem>>) attributes {dimension_semantics = [#tpu.dimension_semantics<parallel>], iteration_bounds = array<i64: 2>, scalar_prefetch = 0 : i64, scratch_operands = 1 : i64, tpu.core_type = #tpu.core_type<tc>, window_params = [{transform_indices = @transform_0, window_bounds = array<i64: 1, 8, 8, 256>}, {pipeline_mode = #tpu.pipeline_mode<synchronous>, transform_indices = @transform_1, window_bounds = array<i64: 4, 8>}, {pipeline_mode = #tpu.pipeline_mode<synchronous>, transform_indices = @transform_2, window_bounds = array<i64: 4, 1>}, {pipeline_mode = #tpu.pipeline_mode<synchronous>, transform_indices = @transform_3, window_bounds = array<i64: 8, 4>}, {pipeline_mode = #tpu.pipeline_mode<synchronous>, transform_indices = @transform_4, window_bounds = array<i64: 8, 1>}, {pipeline_mode = #tpu.pipeline_mode<synchronous>, transform_indices = @transform_5, window_bounds = array<i64: 392, 42>}, {pipeline_mode = #tpu.pipeline_mode<synchronous>, transform_indices = @transform_6, window_bounds = array<i64: 49, 256>}, {transform_indices = @transform_7, window_bounds = array<i64: 5, 8>}, {transform_indices = @transform_8, window_bounds = array<i64: 2>}, {transform_indices = @transform_9, window_bounds = array<i64: 1, 8, 8, 256>}]} {
    %c0 = arith.constant 0 : index
    %c0_0 = arith.constant 0 : index
    %c0_1 = arith.constant 0 : index
    %c0_2 = arith.constant 0 : index
    %0 = vector.load %arg1[%c0, %c0_0, %c0_1, %c0_2] : memref<1x8x8x256xf32, #tpu.memory_space<vmem>>, vector<1x8x8x256xf32>
    %1 = vector.shape_cast %0 : vector<1x8x8x256xf32> to vector<8x8x256xf32>
    %cst = arith.constant dense<0.000000e+00> : vector<8x256xf32>
    %2 = vector.multi_reduction <add>, %1, %cst [1] : vector<8x8x256xf32> to vector<8x256xf32>
    %cst_3 = arith.constant dense<0xFF800000> : vector<8x256xf32>
    %3 = vector.multi_reduction <maximumf>, %1, %cst_3 [1] : vector<8x8x256xf32> to vector<8x256xf32>
    %cst_4 = arith.constant dense<0.000000e+00> : vector<8xf32>
    %4 = vector.multi_reduction <add>, %2, %cst_4 [1] : vector<8x256xf32> to vector<8xf32>
    %5 = vector.shape_cast %4 : vector<8xf32> to vector<8x1xf32>
    %cst_5 = arith.constant dense<0xFF800000> : vector<8xf32>
    %6 = vector.multi_reduction <maximumf>, %3, %cst_5 [1] : vector<8x256xf32> to vector<8xf32>
    %7 = vector.shape_cast %6 : vector<8xf32> to vector<8x1xf32>
    %cst_6 = arith.constant 4.8828125E-4 : f32
    %8 = vector.broadcast %cst_6 : f32 to vector<8x1xf32>
    %9 = arith.mulf %5, %8 : vector<8x1xf32>
    %10 = tpu.concatenate %9, %7 in 1 : vector<8x1xf32>, vector<8x1xf32> -> vector<8x2xf32>
    %c0_7 = arith.constant 0 : index
    %c0_8 = arith.constant 0 : index
    %11 = vector.load %arg2[%c0_7, %c0_8] : memref<4x8xf32, #tpu.memory_space<vmem>>, vector<4x8xf32>
    %cst_9 = arith.constant dense<0.000000e+00> : vector<4x2xf32>
    %12 = tpu.matmul %11, %10, %cst_9 {dimension_numbers = #tpu.dot_dimension_numbers<[1], [0], [0], [1], [0, 0, 1, 1], [], []>} : vector<4x8xf32>, vector<8x2xf32>, vector<4x2xf32> -> vector<4x2xf32>
    %c0_10 = arith.constant 0 : index
    %c0_11 = arith.constant 0 : index
    %13 = vector.load %arg3[%c0_10, %c0_11] : memref<4x1xf32, #tpu.memory_space<vmem>>, vector<4x1xf32>
    %14 = vector.broadcast %13 : vector<4x1xf32> to vector<4x2xf32>
    %15 = arith.addf %12, %14 : vector<4x2xf32>
    %cst_12 = arith.constant 1.000000e-01 : f32
    %16 = vector.broadcast %cst_12 : f32 to vector<4x2xf32>
    %17 = arith.mulf %16, %15 : vector<4x2xf32>
    %18 = arith.maximumf %15, %17 : vector<4x2xf32>
    %c0_13 = arith.constant 0 : index
    %c0_14 = arith.constant 0 : index
    %19 = vector.load %arg4[%c0_13, %c0_14] : memref<8x4xf32, #tpu.memory_space<vmem>>, vector<8x4xf32>
    %cst_15 = arith.constant dense<0.000000e+00> : vector<8x2xf32>
    %20 = tpu.matmul %19, %18, %cst_15 {dimension_numbers = #tpu.dot_dimension_numbers<[1], [0], [0], [1], [0, 0, 1, 1], [], []>} : vector<8x4xf32>, vector<4x2xf32>, vector<8x2xf32> -> vector<8x2xf32>
    %c0_16 = arith.constant 0 : index
    %c0_17 = arith.constant 0 : index
    %21 = vector.load %arg5[%c0_16, %c0_17] : memref<8x1xf32, #tpu.memory_space<vmem>>, vector<8x1xf32>
    %22 = vector.broadcast %21 : vector<8x1xf32> to vector<8x2xf32>
    %23 = arith.addf %20, %22 : vector<8x2xf32>
    %24 = vector.extract_strided_slice %23 {offsets = [0, 0], sizes = [8, 1], strides = [1, 1]} : vector<8x2xf32> to vector<8x1xf32>
    %25 = vector.extract_strided_slice %23 {offsets = [0, 1], sizes = [8, 1], strides = [1, 1]} : vector<8x2xf32> to vector<8x1xf32>
    %26 = arith.addf %24, %25 : vector<8x1xf32>
    %27 = arith.negf %26 : vector<8x1xf32>
    %28 = math.exp %27 : vector<8x1xf32>
    %cst_18 = arith.constant 1.000000e+00 : f32
    %29 = vector.broadcast %cst_18 : f32 to vector<8x1xf32>
    %30 = arith.addf %29, %28 : vector<8x1xf32>
    %31 = arith.divf %29, %30 : vector<8x1xf32>
    %c0_19 = arith.constant 0 : index
    %c0_20 = arith.constant 0 : index
    %32 = vector.load %arg11[%c0_19, %c0_20] : memref<8x1xf32, #tpu.memory_space<vmem>>, vector<8x1xf32>
    tpu.vector_store %arg11[%c0_19, %c0_20], %31 {strides = array<i32>} : memref<8x1xf32, #tpu.memory_space<vmem>>, vector<8x1xf32>,
    %c0_21 = arith.constant 0 : index
    %33 = memref.load %arg9[%c0_21] : memref<2xf32, #tpu.memory_space<smem>>
    %c1 = arith.constant 1 : index
    %34 = memref.load %arg9[%c1] : memref<2xf32, #tpu.memory_space<smem>>
    %cst_22 = arith.constant 0.000000e+00 : f32
    %35 = vector.broadcast %cst_22 : f32 to vector<8x256xf32>
    %cst_23 = arith.constant 0xFF800000 : f32
    %36 = vector.broadcast %cst_23 : f32 to vector<8x256xf32>
    %c0_i32 = arith.constant 0 : i32
    %c8_i32 = arith.constant 8 : i32
    %37 = arith.addi %c0_i32, %c8_i32 : i32
    %c1_i32 = arith.constant 1 : i32
    %38:3 = scf.for %arg12 = %c0_i32 to %37 step %c1_i32 iter_args(%arg13 = %35, %arg14 = %36, %arg15 = %35) -> (vector<8x256xf32>, vector<8x256xf32>, vector<8x256xf32>)  : i32 {
      %c0_87 = arith.constant 0 : index
      %445 = arith.index_cast %arg12 : i32 to index
      %c0_88 = arith.constant 0 : index
      %c0_89 = arith.constant 0 : index
      %446 = vector.load %arg1[%c0_87, %445, %c0_88, %c0_89] : memref<1x8x8x256xf32, #tpu.memory_space<vmem>>, vector<1x1x8x256xf32>
      %447 = vector.shape_cast %446 : vector<1x1x8x256xf32> to vector<8x256xf32>
      %c4_90 = arith.constant 4 : index
      %448 = arith.index_cast %arg12 : i32 to index
      %449 = memref.load %arg8[%c4_90, %448] : memref<5x8xf32, #tpu.memory_space<smem>>
      %450 = arith.addf %arg13, %447 : vector<8x256xf32>
      %451 = arith.maximumf %arg14, %447 : vector<8x256xf32>
      %452 = vector.broadcast %449 : f32 to vector<8x256xf32>
      %453 = arith.mulf %447, %452 : vector<8x256xf32>
      %454 = arith.addf %arg15, %453 : vector<8x256xf32>
      scf.yield %450, %451, %454 : vector<8x256xf32>, vector<8x256xf32>, vector<8x256xf32>
    }
    %c8_i32_24 = arith.constant 8 : i32
    %cst_25 = arith.constant 1.250000e-01 : f32
    %39 = vector.broadcast %cst_25 : f32 to vector<8x256xf32>
    %40 = arith.mulf %38#0, %39 : vector<8x256xf32>
    %41 = vector.broadcast %33 : f32 to vector<8x256xf32>
    %42 = arith.addf %38#2, %41 : vector<8x256xf32>
    %cst_26 = arith.constant 0.000000e+00 : f32
    %43 = vector.broadcast %cst_26 : f32 to vector<3x256xf32>
    %44 = tpu.concatenate %43, %40, %43, %43, %38#1, %43, %43, %42, %43 in 0 : vector<3x256xf32>, vector<8x256xf32>, vector<3x256xf32>, vector<3x256xf32>, vector<8x256xf32>, vector<3x256xf32>, vector<3x256xf32>, vector<8x256xf32>, vector<3x256xf32> -> vector<42x256xf32>
    %c0_27 = arith.constant 0 : index
    %c0_28 = arith.constant 0 : index
    %45 = vector.load %arg6[%c0_27, %c0_28] : memref<392x42xf32, #tpu.memory_space<vmem>>, vector<392x42xf32>
    %cst_29 = arith.constant dense<0.000000e+00> : vector<392x256xf32>
    %46 = tpu.matmul %45, %44, %cst_29 {dimension_numbers = #tpu.dot_dimension_numbers<[1], [0], [0], [1], [0, 0, 1, 1], [], []>} : vector<392x42xf32>, vector<42x256xf32>, vector<392x256xf32> -> vector<392x256xf32>
    %cst_30 = arith.constant 0.000000e+00 : f32
    %47 = vector.broadcast %cst_30 : f32 to vector<8x256xf32>
    %48 = vector.extract_strided_slice %46 {offsets = [0, 0], sizes = [8, 256], strides = [1, 1]} : vector<392x256xf32> to vector<8x256xf32>
    %49 = vector.extract_strided_slice %48 {offsets = [0, 205], sizes = [8, 51], strides = [1, 1]} : vector<8x256xf32> to vector<8x51xf32>
    %50 = vector.extract_strided_slice %48 {offsets = [0, 0], sizes = [8, 205], strides = [1, 1]} : vector<8x256xf32> to vector<8x205xf32>
    %51 = tpu.concatenate %49, %50 in 1 : vector<8x51xf32>, vector<8x205xf32> -> vector<8x256xf32>
    %c0_31 = arith.constant 0 : index
    %c0_32 = arith.constant 0 : index
    %52 = vector.load %arg7[%c0_31, %c0_32] : memref<49x256xf32, #tpu.memory_space<vmem>>, vector<1x256xf32>
    %53 = vector.broadcast %52 : vector<1x256xf32> to vector<8x256xf32>
    %54 = arith.mulf %51, %53 : vector<8x256xf32>
    %55 = arith.addf %47, %54 : vector<8x256xf32>
    %56 = vector.extract_strided_slice %46 {offsets = [8, 0], sizes = [8, 256], strides = [1, 1]} : vector<392x256xf32> to vector<8x256xf32>
    %57 = vector.extract_strided_slice %56 {offsets = [0, 206], sizes = [8, 50], strides = [1, 1]} : vector<8x256xf32> to vector<8x50xf32>
    %58 = vector.extract_strided_slice %56 {offsets = [0, 0], sizes = [8, 206], strides = [1, 1]} : vector<8x256xf32> to vector<8x206xf32>
    %59 = tpu.concatenate %57, %58 in 1 : vector<8x50xf32>, vector<8x206xf32> -> vector<8x256xf32>
    %c1_33 = arith.constant 1 : index
    %c0_34 = arith.constant 0 : index
    %60 = vector.load %arg7[%c1_33, %c0_34] : memref<49x256xf32, #tpu.memory_space<vmem>>, vector<1x256xf32>
    %61 = vector.broadcast %60 : vector<1x256xf32> to vector<8x256xf32>
    %62 = arith.mulf %59, %61 : vector<8x256xf32>
    %63 = arith.addf %55, %62 : vector<8x256xf32>
    %64 = vector.extract_strided_slice %46 {offsets = [16, 0], sizes = [8, 256], strides = [1, 1]} : vector<392x256xf32> to vector<8x256xf32>
    %65 = vector.extract_strided_slice %64 {offsets = [0, 207], sizes = [8, 49], strides = [1, 1]} : vector<8x256xf32> to vector<8x49xf32>
    %66 = vector.extract_strided_slice %64 {offsets = [0, 0], sizes = [8, 207], strides = [1, 1]} : vector<8x256xf32> to vector<8x207xf32>
    %67 = tpu.concatenate %65, %66 in 1 : vector<8x49xf32>, vector<8x207xf32> -> vector<8x256xf32>
    %c2 = arith.constant 2 : index
    %c0_35 = arith.constant 0 : index
    %68 = vector.load %arg7[%c2, %c0_35] : memref<49x256xf32, #tpu.memory_space<vmem>>, vector<1x256xf32>
    %69 = vector.broadcast %68 : vector<1x256xf32> to vector<8x256xf32>
    %70 = arith.mulf %67, %69 : vector<8x256xf32>
    %71 = arith.addf %63, %70 : vector<8x256xf32>
    %72 = vector.extract_strided_slice %46 {offsets = [24, 0], sizes = [8, 256], strides = [1, 1]} : vector<392x256xf32> to vector<8x256xf32>
    %73 = vector.extract_strided_slice %72 {offsets = [0, 208], sizes = [8, 48], strides = [1, 1]} : vector<8x256xf32> to vector<8x48xf32>
    %74 = vector.extract_strided_slice %72 {offsets = [0, 0], sizes = [8, 208], strides = [1, 1]} : vector<8x256xf32> to vector<8x208xf32>
    %75 = tpu.concatenate %73, %74 in 1 : vector<8x48xf32>, vector<8x208xf32> -> vector<8x256xf32>
    %c3 = arith.constant 3 : index
    %c0_36 = arith.constant 0 : index
    %76 = vector.load %arg7[%c3, %c0_36] : memref<49x256xf32, #tpu.memory_space<vmem>>, vector<1x256xf32>
    %77 = vector.broadcast %76 : vector<1x256xf32> to vector<8x256xf32>
    %78 = arith.mulf %75, %77 : vector<8x256xf32>
    %79 = arith.addf %71, %78 : vector<8x256xf32>
    %80 = vector.extract_strided_slice %46 {offsets = [32, 0], sizes = [8, 256], strides = [1, 1]} : vector<392x256xf32> to vector<8x256xf32>
    %81 = vector.extract_strided_slice %80 {offsets = [0, 209], sizes = [8, 47], strides = [1, 1]} : vector<8x256xf32> to vector<8x47xf32>
    %82 = vector.extract_strided_slice %80 {offsets = [0, 0], sizes = [8, 209], strides = [1, 1]} : vector<8x256xf32> to vector<8x209xf32>
    %83 = tpu.concatenate %81, %82 in 1 : vector<8x47xf32>, vector<8x209xf32> -> vector<8x256xf32>
    %c4 = arith.constant 4 : index
    %c0_37 = arith.constant 0 : index
    %84 = vector.load %arg7[%c4, %c0_37] : memref<49x256xf32, #tpu.memory_space<vmem>>, vector<1x256xf32>
    %85 = vector.broadcast %84 : vector<1x256xf32> to vector<8x256xf32>
    %86 = arith.mulf %83, %85 : vector<8x256xf32>
    %87 = arith.addf %79, %86 : vector<8x256xf32>
    %88 = vector.extract_strided_slice %46 {offsets = [40, 0], sizes = [8, 256], strides = [1, 1]} : vector<392x256xf32> to vector<8x256xf32>
    %89 = vector.extract_strided_slice %88 {offsets = [0, 210], sizes = [8, 46], strides = [1, 1]} : vector<8x256xf32> to vector<8x46xf32>
    %90 = vector.extract_strided_slice %88 {offsets = [0, 0], sizes = [8, 210], strides = [1, 1]} : vector<8x256xf32> to vector<8x210xf32>
    %91 = tpu.concatenate %89, %90 in 1 : vector<8x46xf32>, vector<8x210xf32> -> vector<8x256xf32>
    %c5 = arith.constant 5 : index
    %c0_38 = arith.constant 0 : index
    %92 = vector.load %arg7[%c5, %c0_38] : memref<49x256xf32, #tpu.memory_space<vmem>>, vector<1x256xf32>
    %93 = vector.broadcast %92 : vector<1x256xf32> to vector<8x256xf32>
    %94 = arith.mulf %91, %93 : vector<8x256xf32>
    %95 = arith.addf %87, %94 : vector<8x256xf32>
    %96 = vector.extract_strided_slice %46 {offsets = [48, 0], sizes = [8, 256], strides = [1, 1]} : vector<392x256xf32> to vector<8x256xf32>
    %97 = vector.extract_strided_slice %96 {offsets = [0, 211], sizes = [8, 45], strides = [1, 1]} : vector<8x256xf32> to vector<8x45xf32>
    %98 = vector.extract_strided_slice %96 {offsets = [0, 0], sizes = [8, 211], strides = [1, 1]} : vector<8x256xf32> to vector<8x211xf32>
    %99 = tpu.concatenate %97, %98 in 1 : vector<8x45xf32>, vector<8x211xf32> -> vector<8x256xf32>
    %c6 = arith.constant 6 : index
    %c0_39 = arith.constant 0 : index
    %100 = vector.load %arg7[%c6, %c0_39] : memref<49x256xf32, #tpu.memory_space<vmem>>, vector<1x256xf32>
    %101 = vector.broadcast %100 : vector<1x256xf32> to vector<8x256xf32>
    %102 = arith.mulf %99, %101 : vector<8x256xf32>
    %103 = arith.addf %95, %102 : vector<8x256xf32>
    %104 = vector.extract_strided_slice %46 {offsets = [56, 0], sizes = [8, 256], strides = [1, 1]} : vector<392x256xf32> to vector<8x256xf32>
    %105 = vector.extract_strided_slice %104 {offsets = [0, 221], sizes = [8, 35], strides = [1, 1]} : vector<8x256xf32> to vector<8x35xf32>
    %106 = vector.extract_strided_slice %104 {offsets = [0, 0], sizes = [8, 221], strides = [1, 1]} : vector<8x256xf32> to vector<8x221xf32>
    %107 = tpu.concatenate %105, %106 in 1 : vector<8x35xf32>, vector<8x221xf32> -> vector<8x256xf32>
    %c7 = arith.constant 7 : index
    %c0_40 = arith.constant 0 : index
    %108 = vector.load %arg7[%c7, %c0_40] : memref<49x256xf32, #tpu.memory_space<vmem>>, vector<1x256xf32>
    %109 = vector.broadcast %108 : vector<1x256xf32> to vector<8x256xf32>
    %110 = arith.mulf %107, %109 : vector<8x256xf32>
    %111 = arith.addf %103, %110 : vector<8x256xf32>
    %112 = vector.extract_strided_slice %46 {offsets = [64, 0], sizes = [8, 256], strides = [1, 1]} : vector<392x256xf32> to vector<8x256xf32>
    %113 = vector.extract_strided_slice %112 {offsets = [0, 222], sizes = [8, 34], strides = [1, 1]} : vector<8x256xf32> to vector<8x34xf32>
    %114 = vector.extract_strided_slice %112 {offsets = [0, 0], sizes = [8, 222], strides = [1, 1]} : vector<8x256xf32> to vector<8x222xf32>
    %115 = tpu.concatenate %113, %114 in 1 : vector<8x34xf32>, vector<8x222xf32> -> vector<8x256xf32>
    %c8 = arith.constant 8 : index
    %c0_41 = arith.constant 0 : index
    %116 = vector.load %arg7[%c8, %c0_41] : memref<49x256xf32, #tpu.memory_space<vmem>>, vector<1x256xf32>
    %117 = vector.broadcast %116 : vector<1x256xf32> to vector<8x256xf32>
    %118 = arith.mulf %115, %117 : vector<8x256xf32>
    %119 = arith.addf %111, %118 : vector<8x256xf32>
    %120 = vector.extract_strided_slice %46 {offsets = [72, 0], sizes = [8, 256], strides = [1, 1]} : vector<392x256xf32> to vector<8x256xf32>
    %121 = vector.extract_strided_slice %120 {offsets = [0, 223], sizes = [8, 33], strides = [1, 1]} : vector<8x256xf32> to vector<8x33xf32>
    %122 = vector.extract_strided_slice %120 {offsets = [0, 0], sizes = [8, 223], strides = [1, 1]} : vector<8x256xf32> to vector<8x223xf32>
    %123 = tpu.concatenate %121, %122 in 1 : vector<8x33xf32>, vector<8x223xf32> -> vector<8x256xf32>
    %c9 = arith.constant 9 : index
    %c0_42 = arith.constant 0 : index
    %124 = vector.load %arg7[%c9, %c0_42] : memref<49x256xf32, #tpu.memory_space<vmem>>, vector<1x256xf32>
    %125 = vector.broadcast %124 : vector<1x256xf32> to vector<8x256xf32>
    %126 = arith.mulf %123, %125 : vector<8x256xf32>
    %127 = arith.addf %119, %126 : vector<8x256xf32>
    %128 = vector.extract_strided_slice %46 {offsets = [80, 0], sizes = [8, 256], strides = [1, 1]} : vector<392x256xf32> to vector<8x256xf32>
    %129 = vector.extract_strided_slice %128 {offsets = [0, 224], sizes = [8, 32], strides = [1, 1]} : vector<8x256xf32> to vector<8x32xf32>
    %130 = vector.extract_strided_slice %128 {offsets = [0, 0], sizes = [8, 224], strides = [1, 1]} : vector<8x256xf32> to vector<8x224xf32>
    %131 = tpu.concatenate %129, %130 in 1 : vector<8x32xf32>, vector<8x224xf32> -> vector<8x256xf32>
    %c10 = arith.constant 10 : index
    %c0_43 = arith.constant 0 : index
    %132 = vector.load %arg7[%c10, %c0_43] : memref<49x256xf32, #tpu.memory_space<vmem>>, vector<1x256xf32>
    %133 = vector.broadcast %132 : vector<1x256xf32> to vector<8x256xf32>
    %134 = arith.mulf %131, %133 : vector<8x256xf32>
    %135 = arith.addf %127, %134 : vector<8x256xf32>
    %136 = vector.extract_strided_slice %46 {offsets = [88, 0], sizes = [8, 256], strides = [1, 1]} : vector<392x256xf32> to vector<8x256xf32>
    %137 = vector.extract_strided_slice %136 {offsets = [0, 225], sizes = [8, 31], strides = [1, 1]} : vector<8x256xf32> to vector<8x31xf32>
    %138 = vector.extract_strided_slice %136 {offsets = [0, 0], sizes = [8, 225], strides = [1, 1]} : vector<8x256xf32> to vector<8x225xf32>
    %139 = tpu.concatenate %137, %138 in 1 : vector<8x31xf32>, vector<8x225xf32> -> vector<8x256xf32>
    %c11 = arith.constant 11 : index
    %c0_44 = arith.constant 0 : index
    %140 = vector.load %arg7[%c11, %c0_44] : memref<49x256xf32, #tpu.memory_space<vmem>>, vector<1x256xf32>
    %141 = vector.broadcast %140 : vector<1x256xf32> to vector<8x256xf32>
    %142 = arith.mulf %139, %141 : vector<8x256xf32>
    %143 = arith.addf %135, %142 : vector<8x256xf32>
    %144 = vector.extract_strided_slice %46 {offsets = [96, 0], sizes = [8, 256], strides = [1, 1]} : vector<392x256xf32> to vector<8x256xf32>
    %145 = vector.extract_strided_slice %144 {offsets = [0, 226], sizes = [8, 30], strides = [1, 1]} : vector<8x256xf32> to vector<8x30xf32>
    %146 = vector.extract_strided_slice %144 {offsets = [0, 0], sizes = [8, 226], strides = [1, 1]} : vector<8x256xf32> to vector<8x226xf32>
    %147 = tpu.concatenate %145, %146 in 1 : vector<8x30xf32>, vector<8x226xf32> -> vector<8x256xf32>
    %c12 = arith.constant 12 : index
    %c0_45 = arith.constant 0 : index
    %148 = vector.load %arg7[%c12, %c0_45] : memref<49x256xf32, #tpu.memory_space<vmem>>, vector<1x256xf32>
    %149 = vector.broadcast %148 : vector<1x256xf32> to vector<8x256xf32>
    %150 = arith.mulf %147, %149 : vector<8x256xf32>
    %151 = arith.addf %143, %150 : vector<8x256xf32>
    %152 = vector.extract_strided_slice %46 {offsets = [104, 0], sizes = [8, 256], strides = [1, 1]} : vector<392x256xf32> to vector<8x256xf32>
    %153 = vector.extract_strided_slice %152 {offsets = [0, 227], sizes = [8, 29], strides = [1, 1]} : vector<8x256xf32> to vector<8x29xf32>
    %154 = vector.extract_strided_slice %152 {offsets = [0, 0], sizes = [8, 227], strides = [1, 1]} : vector<8x256xf32> to vector<8x227xf32>
    %155 = tpu.concatenate %153, %154 in 1 : vector<8x29xf32>, vector<8x227xf32> -> vector<8x256xf32>
    %c13 = arith.constant 13 : index
    %c0_46 = arith.constant 0 : index
    %156 = vector.load %arg7[%c13, %c0_46] : memref<49x256xf32, #tpu.memory_space<vmem>>, vector<1x256xf32>
    %157 = vector.broadcast %156 : vector<1x256xf32> to vector<8x256xf32>
    %158 = arith.mulf %155, %157 : vector<8x256xf32>
    %159 = arith.addf %151, %158 : vector<8x256xf32>
    %160 = vector.extract_strided_slice %46 {offsets = [112, 0], sizes = [8, 256], strides = [1, 1]} : vector<392x256xf32> to vector<8x256xf32>
    %161 = vector.extract_strided_slice %160 {offsets = [0, 237], sizes = [8, 19], strides = [1, 1]} : vector<8x256xf32> to vector<8x19xf32>
    %162 = vector.extract_strided_slice %160 {offsets = [0, 0], sizes = [8, 237], strides = [1, 1]} : vector<8x256xf32> to vector<8x237xf32>
    %163 = tpu.concatenate %161, %162 in 1 : vector<8x19xf32>, vector<8x237xf32> -> vector<8x256xf32>
    %c14 = arith.constant 14 : index
    %c0_47 = arith.constant 0 : index
    %164 = vector.load %arg7[%c14, %c0_47] : memref<49x256xf32, #tpu.memory_space<vmem>>, vector<1x256xf32>
    %165 = vector.broadcast %164 : vector<1x256xf32> to vector<8x256xf32>
    %166 = arith.mulf %163, %165 : vector<8x256xf32>
    %167 = arith.addf %159, %166 : vector<8x256xf32>
    %168 = vector.extract_strided_slice %46 {offsets = [120, 0], sizes = [8, 256], strides = [1, 1]} : vector<392x256xf32> to vector<8x256xf32>
    %169 = vector.extract_strided_slice %168 {offsets = [0, 238], sizes = [8, 18], strides = [1, 1]} : vector<8x256xf32> to vector<8x18xf32>
    %170 = vector.extract_strided_slice %168 {offsets = [0, 0], sizes = [8, 238], strides = [1, 1]} : vector<8x256xf32> to vector<8x238xf32>
    %171 = tpu.concatenate %169, %170 in 1 : vector<8x18xf32>, vector<8x238xf32> -> vector<8x256xf32>
    %c15 = arith.constant 15 : index
    %c0_48 = arith.constant 0 : index
    %172 = vector.load %arg7[%c15, %c0_48] : memref<49x256xf32, #tpu.memory_space<vmem>>, vector<1x256xf32>
    %173 = vector.broadcast %172 : vector<1x256xf32> to vector<8x256xf32>
    %174 = arith.mulf %171, %173 : vector<8x256xf32>
    %175 = arith.addf %167, %174 : vector<8x256xf32>
    %176 = vector.extract_strided_slice %46 {offsets = [128, 0], sizes = [8, 256], strides = [1, 1]} : vector<392x256xf32> to vector<8x256xf32>
    %177 = vector.extract_strided_slice %176 {offsets = [0, 239], sizes = [8, 17], strides = [1, 1]} : vector<8x256xf32> to vector<8x17xf32>
    %178 = vector.extract_strided_slice %176 {offsets = [0, 0], sizes = [8, 239], strides = [1, 1]} : vector<8x256xf32> to vector<8x239xf32>
    %179 = tpu.concatenate %177, %178 in 1 : vector<8x17xf32>, vector<8x239xf32> -> vector<8x256xf32>
    %c16 = arith.constant 16 : index
    %c0_49 = arith.constant 0 : index
    %180 = vector.load %arg7[%c16, %c0_49] : memref<49x256xf32, #tpu.memory_space<vmem>>, vector<1x256xf32>
    %181 = vector.broadcast %180 : vector<1x256xf32> to vector<8x256xf32>
    %182 = arith.mulf %179, %181 : vector<8x256xf32>
    %183 = arith.addf %175, %182 : vector<8x256xf32>
    %184 = vector.extract_strided_slice %46 {offsets = [136, 0], sizes = [8, 256], strides = [1, 1]} : vector<392x256xf32> to vector<8x256xf32>
    %185 = vector.extract_strided_slice %184 {offsets = [0, 240], sizes = [8, 16], strides = [1, 1]} : vector<8x256xf32> to vector<8x16xf32>
    %186 = vector.extract_strided_slice %184 {offsets = [0, 0], sizes = [8, 240], strides = [1, 1]} : vector<8x256xf32> to vector<8x240xf32>
    %187 = tpu.concatenate %185, %186 in 1 : vector<8x16xf32>, vector<8x240xf32> -> vector<8x256xf32>
    %c17 = arith.constant 17 : index
    %c0_50 = arith.constant 0 : index
    %188 = vector.load %arg7[%c17, %c0_50] : memref<49x256xf32, #tpu.memory_space<vmem>>, vector<1x256xf32>
    %189 = vector.broadcast %188 : vector<1x256xf32> to vector<8x256xf32>
    %190 = arith.mulf %187, %189 : vector<8x256xf32>
    %191 = arith.addf %183, %190 : vector<8x256xf32>
    %192 = vector.extract_strided_slice %46 {offsets = [144, 0], sizes = [8, 256], strides = [1, 1]} : vector<392x256xf32> to vector<8x256xf32>
    %193 = vector.extract_strided_slice %192 {offsets = [0, 241], sizes = [8, 15], strides = [1, 1]} : vector<8x256xf32> to vector<8x15xf32>
    %194 = vector.extract_strided_slice %192 {offsets = [0, 0], sizes = [8, 241], strides = [1, 1]} : vector<8x256xf32> to vector<8x241xf32>
    %195 = tpu.concatenate %193, %194 in 1 : vector<8x15xf32>, vector<8x241xf32> -> vector<8x256xf32>
    %c18 = arith.constant 18 : index
    %c0_51 = arith.constant 0 : index
    %196 = vector.load %arg7[%c18, %c0_51] : memref<49x256xf32, #tpu.memory_space<vmem>>, vector<1x256xf32>
    %197 = vector.broadcast %196 : vector<1x256xf32> to vector<8x256xf32>
    %198 = arith.mulf %195, %197 : vector<8x256xf32>
    %199 = arith.addf %191, %198 : vector<8x256xf32>
    %200 = vector.extract_strided_slice %46 {offsets = [152, 0], sizes = [8, 256], strides = [1, 1]} : vector<392x256xf32> to vector<8x256xf32>
    %201 = vector.extract_strided_slice %200 {offsets = [0, 242], sizes = [8, 14], strides = [1, 1]} : vector<8x256xf32> to vector<8x14xf32>
    %202 = vector.extract_strided_slice %200 {offsets = [0, 0], sizes = [8, 242], strides = [1, 1]} : vector<8x256xf32> to vector<8x242xf32>
    %203 = tpu.concatenate %201, %202 in 1 : vector<8x14xf32>, vector<8x242xf32> -> vector<8x256xf32>
    %c19 = arith.constant 19 : index
    %c0_52 = arith.constant 0 : index
    %204 = vector.load %arg7[%c19, %c0_52] : memref<49x256xf32, #tpu.memory_space<vmem>>, vector<1x256xf32>
    %205 = vector.broadcast %204 : vector<1x256xf32> to vector<8x256xf32>
    %206 = arith.mulf %203, %205 : vector<8x256xf32>
    %207 = arith.addf %199, %206 : vector<8x256xf32>
    %208 = vector.extract_strided_slice %46 {offsets = [160, 0], sizes = [8, 256], strides = [1, 1]} : vector<392x256xf32> to vector<8x256xf32>
    %209 = vector.extract_strided_slice %208 {offsets = [0, 243], sizes = [8, 13], strides = [1, 1]} : vector<8x256xf32> to vector<8x13xf32>
    %210 = vector.extract_strided_slice %208 {offsets = [0, 0], sizes = [8, 243], strides = [1, 1]} : vector<8x256xf32> to vector<8x243xf32>
    %211 = tpu.concatenate %209, %210 in 1 : vector<8x13xf32>, vector<8x243xf32> -> vector<8x256xf32>
    %c20 = arith.constant 20 : index
    %c0_53 = arith.constant 0 : index
    %212 = vector.load %arg7[%c20, %c0_53] : memref<49x256xf32, #tpu.memory_space<vmem>>, vector<1x256xf32>
    %213 = vector.broadcast %212 : vector<1x256xf32> to vector<8x256xf32>
    %214 = arith.mulf %211, %213 : vector<8x256xf32>
    %215 = arith.addf %207, %214 : vector<8x256xf32>
    %216 = vector.extract_strided_slice %46 {offsets = [168, 0], sizes = [8, 256], strides = [1, 1]} : vector<392x256xf32> to vector<8x256xf32>
    %217 = vector.extract_strided_slice %216 {offsets = [0, 253], sizes = [8, 3], strides = [1, 1]} : vector<8x256xf32> to vector<8x3xf32>
    %218 = vector.extract_strided_slice %216 {offsets = [0, 0], sizes = [8, 253], strides = [1, 1]} : vector<8x256xf32> to vector<8x253xf32>
    %219 = tpu.concatenate %217, %218 in 1 : vector<8x3xf32>, vector<8x253xf32> -> vector<8x256xf32>
    %c21 = arith.constant 21 : index
    %c0_54 = arith.constant 0 : index
    %220 = vector.load %arg7[%c21, %c0_54] : memref<49x256xf32, #tpu.memory_space<vmem>>, vector<1x256xf32>
    %221 = vector.broadcast %220 : vector<1x256xf32> to vector<8x256xf32>
    %222 = arith.mulf %219, %221 : vector<8x256xf32>
    %223 = arith.addf %215, %222 : vector<8x256xf32>
    %224 = vector.extract_strided_slice %46 {offsets = [176, 0], sizes = [8, 256], strides = [1, 1]} : vector<392x256xf32> to vector<8x256xf32>
    %225 = vector.extract_strided_slice %224 {offsets = [0, 254], sizes = [8, 2], strides = [1, 1]} : vector<8x256xf32> to vector<8x2xf32>
    %226 = vector.extract_strided_slice %224 {offsets = [0, 0], sizes = [8, 254], strides = [1, 1]} : vector<8x256xf32> to vector<8x254xf32>
    %227 = tpu.concatenate %225, %226 in 1 : vector<8x2xf32>, vector<8x254xf32> -> vector<8x256xf32>
    %c22 = arith.constant 22 : index
    %c0_55 = arith.constant 0 : index
    %228 = vector.load %arg7[%c22, %c0_55] : memref<49x256xf32, #tpu.memory_space<vmem>>, vector<1x256xf32>
    %229 = vector.broadcast %228 : vector<1x256xf32> to vector<8x256xf32>
    %230 = arith.mulf %227, %229 : vector<8x256xf32>
    %231 = arith.addf %223, %230 : vector<8x256xf32>
    %232 = vector.extract_strided_slice %46 {offsets = [184, 0], sizes = [8, 256], strides = [1, 1]} : vector<392x256xf32> to vector<8x256xf32>
    %233 = vector.extract_strided_slice %232 {offsets = [0, 255], sizes = [8, 1], strides = [1, 1]} : vector<8x256xf32> to vector<8x1xf32>
    %234 = vector.extract_strided_slice %232 {offsets = [0, 0], sizes = [8, 255], strides = [1, 1]} : vector<8x256xf32> to vector<8x255xf32>
    %235 = tpu.concatenate %233, %234 in 1 : vector<8x1xf32>, vector<8x255xf32> -> vector<8x256xf32>
    %c23 = arith.constant 23 : index
    %c0_56 = arith.constant 0 : index
    %236 = vector.load %arg7[%c23, %c0_56] : memref<49x256xf32, #tpu.memory_space<vmem>>, vector<1x256xf32>
    %237 = vector.broadcast %236 : vector<1x256xf32> to vector<8x256xf32>
    %238 = arith.mulf %235, %237 : vector<8x256xf32>
    %239 = arith.addf %231, %238 : vector<8x256xf32>
    %240 = vector.extract_strided_slice %46 {offsets = [192, 0], sizes = [8, 256], strides = [1, 1]} : vector<392x256xf32> to vector<8x256xf32>
    %c24 = arith.constant 24 : index
    %c0_57 = arith.constant 0 : index
    %241 = vector.load %arg7[%c24, %c0_57] : memref<49x256xf32, #tpu.memory_space<vmem>>, vector<1x256xf32>
    %242 = vector.broadcast %241 : vector<1x256xf32> to vector<8x256xf32>
    %243 = arith.mulf %240, %242 : vector<8x256xf32>
    %244 = arith.addf %239, %243 : vector<8x256xf32>
    %245 = vector.extract_strided_slice %46 {offsets = [200, 0], sizes = [8, 256], strides = [1, 1]} : vector<392x256xf32> to vector<8x256xf32>
    %246 = vector.extract_strided_slice %245 {offsets = [0, 1], sizes = [8, 255], strides = [1, 1]} : vector<8x256xf32> to vector<8x255xf32>
    %247 = vector.extract_strided_slice %245 {offsets = [0, 0], sizes = [8, 1], strides = [1, 1]} : vector<8x256xf32> to vector<8x1xf32>
    %248 = tpu.concatenate %246, %247 in 1 : vector<8x255xf32>, vector<8x1xf32> -> vector<8x256xf32>
    %c25 = arith.constant 25 : index
    %c0_58 = arith.constant 0 : index
    %249 = vector.load %arg7[%c25, %c0_58] : memref<49x256xf32, #tpu.memory_space<vmem>>, vector<1x256xf32>
    %250 = vector.broadcast %249 : vector<1x256xf32> to vector<8x256xf32>
    %251 = arith.mulf %248, %250 : vector<8x256xf32>
    %252 = arith.addf %244, %251 : vector<8x256xf32>
    %253 = vector.extract_strided_slice %46 {offsets = [208, 0], sizes = [8, 256], strides = [1, 1]} : vector<392x256xf32> to vector<8x256xf32>
    %254 = vector.extract_strided_slice %253 {offsets = [0, 2], sizes = [8, 254], strides = [1, 1]} : vector<8x256xf32> to vector<8x254xf32>
    %255 = vector.extract_strided_slice %253 {offsets = [0, 0], sizes = [8, 2], strides = [1, 1]} : vector<8x256xf32> to vector<8x2xf32>
    %256 = tpu.concatenate %254, %255 in 1 : vector<8x254xf32>, vector<8x2xf32> -> vector<8x256xf32>
    %c26 = arith.constant 26 : index
    %c0_59 = arith.constant 0 : index
    %257 = vector.load %arg7[%c26, %c0_59] : memref<49x256xf32, #tpu.memory_space<vmem>>, vector<1x256xf32>
    %258 = vector.broadcast %257 : vector<1x256xf32> to vector<8x256xf32>
    %259 = arith.mulf %256, %258 : vector<8x256xf32>
    %260 = arith.addf %252, %259 : vector<8x256xf32>
    %261 = vector.extract_strided_slice %46 {offsets = [216, 0], sizes = [8, 256], strides = [1, 1]} : vector<392x256xf32> to vector<8x256xf32>
    %262 = vector.extract_strided_slice %261 {offsets = [0, 3], sizes = [8, 253], strides = [1, 1]} : vector<8x256xf32> to vector<8x253xf32>
    %263 = vector.extract_strided_slice %261 {offsets = [0, 0], sizes = [8, 3], strides = [1, 1]} : vector<8x256xf32> to vector<8x3xf32>
    %264 = tpu.concatenate %262, %263 in 1 : vector<8x253xf32>, vector<8x3xf32> -> vector<8x256xf32>
    %c27 = arith.constant 27 : index
    %c0_60 = arith.constant 0 : index
    %265 = vector.load %arg7[%c27, %c0_60] : memref<49x256xf32, #tpu.memory_space<vmem>>, vector<1x256xf32>
    %266 = vector.broadcast %265 : vector<1x256xf32> to vector<8x256xf32>
    %267 = arith.mulf %264, %266 : vector<8x256xf32>
    %268 = arith.addf %260, %267 : vector<8x256xf32>
    %269 = vector.extract_strided_slice %46 {offsets = [224, 0], sizes = [8, 256], strides = [1, 1]} : vector<392x256xf32> to vector<8x256xf32>
    %270 = vector.extract_strided_slice %269 {offsets = [0, 13], sizes = [8, 243], strides = [1, 1]} : vector<8x256xf32> to vector<8x243xf32>
    %271 = vector.extract_strided_slice %269 {offsets = [0, 0], sizes = [8, 13], strides = [1, 1]} : vector<8x256xf32> to vector<8x13xf32>
    %272 = tpu.concatenate %270, %271 in 1 : vector<8x243xf32>, vector<8x13xf32> -> vector<8x256xf32>
    %c28 = arith.constant 28 : index
    %c0_61 = arith.constant 0 : index
    %273 = vector.load %arg7[%c28, %c0_61] : memref<49x256xf32, #tpu.memory_space<vmem>>, vector<1x256xf32>
    %274 = vector.broadcast %273 : vector<1x256xf32> to vector<8x256xf32>
    %275 = arith.mulf %272, %274 : vector<8x256xf32>
    %276 = arith.addf %268, %275 : vector<8x256xf32>
    %277 = vector.extract_strided_slice %46 {offsets = [232, 0], sizes = [8, 256], strides = [1, 1]} : vector<392x256xf32> to vector<8x256xf32>
    %278 = vector.extract_strided_slice %277 {offsets = [0, 14], sizes = [8, 242], strides = [1, 1]} : vector<8x256xf32> to vector<8x242xf32>
    %279 = vector.extract_strided_slice %277 {offsets = [0, 0], sizes = [8, 14], strides = [1, 1]} : vector<8x256xf32> to vector<8x14xf32>
    %280 = tpu.concatenate %278, %279 in 1 : vector<8x242xf32>, vector<8x14xf32> -> vector<8x256xf32>
    %c29 = arith.constant 29 : index
    %c0_62 = arith.constant 0 : index
    %281 = vector.load %arg7[%c29, %c0_62] : memref<49x256xf32, #tpu.memory_space<vmem>>, vector<1x256xf32>
    %282 = vector.broadcast %281 : vector<1x256xf32> to vector<8x256xf32>
    %283 = arith.mulf %280, %282 : vector<8x256xf32>
    %284 = arith.addf %276, %283 : vector<8x256xf32>
    %285 = vector.extract_strided_slice %46 {offsets = [240, 0], sizes = [8, 256], strides = [1, 1]} : vector<392x256xf32> to vector<8x256xf32>
    %286 = vector.extract_strided_slice %285 {offsets = [0, 15], sizes = [8, 241], strides = [1, 1]} : vector<8x256xf32> to vector<8x241xf32>
    %287 = vector.extract_strided_slice %285 {offsets = [0, 0], sizes = [8, 15], strides = [1, 1]} : vector<8x256xf32> to vector<8x15xf32>
    %288 = tpu.concatenate %286, %287 in 1 : vector<8x241xf32>, vector<8x15xf32> -> vector<8x256xf32>
    %c30 = arith.constant 30 : index
    %c0_63 = arith.constant 0 : index
    %289 = vector.load %arg7[%c30, %c0_63] : memref<49x256xf32, #tpu.memory_space<vmem>>, vector<1x256xf32>
    %290 = vector.broadcast %289 : vector<1x256xf32> to vector<8x256xf32>
    %291 = arith.mulf %288, %290 : vector<8x256xf32>
    %292 = arith.addf %284, %291 : vector<8x256xf32>
    %293 = vector.extract_strided_slice %46 {offsets = [248, 0], sizes = [8, 256], strides = [1, 1]} : vector<392x256xf32> to vector<8x256xf32>
    %294 = vector.extract_strided_slice %293 {offsets = [0, 16], sizes = [8, 240], strides = [1, 1]} : vector<8x256xf32> to vector<8x240xf32>
    %295 = vector.extract_strided_slice %293 {offsets = [0, 0], sizes = [8, 16], strides = [1, 1]} : vector<8x256xf32> to vector<8x16xf32>
    %296 = tpu.concatenate %294, %295 in 1 : vector<8x240xf32>, vector<8x16xf32> -> vector<8x256xf32>
    %c31 = arith.constant 31 : index
    %c0_64 = arith.constant 0 : index
    %297 = vector.load %arg7[%c31, %c0_64] : memref<49x256xf32, #tpu.memory_space<vmem>>, vector<1x256xf32>
    %298 = vector.broadcast %297 : vector<1x256xf32> to vector<8x256xf32>
    %299 = arith.mulf %296, %298 : vector<8x256xf32>
    %300 = arith.addf %292, %299 : vector<8x256xf32>
    %301 = vector.extract_strided_slice %46 {offsets = [256, 0], sizes = [8, 256], strides = [1, 1]} : vector<392x256xf32> to vector<8x256xf32>
    %302 = vector.extract_strided_slice %301 {offsets = [0, 17], sizes = [8, 239], strides = [1, 1]} : vector<8x256xf32> to vector<8x239xf32>
    %303 = vector.extract_strided_slice %301 {offsets = [0, 0], sizes = [8, 17], strides = [1, 1]} : vector<8x256xf32> to vector<8x17xf32>
    %304 = tpu.concatenate %302, %303 in 1 : vector<8x239xf32>, vector<8x17xf32> -> vector<8x256xf32>
    %c32 = arith.constant 32 : index
    %c0_65 = arith.constant 0 : index
    %305 = vector.load %arg7[%c32, %c0_65] : memref<49x256xf32, #tpu.memory_space<vmem>>, vector<1x256xf32>
    %306 = vector.broadcast %305 : vector<1x256xf32> to vector<8x256xf32>
    %307 = arith.mulf %304, %306 : vector<8x256xf32>
    %308 = arith.addf %300, %307 : vector<8x256xf32>
    %309 = vector.extract_strided_slice %46 {offsets = [264, 0], sizes = [8, 256], strides = [1, 1]} : vector<392x256xf32> to vector<8x256xf32>
    %310 = vector.extract_strided_slice %309 {offsets = [0, 18], sizes = [8, 238], strides = [1, 1]} : vector<8x256xf32> to vector<8x238xf32>
    %311 = vector.extract_strided_slice %309 {offsets = [0, 0], sizes = [8, 18], strides = [1, 1]} : vector<8x256xf32> to vector<8x18xf32>
    %312 = tpu.concatenate %310, %311 in 1 : vector<8x238xf32>, vector<8x18xf32> -> vector<8x256xf32>
    %c33 = arith.constant 33 : index
    %c0_66 = arith.constant 0 : index
    %313 = vector.load %arg7[%c33, %c0_66] : memref<49x256xf32, #tpu.memory_space<vmem>>, vector<1x256xf32>
    %314 = vector.broadcast %313 : vector<1x256xf32> to vector<8x256xf32>
    %315 = arith.mulf %312, %314 : vector<8x256xf32>
    %316 = arith.addf %308, %315 : vector<8x256xf32>
    %317 = vector.extract_strided_slice %46 {offsets = [272, 0], sizes = [8, 256], strides = [1, 1]} : vector<392x256xf32> to vector<8x256xf32>
    %318 = vector.extract_strided_slice %317 {offsets = [0, 19], sizes = [8, 237], strides = [1, 1]} : vector<8x256xf32> to vector<8x237xf32>
    %319 = vector.extract_strided_slice %317 {offsets = [0, 0], sizes = [8, 19], strides = [1, 1]} : vector<8x256xf32> to vector<8x19xf32>
    %320 = tpu.concatenate %318, %319 in 1 : vector<8x237xf32>, vector<8x19xf32> -> vector<8x256xf32>
    %c34 = arith.constant 34 : index
    %c0_67 = arith.constant 0 : index
    %321 = vector.load %arg7[%c34, %c0_67] : memref<49x256xf32, #tpu.memory_space<vmem>>, vector<1x256xf32>
    %322 = vector.broadcast %321 : vector<1x256xf32> to vector<8x256xf32>
    %323 = arith.mulf %320, %322 : vector<8x256xf32>
    %324 = arith.addf %316, %323 : vector<8x256xf32>
    %325 = vector.extract_strided_slice %46 {offsets = [280, 0], sizes = [8, 256], strides = [1, 1]} : vector<392x256xf32> to vector<8x256xf32>
    %326 = vector.extract_strided_slice %325 {offsets = [0, 29], sizes = [8, 227], strides = [1, 1]} : vector<8x256xf32> to vector<8x227xf32>
    %327 = vector.extract_strided_slice %325 {offsets = [0, 0], sizes = [8, 29], strides = [1, 1]} : vector<8x256xf32> to vector<8x29xf32>
    %328 = tpu.concatenate %326, %327 in 1 : vector<8x227xf32>, vector<8x29xf32> -> vector<8x256xf32>
    %c35 = arith.constant 35 : index
    %c0_68 = arith.constant 0 : index
    %329 = vector.load %arg7[%c35, %c0_68] : memref<49x256xf32, #tpu.memory_space<vmem>>, vector<1x256xf32>
    %330 = vector.broadcast %329 : vector<1x256xf32> to vector<8x256xf32>
    %331 = arith.mulf %328, %330 : vector<8x256xf32>
    %332 = arith.addf %324, %331 : vector<8x256xf32>
    %333 = vector.extract_strided_slice %46 {offsets = [288, 0], sizes = [8, 256], strides = [1, 1]} : vector<392x256xf32> to vector<8x256xf32>
    %334 = vector.extract_strided_slice %333 {offsets = [0, 30], sizes = [8, 226], strides = [1, 1]} : vector<8x256xf32> to vector<8x226xf32>
    %335 = vector.extract_strided_slice %333 {offsets = [0, 0], sizes = [8, 30], strides = [1, 1]} : vector<8x256xf32> to vector<8x30xf32>
    %336 = tpu.concatenate %334, %335 in 1 : vector<8x226xf32>, vector<8x30xf32> -> vector<8x256xf32>
    %c36 = arith.constant 36 : index
    %c0_69 = arith.constant 0 : index
    %337 = vector.load %arg7[%c36, %c0_69] : memref<49x256xf32, #tpu.memory_space<vmem>>, vector<1x256xf32>
    %338 = vector.broadcast %337 : vector<1x256xf32> to vector<8x256xf32>
    %339 = arith.mulf %336, %338 : vector<8x256xf32>
    %340 = arith.addf %332, %339 : vector<8x256xf32>
    %341 = vector.extract_strided_slice %46 {offsets = [296, 0], sizes = [8, 256], strides = [1, 1]} : vector<392x256xf32> to vector<8x256xf32>
    %342 = vector.extract_strided_slice %341 {offsets = [0, 31], sizes = [8, 225], strides = [1, 1]} : vector<8x256xf32> to vector<8x225xf32>
    %343 = vector.extract_strided_slice %341 {offsets = [0, 0], sizes = [8, 31], strides = [1, 1]} : vector<8x256xf32> to vector<8x31xf32>
    %344 = tpu.concatenate %342, %343 in 1 : vector<8x225xf32>, vector<8x31xf32> -> vector<8x256xf32>
    %c37 = arith.constant 37 : index
    %c0_70 = arith.constant 0 : index
    %345 = vector.load %arg7[%c37, %c0_70] : memref<49x256xf32, #tpu.memory_space<vmem>>, vector<1x256xf32>
    %346 = vector.broadcast %345 : vector<1x256xf32> to vector<8x256xf32>
    %347 = arith.mulf %344, %346 : vector<8x256xf32>
    %348 = arith.addf %340, %347 : vector<8x256xf32>
    %349 = vector.extract_strided_slice %46 {offsets = [304, 0], sizes = [8, 256], strides = [1, 1]} : vector<392x256xf32> to vector<8x256xf32>
    %350 = vector.extract_strided_slice %349 {offsets = [0, 32], sizes = [8, 224], strides = [1, 1]} : vector<8x256xf32> to vector<8x224xf32>
    %351 = vector.extract_strided_slice %349 {offsets = [0, 0], sizes = [8, 32], strides = [1, 1]} : vector<8x256xf32> to vector<8x32xf32>
    %352 = tpu.concatenate %350, %351 in 1 : vector<8x224xf32>, vector<8x32xf32> -> vector<8x256xf32>
    %c38 = arith.constant 38 : index
    %c0_71 = arith.constant 0 : index
    %353 = vector.load %arg7[%c38, %c0_71] : memref<49x256xf32, #tpu.memory_space<vmem>>, vector<1x256xf32>
    %354 = vector.broadcast %353 : vector<1x256xf32> to vector<8x256xf32>
    %355 = arith.mulf %352, %354 : vector<8x256xf32>
    %356 = arith.addf %348, %355 : vector<8x256xf32>
    %357 = vector.extract_strided_slice %46 {offsets = [312, 0], sizes = [8, 256], strides = [1, 1]} : vector<392x256xf32> to vector<8x256xf32>
    %358 = vector.extract_strided_slice %357 {offsets = [0, 33], sizes = [8, 223], strides = [1, 1]} : vector<8x256xf32> to vector<8x223xf32>
    %359 = vector.extract_strided_slice %357 {offsets = [0, 0], sizes = [8, 33], strides = [1, 1]} : vector<8x256xf32> to vector<8x33xf32>
    %360 = tpu.concatenate %358, %359 in 1 : vector<8x223xf32>, vector<8x33xf32> -> vector<8x256xf32>
    %c39 = arith.constant 39 : index
    %c0_72 = arith.constant 0 : index
    %361 = vector.load %arg7[%c39, %c0_72] : memref<49x256xf32, #tpu.memory_space<vmem>>, vector<1x256xf32>
    %362 = vector.broadcast %361 : vector<1x256xf32> to vector<8x256xf32>
    %363 = arith.mulf %360, %362 : vector<8x256xf32>
    %364 = arith.addf %356, %363 : vector<8x256xf32>
    %365 = vector.extract_strided_slice %46 {offsets = [320, 0], sizes = [8, 256], strides = [1, 1]} : vector<392x256xf32> to vector<8x256xf32>
    %366 = vector.extract_strided_slice %365 {offsets = [0, 34], sizes = [8, 222], strides = [1, 1]} : vector<8x256xf32> to vector<8x222xf32>
    %367 = vector.extract_strided_slice %365 {offsets = [0, 0], sizes = [8, 34], strides = [1, 1]} : vector<8x256xf32> to vector<8x34xf32>
    %368 = tpu.concatenate %366, %367 in 1 : vector<8x222xf32>, vector<8x34xf32> -> vector<8x256xf32>
    %c40 = arith.constant 40 : index
    %c0_73 = arith.constant 0 : index
    %369 = vector.load %arg7[%c40, %c0_73] : memref<49x256xf32, #tpu.memory_space<vmem>>, vector<1x256xf32>
    %370 = vector.broadcast %369 : vector<1x256xf32> to vector<8x256xf32>
    %371 = arith.mulf %368, %370 : vector<8x256xf32>
    %372 = arith.addf %364, %371 : vector<8x256xf32>
    %373 = vector.extract_strided_slice %46 {offsets = [328, 0], sizes = [8, 256], strides = [1, 1]} : vector<392x256xf32> to vector<8x256xf32>
    %374 = vector.extract_strided_slice %373 {offsets = [0, 35], sizes = [8, 221], strides = [1, 1]} : vector<8x256xf32> to vector<8x221xf32>
    %375 = vector.extract_strided_slice %373 {offsets = [0, 0], sizes = [8, 35], strides = [1, 1]} : vector<8x256xf32> to vector<8x35xf32>
    %376 = tpu.concatenate %374, %375 in 1 : vector<8x221xf32>, vector<8x35xf32> -> vector<8x256xf32>
    %c41 = arith.constant 41 : index
    %c0_74 = arith.constant 0 : index
    %377 = vector.load %arg7[%c41, %c0_74] : memref<49x256xf32, #tpu.memory_space<vmem>>, vector<1x256xf32>
    %378 = vector.broadcast %377 : vector<1x256xf32> to vector<8x256xf32>
    %379 = arith.mulf %376, %378 : vector<8x256xf32>
    %380 = arith.addf %372, %379 : vector<8x256xf32>
    %381 = vector.extract_strided_slice %46 {offsets = [336, 0], sizes = [8, 256], strides = [1, 1]} : vector<392x256xf32> to vector<8x256xf32>
    %382 = vector.extract_strided_slice %381 {offsets = [0, 45], sizes = [8, 211], strides = [1, 1]} : vector<8x256xf32> to vector<8x211xf32>
    %383 = vector.extract_strided_slice %381 {offsets = [0, 0], sizes = [8, 45], strides = [1, 1]} : vector<8x256xf32> to vector<8x45xf32>
    %384 = tpu.concatenate %382, %383 in 1 : vector<8x211xf32>, vector<8x45xf32> -> vector<8x256xf32>
    %c42 = arith.constant 42 : index
    %c0_75 = arith.constant 0 : index
    %385 = vector.load %arg7[%c42, %c0_75] : memref<49x256xf32, #tpu.memory_space<vmem>>, vector<1x256xf32>
    %386 = vector.broadcast %385 : vector<1x256xf32> to vector<8x256xf32>
    %387 = arith.mulf %384, %386 : vector<8x256xf32>
    %388 = arith.addf %380, %387 : vector<8x256xf32>
    %389 = vector.extract_strided_slice %46 {offsets = [344, 0], sizes = [8, 256], strides = [1, 1]} : vector<392x256xf32> to vector<8x256xf32>
    %390 = vector.extract_strided_slice %389 {offsets = [0, 46], sizes = [8, 210], strides = [1, 1]} : vector<8x256xf32> to vector<8x210xf32>
    %391 = vector.extract_strided_slice %389 {offsets = [0, 0], sizes = [8, 46], strides = [1, 1]} : vector<8x256xf32> to vector<8x46xf32>
    %392 = tpu.concatenate %390, %391 in 1 : vector<8x210xf32>, vector<8x46xf32> -> vector<8x256xf32>
    %c43 = arith.constant 43 : index
    %c0_76 = arith.constant 0 : index
    %393 = vector.load %arg7[%c43, %c0_76] : memref<49x256xf32, #tpu.memory_space<vmem>>, vector<1x256xf32>
    %394 = vector.broadcast %393 : vector<1x256xf32> to vector<8x256xf32>
    %395 = arith.mulf %392, %394 : vector<8x256xf32>
    %396 = arith.addf %388, %395 : vector<8x256xf32>
    %397 = vector.extract_strided_slice %46 {offsets = [352, 0], sizes = [8, 256], strides = [1, 1]} : vector<392x256xf32> to vector<8x256xf32>
    %398 = vector.extract_strided_slice %397 {offsets = [0, 47], sizes = [8, 209], strides = [1, 1]} : vector<8x256xf32> to vector<8x209xf32>
    %399 = vector.extract_strided_slice %397 {offsets = [0, 0], sizes = [8, 47], strides = [1, 1]} : vector<8x256xf32> to vector<8x47xf32>
    %400 = tpu.concatenate %398, %399 in 1 : vector<8x209xf32>, vector<8x47xf32> -> vector<8x256xf32>
    %c44 = arith.constant 44 : index
    %c0_77 = arith.constant 0 : index
    %401 = vector.load %arg7[%c44, %c0_77] : memref<49x256xf32, #tpu.memory_space<vmem>>, vector<1x256xf32>
    %402 = vector.broadcast %401 : vector<1x256xf32> to vector<8x256xf32>
    %403 = arith.mulf %400, %402 : vector<8x256xf32>
    %404 = arith.addf %396, %403 : vector<8x256xf32>
    %405 = vector.extract_strided_slice %46 {offsets = [360, 0], sizes = [8, 256], strides = [1, 1]} : vector<392x256xf32> to vector<8x256xf32>
    %406 = vector.extract_strided_slice %405 {offsets = [0, 48], sizes = [8, 208], strides = [1, 1]} : vector<8x256xf32> to vector<8x208xf32>
    %407 = vector.extract_strided_slice %405 {offsets = [0, 0], sizes = [8, 48], strides = [1, 1]} : vector<8x256xf32> to vector<8x48xf32>
    %408 = tpu.concatenate %406, %407 in 1 : vector<8x208xf32>, vector<8x48xf32> -> vector<8x256xf32>
    %c45 = arith.constant 45 : index
    %c0_78 = arith.constant 0 : index
    %409 = vector.load %arg7[%c45, %c0_78] : memref<49x256xf32, #tpu.memory_space<vmem>>, vector<1x256xf32>
    %410 = vector.broadcast %409 : vector<1x256xf32> to vector<8x256xf32>
    %411 = arith.mulf %408, %410 : vector<8x256xf32>
    %412 = arith.addf %404, %411 : vector<8x256xf32>
    %413 = vector.extract_strided_slice %46 {offsets = [368, 0], sizes = [8, 256], strides = [1, 1]} : vector<392x256xf32> to vector<8x256xf32>
    %414 = vector.extract_strided_slice %413 {offsets = [0, 49], sizes = [8, 207], strides = [1, 1]} : vector<8x256xf32> to vector<8x207xf32>
    %415 = vector.extract_strided_slice %413 {offsets = [0, 0], sizes = [8, 49], strides = [1, 1]} : vector<8x256xf32> to vector<8x49xf32>
    %416 = tpu.concatenate %414, %415 in 1 : vector<8x207xf32>, vector<8x49xf32> -> vector<8x256xf32>
    %c46 = arith.constant 46 : index
    %c0_79 = arith.constant 0 : index
    %417 = vector.load %arg7[%c46, %c0_79] : memref<49x256xf32, #tpu.memory_space<vmem>>, vector<1x256xf32>
    %418 = vector.broadcast %417 : vector<1x256xf32> to vector<8x256xf32>
    %419 = arith.mulf %416, %418 : vector<8x256xf32>
    %420 = arith.addf %412, %419 : vector<8x256xf32>
    %421 = vector.extract_strided_slice %46 {offsets = [376, 0], sizes = [8, 256], strides = [1, 1]} : vector<392x256xf32> to vector<8x256xf32>
    %422 = vector.extract_strided_slice %421 {offsets = [0, 50], sizes = [8, 206], strides = [1, 1]} : vector<8x256xf32> to vector<8x206xf32>
    %423 = vector.extract_strided_slice %421 {offsets = [0, 0], sizes = [8, 50], strides = [1, 1]} : vector<8x256xf32> to vector<8x50xf32>
    %424 = tpu.concatenate %422, %423 in 1 : vector<8x206xf32>, vector<8x50xf32> -> vector<8x256xf32>
    %c47 = arith.constant 47 : index
    %c0_80 = arith.constant 0 : index
    %425 = vector.load %arg7[%c47, %c0_80] : memref<49x256xf32, #tpu.memory_space<vmem>>, vector<1x256xf32>
    %426 = vector.broadcast %425 : vector<1x256xf32> to vector<8x256xf32>
    %427 = arith.mulf %424, %426 : vector<8x256xf32>
    %428 = arith.addf %420, %427 : vector<8x256xf32>
    %429 = vector.extract_strided_slice %46 {offsets = [384, 0], sizes = [8, 256], strides = [1, 1]} : vector<392x256xf32> to vector<8x256xf32>
    %430 = vector.extract_strided_slice %429 {offsets = [0, 51], sizes = [8, 205], strides = [1, 1]} : vector<8x256xf32> to vector<8x205xf32>
    %431 = vector.extract_strided_slice %429 {offsets = [0, 0], sizes = [8, 51], strides = [1, 1]} : vector<8x256xf32> to vector<8x51xf32>
    %432 = tpu.concatenate %430, %431 in 1 : vector<8x205xf32>, vector<8x51xf32> -> vector<8x256xf32>
    %c48 = arith.constant 48 : index
    %c0_81 = arith.constant 0 : index
    %433 = vector.load %arg7[%c48, %c0_81] : memref<49x256xf32, #tpu.memory_space<vmem>>, vector<1x256xf32>
    %434 = vector.broadcast %433 : vector<1x256xf32> to vector<8x256xf32>
    %435 = arith.mulf %432, %434 : vector<8x256xf32>
    %436 = arith.addf %428, %435 : vector<8x256xf32>
    %437 = vector.broadcast %34 : f32 to vector<8x256xf32>
    %438 = arith.addf %436, %437 : vector<8x256xf32>
    %439 = arith.negf %438 : vector<8x256xf32>
    %440 = math.exp %439 : vector<8x256xf32>
    %cst_82 = arith.constant 1.000000e+00 : f32
    %441 = vector.broadcast %cst_82 : f32 to vector<8x256xf32>
    %442 = arith.addf %441, %440 : vector<8x256xf32>
    %443 = arith.divf %441, %442 : vector<8x256xf32>
    %c0_i32_83 = arith.constant 0 : i32
    %c8_i32_84 = arith.constant 8 : i32
    %444 = arith.addi %c0_i32_83, %c8_i32_84 : i32
    %c1_i32_85 = arith.constant 1 : i32
    scf.for %arg12 = %c0_i32_83 to %444 step %c1_i32_85  : i32 {
      %c0_87 = arith.constant 0 : index
      %445 = arith.index_cast %arg12 : i32 to index
      %c0_88 = arith.constant 0 : index
      %c0_89 = arith.constant 0 : index
      %446 = vector.load %arg1[%c0_87, %445, %c0_88, %c0_89] : memref<1x8x8x256xf32, #tpu.memory_space<vmem>>, vector<1x1x8x256xf32>
      %447 = vector.shape_cast %446 : vector<1x1x8x256xf32> to vector<8x256xf32>
      %448 = arith.index_cast %arg12 : i32 to index
      %c0_90 = arith.constant 0 : index
      %449 = vector.load %arg11[%448, %c0_90] : memref<8x1xf32, #tpu.memory_space<vmem>>, vector<1x1xf32>
      %c0_91 = arith.constant 0 : index
      %450 = arith.index_cast %arg12 : i32 to index
      %451 = memref.load %arg8[%c0_91, %450] : memref<5x8xf32, #tpu.memory_space<smem>>
      %c1_92 = arith.constant 1 : index
      %452 = arith.index_cast %arg12 : i32 to index
      %453 = memref.load %arg8[%c1_92, %452] : memref<5x8xf32, #tpu.memory_space<smem>>
      %c2_93 = arith.constant 2 : index
      %454 = arith.index_cast %arg12 : i32 to index
      %455 = memref.load %arg8[%c2_93, %454] : memref<5x8xf32, #tpu.memory_space<smem>>
      %c3_94 = arith.constant 3 : index
      %456 = arith.index_cast %arg12 : i32 to index
      %457 = memref.load %arg8[%c3_94, %456] : memref<5x8xf32, #tpu.memory_space<smem>>
      %458 = vector.broadcast %451 : f32 to vector<8x256xf32>
      %459 = arith.mulf %447, %458 : vector<8x256xf32>
      %460 = vector.broadcast %453 : f32 to vector<8x256xf32>
      %461 = arith.addf %459, %460 : vector<8x256xf32>
      %462 = vector.broadcast %449 : vector<1x1xf32> to vector<8x256xf32>
      %463 = arith.mulf %461, %462 : vector<8x256xf32>
      %464 = vector.broadcast %455 : f32 to vector<8x256xf32>
      %465 = arith.mulf %447, %464 : vector<8x256xf32>
      %466 = vector.broadcast %457 : f32 to vector<8x256xf32>
      %467 = arith.addf %465, %466 : vector<8x256xf32>
      %468 = arith.mulf %467, %443 : vector<8x256xf32>
      %469 = arith.maximumf %463, %468 : vector<8x256xf32>
      %c0_95 = arith.constant 0 : index
      %470 = arith.index_cast %arg12 : i32 to index
      %c0_96 = arith.constant 0 : index
      %c0_97 = arith.constant 0 : index
      %471 = vector.load %arg10[%c0_95, %470, %c0_96, %c0_97] : memref<1x8x8x256xf32, #tpu.memory_space<vmem>>, vector<1x1x8x256xf32>
      %472 = vector.shape_cast %471 : vector<1x1x8x256xf32> to vector<8x256xf32>
      %473 = vector.shape_cast %469 : vector<8x256xf32> to vector<1x1x8x256xf32>
      tpu.vector_store %arg10[%c0_95, %470, %c0_96, %c0_97], %473 {strides = array<i32>} : memref<1x8x8x256xf32, #tpu.memory_space<vmem>>, vector<1x1x8x256xf32>,
    }
    %c8_i32_86 = arith.constant 8 : i32
    return
  }
  func.func @transform_0(%arg0: i32) -> (i32, i32, i32, i32) {
    %c0_i32 = arith.constant 0 : i32
    %c0_i32_0 = arith.constant 0 : i32
    %c0_i32_1 = arith.constant 0 : i32
    %c0_i32_2 = arith.constant 0 : i32
    return %arg0, %c0_i32, %c0_i32_0, %c0_i32_1 : i32, i32, i32, i32
  }
  func.func @transform_1(%arg0: i32) -> (i32, i32) {
    %c0_i32 = arith.constant 0 : i32
    %c0_i32_0 = arith.constant 0 : i32
    %c0_i32_1 = arith.constant 0 : i32
    return %c0_i32, %c0_i32_0 : i32, i32
  }
  func.func @transform_2(%arg0: i32) -> (i32, i32) {
    %c0_i32 = arith.constant 0 : i32
    %c0_i32_0 = arith.constant 0 : i32
    %c0_i32_1 = arith.constant 0 : i32
    return %c0_i32, %c0_i32_0 : i32, i32
  }
  func.func @transform_3(%arg0: i32) -> (i32, i32) {
    %c0_i32 = arith.constant 0 : i32
    %c0_i32_0 = arith.constant 0 : i32
    %c0_i32_1 = arith.constant 0 : i32
    return %c0_i32, %c0_i32_0 : i32, i32
  }
  func.func @transform_4(%arg0: i32) -> (i32, i32) {
    %c0_i32 = arith.constant 0 : i32
    %c0_i32_0 = arith.constant 0 : i32
    %c0_i32_1 = arith.constant 0 : i32
    return %c0_i32, %c0_i32_0 : i32, i32
  }
  func.func @transform_5(%arg0: i32) -> (i32, i32) {
    %c0_i32 = arith.constant 0 : i32
    %c0_i32_0 = arith.constant 0 : i32
    %c0_i32_1 = arith.constant 0 : i32
    return %c0_i32, %c0_i32_0 : i32, i32
  }
  func.func @transform_6(%arg0: i32) -> (i32, i32) {
    %c0_i32 = arith.constant 0 : i32
    %c0_i32_0 = arith.constant 0 : i32
    %c0_i32_1 = arith.constant 0 : i32
    return %c0_i32, %c0_i32_0 : i32, i32
  }
  func.func @transform_7(%arg0: i32) -> (i32, i32) {
    %c0_i32 = arith.constant 0 : i32
    %c0_i32_0 = arith.constant 0 : i32
    %c0_i32_1 = arith.constant 0 : i32
    return %c0_i32, %c0_i32_0 : i32, i32
  }
  func.func @transform_8(%arg0: i32) -> i32 {
    %c0_i32 = arith.constant 0 : i32
    %c0_i32_0 = arith.constant 0 : i32
    return %c0_i32 : i32
  }
  func.func @transform_9(%arg0: i32) -> (i32, i32, i32, i32) {
    %c0_i32 = arith.constant 0 : i32
    %c0_i32_0 = arith.constant 0 : i32
    %c0_i32_1 = arith.constant 0 : i32
    %c0_i32_2 = arith.constant 0 : i32
    return %arg0, %c0_i32, %c0_i32_0, %c0_i32_1 : i32, i32, i32, i32
  }
}

</mosaic_0001>

<llo_original>
// kernel: tpu_custom_call.1
$region0: #{tpu_custom_call.1}
  #allocation0 [shape = 'u32[]', space=smem, size = 0x4, offset = 0x4, fixed_abs, tag = 'smem constant byte address 0x4 - core index']
  #allocation1 [shape = 'u32[144,128]{1,0:T(1,128)}', space=vmem, size = 0x12000, scoped, tag = 'internal scratch']
  #allocation2 [shape = 'f32[8,1]{1,0:T(8,128)}', space=vmem, size = 0x1000, scoped, tag = 'scratch operand']
  %s0 = inlined_call_operand.vmem [shape: f32[2,8,8,256], index: 0, kind: input, shape index: {}]
  %s1 = inlined_call_operand.vmem [shape: f32[4,8], index: 1, kind: input, shape index: {}]
  %s2 = inlined_call_operand.vmem [shape: f32[4,1], index: 2, kind: input, shape index: {}]
  %s3 = inlined_call_operand.vmem [shape: f32[8,4], index: 3, kind: input, shape index: {}]
  %s4 = inlined_call_operand.vmem [shape: f32[8,1], index: 4, kind: input, shape index: {}]
  %s5 = inlined_call_operand.vmem [shape: f32[392,42], index: 5, kind: input, shape index: {}]
  %s6 = inlined_call_operand.vmem [shape: f32[49,256], index: 6, kind: input, shape index: {}]
  %s7 = inlined_call_operand.vmem [shape: f32[5,8], index: 7, kind: input, shape index: {}]
  %s8 = inlined_call_operand.vmem [shape: f32[2], index: 8, kind: input, shape index: {}]
  %s9 = inlined_call_operand.hbm [shape: f32[2,8,8,256], index: 9, kind: output, shape index: {}]
  %s10 = sld [smem:[#allocation0]]
  $region91: #{tpu_custom_call.1} parent=0
    _
  %s12 = ssub.s32 1, %s10
  %s13 = scalar_select 0, %s12, %s10
  $region1: #{tpu_custom_call.1} parent=0
    #allocation3 [shape = 'u8[4096]{0}', space=smem, size = 0x1000, scoped, tag = 'input window, operand 7, single buffered']
    #allocation4 [shape = 's32[2]{0}', space=sflag, size = 0x8, scoped, tag = 'scoped memory for tpu_custom_call.1']
    #allocation5 [shape = 's32[2]{0}', space=sflag, size = 0x8, scoped, tag = 'scoped memory for tpu_custom_call.1']
    #allocation6 [shape = 'u8[512]{0}', space=smem, size = 0x200, scoped, tag = 'input window, operand 8, single buffered']
    #allocation7 [shape = 's32[1]{0}', space=sflag, size = 0x4, scoped, tag = 'scoped memory for tpu_custom_call.1']
    #allocation8 [shape = 'u8[131072]{0}', space=vmem, size = 0x20000, scoped, tag = 'output window, operand 0']
    %14 = vsyncpa [#allocation5], 0
    %15 = vsyncpa [#allocation7], 0
    %16 = vsyncpa [#allocation4], 0
    %s17 = scalar_lea.sflag [#allocation4], 1
    %18 = vsyncpa %s17, 0
    loop: start=0, step=1, limit=4
    $region2: #{tpu_custom_call.1} parent=1 // loop_pre_header
      _
    $region3: #{tpu_custom_call.1} parent=1 // loop_header
      %s20 = sphi 0, %s24
      %p21 = scmp.ge.s32.totalorder %s20, 4
      %s30 = sphi 0, %s32
      %s33 = sphi 0, %s30
      %s34 = sphi 0, %s33
      %s50 = sphi 0, %s34
      %s54 = sphi 0, %s54
      %s56 = sphi 0, %s54
      %s57 = sphi 0, %s56
      %s71 = sphi 0, %s57
      %s75 = sphi 0, %s75
      %s77 = sphi 0, %s75
      %s78 = sphi 0, %s77
      %s92 = sphi 0, %s78
      %s96 = sphi 0, %s96
      %s98 = sphi 0, %s96
      %s99 = sphi 0, %s98
      %s113 = sphi 0, %s99
      %s117 = sphi 0, %s117
      %s119 = sphi 0, %s117
      %s120 = sphi 0, %s119
      %s134 = sphi 0, %s120
      %s138 = sphi 0, %s138
      %s140 = sphi 0, %s138
      %s141 = sphi 0, %s140
      %s155 = sphi 0, %s141
      %s159 = sphi 0, %s159
      %s161 = sphi 0, %s159
      %s162 = sphi 0, %s161
      %s176 = sphi 0, %s162
      %s180 = sphi 0, %s180
      %s182 = sphi 0, %s180
      %s183 = sphi 0, %s182
      %s197 = sphi 0, %s183
      %s201 = sphi 0, %s201
      %s203 = sphi 0, %s201
      %s204 = sphi 0, %s203
      %s218 = sphi 0, %s204
      %s224 = sphi 0, %s226
      %s227 = sphi 0, %s224
      %s228 = sphi 0, %s227
      %s244 = sphi 0, %s228
    $region4: #{tpu_custom_call.1} parent=1 // loop_header_branch
      %23 = sbr.rel (%p21) target = $region8
    $region5: #{tpu_custom_call.1} parent=1 // loop_body
      %s25 = ssub.s32 %s20, 1
      %s26 = ssub.s32 %s20, 2
      %s27 = sadd.s32 %s20, 1
      %s28 = ssub.s32 %s20, %s27
      %p29 = scmp.eq.s32.totalorder %s28, 0
      %s31 = sadd.s32 %s30, 1
      %s32 = scalar_select %p29, %s30, %s31
      %p35 = pneg %p29
      %p36 = scmp.eq.s32.totalorder %s20, 1
      %p37 = por %p35, %p36
      %p38 = scmp.ne.s32.totalorder %s30, %s33
      %p39 = scmp.eq.s32.totalorder %s20, 0
      %p40 = por %p38, %p39
      %p41 = scmp.ne.s32.totalorder %s30, %s33
      %p42 = scmp.eq.s32.totalorder %s25, 1
      %p43 = por %p41, %p42
      %p44 = scmp.ne.s32.totalorder %s33, %s34
      %p45 = scmp.eq.s32.totalorder %s25, 0
      %p46 = por %p44, %p45
      %p47 = scmp.ne.s32.totalorder %s33, %s34
      %p48 = scmp.eq.s32.totalorder %s26, 1
      %p49 = por %p47, %p48
      %p51 = scmp.ne.s32.totalorder %s34, %s50
      %p52 = scmp.eq.s32.totalorder %s26, 0
      %p53 = por %p51, %p52
      %s55 = sadd.s32 %s54, 1
      %p58 = scmp.eq.s32.totalorder %s20, 1
      %p59 = scmp.ne.s32.totalorder %s54, %s56
      %p60 = scmp.eq.s32.totalorder %s20, 0
      %p61 = por %p59, %p60
      %p62 = scmp.ne.s32.totalorder %s54, %s56
      %p63 = scmp.eq.s32.totalorder %s25, 1
      %p64 = por %p62, %p63
      %p65 = scmp.ne.s32.totalorder %s56, %s57
      %p66 = scmp.eq.s32.totalorder %s25, 0
      %p67 = por %p65, %p66
      %p68 = scmp.ne.s32.totalorder %s56, %s57
      %p69 = scmp.eq.s32.totalorder %s26, 1
      %p70 = por %p68, %p69
      %p72 = scmp.ne.s32.totalorder %s57, %s71
      %p73 = scmp.eq.s32.totalorder %s26, 0
      %p74 = por %p72, %p73
      %s76 = sadd.s32 %s75, 1
      %p79 = scmp.eq.s32.totalorder %s20, 1
      %p80 = scmp.ne.s32.totalorder %s75, %s77
      %p81 = scmp.eq.s32.totalorder %s20, 0
      %p82 = por %p80, %p81
      %p83 = scmp.ne.s32.totalorder %s75, %s77
      %p84 = scmp.eq.s32.totalorder %s25, 1
      %p85 = por %p83, %p84
      %p86 = scmp.ne.s32.totalorder %s77, %s78
      %p87 = scmp.eq.s32.totalorder %s25, 0
      %p88 = por %p86, %p87
      %p89 = scmp.ne.s32.totalorder %s77, %s78
      %p90 = scmp.eq.s32.totalorder %s26, 1
      %p91 = por %p89, %p90
      %p93 = scmp.ne.s32.totalorder %s78, %s92
      %p94 = scmp.eq.s32.totalorder %s26, 0
      %p95 = por %p93, %p94
      %s97 = sadd.s32 %s96, 1
      %p100 = scmp.eq.s32.totalorder %s20, 1
      %p101 = scmp.ne.s32.totalorder %s96, %s98
      %p102 = scmp.eq.s32.totalorder %s20, 0
      %p103 = por %p101, %p102
      %p104 = scmp.ne.s32.totalorder %s96, %s98
      %p105 = scmp.eq.s32.totalorder %s25, 1
      %p106 = por %p104, %p105
      %p107 = scmp.ne.s32.totalorder %s98, %s99
      %p108 = scmp.eq.s32.totalorder %s25, 0
      %p109 = por %p107, %p108
      %p110 = scmp.ne.s32.totalorder %s98, %s99
      %p111 = scmp.eq.s32.totalorder %s26, 1
      %p112 = por %p110, %p111
      %p114 = scmp.ne.s32.totalorder %s99, %s113
      %p115 = scmp.eq.s32.totalorder %s26, 0
      %p116 = por %p114, %p115
      %s118 = sadd.s32 %s117, 1
      %p121 = scmp.eq.s32.totalorder %s20, 1
      %p122 = scmp.ne.s32.totalorder %s117, %s119
      %p123 = scmp.eq.s32.totalorder %s20, 0
      %p124 = por %p122, %p123
      %p125 = scmp.ne.s32.totalorder %s117, %s119
      %p126 = scmp.eq.s32.totalorder %s25, 1
      %p127 = por %p125, %p126
      %p128 = scmp.ne.s32.totalorder %s119, %s120
      %p129 = scmp.eq.s32.totalorder %s25, 0
      %p130 = por %p128, %p129
      %p131 = scmp.ne.s32.totalorder %s119, %s120
      %p132 = scmp.eq.s32.totalorder %s26, 1
      %p133 = por %p131, %p132
      %p135 = scmp.ne.s32.totalorder %s120, %s134
      %p136 = scmp.eq.s32.totalorder %s26, 0
      %p137 = por %p135, %p136
      %s139 = sadd.s32 %s138, 1
      %p142 = scmp.eq.s32.totalorder %s20, 1
      %p143 = scmp.ne.s32.totalorder %s138, %s140
      %p144 = scmp.eq.s32.totalorder %s20, 0
      %p145 = por %p143, %p144
      %p146 = scmp.ne.s32.totalorder %s138, %s140
      %p147 = scmp.eq.s32.totalorder %s25, 1
      %p148 = por %p146, %p147
      %p149 = scmp.ne.s32.totalorder %s140, %s141
      %p150 = scmp.eq.s32.totalorder %s25, 0
      %p151 = por %p149, %p150
      %p152 = scmp.ne.s32.totalorder %s140, %s141
      %p153 = scmp.eq.s32.totalorder %s26, 1
      %p154 = por %p152, %p153
      %p156 = scmp.ne.s32.totalorder %s141, %s155
      %p157 = scmp.eq.s32.totalorder %s26, 0
      %p158 = por %p156, %p157
      %s160 = sadd.s32 %s159, 1
      %p163 = scmp.eq.s32.totalorder %s20, 1
      %p164 = scmp.ne.s32.totalorder %s159, %s161
      %p165 = scmp.eq.s32.totalorder %s20, 0
      %p166 = por %p164, %p165
      %p167 = scmp.ne.s32.totalorder %s159, %s161
      %p168 = scmp.eq.s32.totalorder %s25, 1
      %p169 = por %p167, %p168
      %p170 = scmp.ne.s32.totalorder %s161, %s162
      %p171 = scmp.eq.s32.totalorder %s25, 0
      %p172 = por %p170, %p171
      %p173 = scmp.ne.s32.totalorder %s161, %s162
      %p174 = scmp.eq.s32.totalorder %s26, 1
      %p175 = por %p173, %p174
      %p177 = scmp.ne.s32.totalorder %s162, %s176
      %p178 = scmp.eq.s32.totalorder %s26, 0
      %p179 = por %p177, %p178
      %s181 = sadd.s32 %s180, 1
      %p184 = scmp.eq.s32.totalorder %s20, 1
      %p185 = scmp.ne.s32.totalorder %s180, %s182
      %p186 = scmp.eq.s32.totalorder %s20, 0
      %p187 = por %p185, %p186
      %p188 = scmp.ne.s32.totalorder %s180, %s182
      %p189 = scmp.eq.s32.totalorder %s25, 1
      %p190 = por %p188, %p189
      %p191 = scmp.ne.s32.totalorder %s182, %s183
      %p192 = scmp.eq.s32.totalorder %s25, 0
      %p193 = por %p191, %p192
      %p194 = scmp.ne.s32.totalorder %s182, %s183
      %p195 = scmp.eq.s32.totalorder %s26, 1
      %p196 = por %p194, %p195
      %p198 = scmp.ne.s32.totalorder %s183, %s197
      %p199 = scmp.eq.s32.totalorder %s26, 0
      %p200 = por %p198, %p199
      %s202 = sadd.s32 %s201, 1
      %p205 = scmp.eq.s32.totalorder %s20, 1
      %p206 = scmp.ne.s32.totalorder %s201, %s203
      %p207 = scmp.eq.s32.totalorder %s20, 0
      %p208 = por %p206, %p207
      %p209 = scmp.ne.s32.totalorder %s201, %s203
      %p210 = scmp.eq.s32.totalorder %s25, 1
      %p211 = por %p209, %p210
      %p212 = scmp.ne.s32.totalorder %s203, %s204
      %p213 = scmp.eq.s32.totalorder %s25, 0
      %p214 = por %p212, %p213
      %p215 = scmp.ne.s32.totalorder %s203, %s204
      %p216 = scmp.eq.s32.totalorder %s26, 1
      %p217 = por %p215, %p216
      %p219 = scmp.ne.s32.totalorder %s204, %s218
      %p220 = scmp.eq.s32.totalorder %s26, 0
      %p221 = por %p219, %p220
      %s222 = ssub.s32 %s20, %s27
      %p223 = scmp.eq.s32.totalorder %s222, 0
      %s225 = sadd.s32 %s224, 1
      %s226 = scalar_select %p223, %s224, %s225
      %p229 = pneg %p223
      %p230 = scmp.eq.s32.totalorder %s20, 1
      %p231 = por %p229, %p230
      %p232 = scmp.ne.s32.totalorder %s224, %s227
      %p233 = scmp.eq.s32.totalorder %s20, 0
      %p234 = por %p232, %p233
      %p235 = scmp.ne.s32.totalorder %s224, %s227
      %p236 = scmp.eq.s32.totalorder %s25, 1
      %p237 = por %p235, %p236
      %p238 = scmp.ne.s32.totalorder %s227, %s228
      %p239 = scmp.eq.s32.totalorder %s25, 0
      %p240 = por %p238, %p239
      %p241 = scmp.ne.s32.totalorder %s227, %s228
      %p242 = scmp.eq.s32.totalorder %s26, 1
      %p243 = por %p241, %p242
      %p245 = scmp.ne.s32.totalorder %s228, %s244
      %p246 = scmp.eq.s32.totalorder %s26, 0
      %p247 = por %p245, %p246
      %p248 = scmp.le.s32.totalorder 1, %s20
      %p249 = scmp.lt.s32.totalorder %s20, 3
      %p250 = pnand %p248, %p249
      %p251 = pneg %p250
      // Predicated region
      $region9: #{tpu_custom_call.1} parent=5 // pred_check
        _
      $region10: #{tpu_custom_call.1} parent=5 // pred_check_branch
        %253 = sbr.rel (%p250) target = $region12
      $region11: #{tpu_custom_call.1} parent=5 // pred_region
        %s254 = ssub.s32 %s20, 1
        // Predicated region
        $region13: #{tpu_custom_call.1} parent=11 // pred_check
          %p255 = pneg %p67
        $region14: #{tpu_custom_call.1} parent=11 // pred_check_branch
          %257 = sbr.rel (%p255) target = $region16
        $region15: #{tpu_custom_call.1} parent=11 // pred_region
          _
        $region16: #{tpu_custom_call.1} parent=11 // pred_fallthru
          _
        // Predicated region
        $region17: #{tpu_custom_call.1} parent=11 // pred_check
          %p258 = pneg %p88
        $region18: #{tpu_custom_call.1} parent=11 // pred_check_branch
          %260 = sbr.rel (%p258) target = $region20
        $region19: #{tpu_custom_call.1} parent=11 // pred_region
          _
        $region20: #{tpu_custom_call.1} parent=11 // pred_fallthru
          _
        // Predicated region
        $region21: #{tpu_custom_call.1} parent=11 // pred_check
          %p261 = pneg %p109
        $region22: #{tpu_custom_call.1} parent=11 // pred_check_branch
          %263 = sbr.rel (%p261) target = $region24
        $region23: #{tpu_custom_call.1} parent=11 // pred_region
          _
        $region24: #{tpu_custom_call.1} parent=11 // pred_fallthru
          _
        // Predicated region
        $region25: #{tpu_custom_call.1} parent=11 // pred_check
          %p264 = pneg %p130
        $region26: #{tpu_custom_call.1} parent=11 // pred_check_branch
          %266 = sbr.rel (%p264) target = $region28
        $region27: #{tpu_custom_call.1} parent=11 // pred_region
          _
        $region28: #{tpu_custom_call.1} parent=11 // pred_fallthru
          _
        // Predicated region
        $region29: #{tpu_custom_call.1} parent=11 // pred_check
          %p267 = pneg %p151
        $region30: #{tpu_custom_call.1} parent=11 // pred_check_branch
          %269 = sbr.rel (%p267) target = $region32
        $region31: #{tpu_custom_call.1} parent=11 // pred_region
          _
        $region32: #{tpu_custom_call.1} parent=11 // pred_fallthru
          _
        // Predicated region
        $region33: #{tpu_custom_call.1} parent=11 // pred_check
          %p270 = pneg %p172
        $region34: #{tpu_custom_call.1} parent=11 // pred_check_branch
          %272 = sbr.rel (%p270) target = $region36
        $region35: #{tpu_custom_call.1} parent=11 // pred_region
          _
        $region36: #{tpu_custom_call.1} parent=11 // pred_fallthru
          _
        // Predicated region
        $region37: #{tpu_custom_call.1} parent=11 // pred_check
          %p273 = pneg %p193
        $region38: #{tpu_custom_call.1} parent=11 // pred_check_branch
          %275 = sbr.rel (%p273) target = $region40
        $region39: #{tpu_custom_call.1} parent=11 // pred_region
          %s277 = ssub.s32 128, 128
          %278 = vsyncadd [#allocation5], %s277
          %s280 = sshll.u32 %s7, 4
          %s281 = int_to_ptr.vmem [resolvable:$true] %s280
          %283 = dma.vmem_to_smem %s281, 128, [#allocation3], [#allocation5]
        $region40: #{tpu_custom_call.1} parent=11 // pred_fallthru
          _
        // Predicated region
        $region41: #{tpu_custom_call.1} parent=11 // pred_check
          %p284 = pneg %p214
        $region42: #{tpu_custom_call.1} parent=11 // pred_check_branch
          %286 = sbr.rel (%p284) target = $region44
        $region43: #{tpu_custom_call.1} parent=11 // pred_region
          %s288 = ssub.s32 16, 16
          %289 = vsyncadd [#allocation7], %s288
          %s291 = sshll.u32 %s8, 4
          %s292 = int_to_ptr.vmem [resolvable:$true] %s291
          %294 = dma.vmem_to_smem %s292, 16, [#allocation6], [#allocation7]
        $region44: #{tpu_custom_call.1} parent=11 // pred_fallthru
          _
      $region12: #{tpu_custom_call.1} parent=5 // pred_fallthru
        _
      %p295 = scmp.lt.s32.totalorder %s20, 2
      // Predicated region
      $region45: #{tpu_custom_call.1} parent=5 // pred_check
        %p296 = pneg %p295
      $region46: #{tpu_custom_call.1} parent=5 // pred_check_branch
        %298 = sbr.rel (%p296) target = $region48
      $region47: #{tpu_custom_call.1} parent=5 // pred_region
        // Predicated region
        $region49: #{tpu_custom_call.1} parent=47 // pred_check
          %p299 = pneg %p40
        $region50: #{tpu_custom_call.1} parent=47 // pred_check_branch
          %301 = sbr.rel (%p299) target = $region52
        $region51: #{tpu_custom_call.1} parent=47 // pred_region
          %p302 = scmp.lt.s32.totalorder %s20, 1
          %s303 = scalar_select %p302, %s20, 1
          %s304 = smul.addr %s303, 16
          %s305 = smul.addr %s304, 8
          %s306 = scalar_lea.vmem %s0, %s305
        $region52: #{tpu_custom_call.1} parent=47 // pred_fallthru
          _
      $region48: #{tpu_custom_call.1} parent=5 // pred_fallthru
        _
      %p307 = scmp.le.s32.totalorder 1, %s20
      %p308 = scmp.lt.s32.totalorder %s20, 3
      %p309 = pnand %p307, %p308
      %p310 = pneg %p309
      // Predicated region
      $region53: #{tpu_custom_call.1} parent=5 // pred_check
        _
      $region54: #{tpu_custom_call.1} parent=5 // pred_check_branch
        %312 = sbr.rel (%p309) target = $region56
      $region55: #{tpu_custom_call.1} parent=5 // pred_region
        %s313 = ssub.s32 %s20, 1
        // Predicated region
        $region57: #{tpu_custom_call.1} parent=55 // pred_check
          %p314 = pneg %p193
        $region58: #{tpu_custom_call.1} parent=55 // pred_check_branch
          %316 = sbr.rel (%p314) target = $region60
        $region59: #{tpu_custom_call.1} parent=55 // pred_region
          %317 = dma.done [#allocation5], 128
        $region60: #{tpu_custom_call.1} parent=55 // pred_fallthru
          _
        // Predicated region
        $region61: #{tpu_custom_call.1} parent=55 // pred_check
          %p318 = pneg %p214
        $region62: #{tpu_custom_call.1} parent=55 // pred_check_branch
          %320 = sbr.rel (%p318) target = $region64
        $region63: #{tpu_custom_call.1} parent=55 // pred_region
          %321 = dma.done [#allocation7], 16
        $region64: #{tpu_custom_call.1} parent=55 // pred_fallthru
          _
        %322 = sfence
        %p323 = scmp.lt.s32.totalorder %s25, 1
        %s324 = scalar_select %p323, %s25, 1
        %s325 = smul.addr %s324, 16
        %s326 = smul.addr %s325, 8
        %s327 = scalar_lea.vmem %s0, %s326
        %p328 = pneg %p46
        %p329 = pneg %p43
        %p330 = pneg %p67
        %p331 = pneg %p64
        %p332 = pneg %p88
        %p333 = pneg %p85
        %p334 = pneg %p109
        %p335 = pneg %p106
        %p336 = pneg %p130
        %p337 = pneg %p127
        %p338 = pneg %p151
        %p339 = pneg %p148
        %p340 = pneg %p172
        %p341 = pneg %p169
        %p342 = pneg %p193
        %p343 = pneg %p190
        %p344 = pneg %p214
        %p345 = pneg %p211
        %p346 = pneg %p240
        %p347 = pneg %p237
        %s348 = sand.u32 %s227, 1
        %s349 = scalar_lea.sflag [#allocation4], %s348
        %s350 = sand.u32 %s227, 1
        %s351 = smul.addr %s350, 128
        %s352 = scalar_lea.vmem [#allocation8], %s351
        %p353 = scmp.lt.s32.totalorder %s25, 1
        %s354 = scalar_select %p353, %s25, 1
        %s355 = smul.addr %s354, 16
        %s356 = smul.addr %s355, 8
        %s357 = scalar_lea.vmem %s0, %s356
        %v358 = vld [vmem:[%s357] sm:$0xff]
        %v359 = vld [vmem:[%s357 + $0x8] sm:$0xff]
        %v360 = vld [vmem:[%s357 + $0x10] sm:$0xff]
        %v361 = vld [vmem:[%s357 + $0x18] sm:$0xff]
        %v362 = vld [vmem:[%s357 + $0x20] sm:$0xff]
        %v363 = vld [vmem:[%s357 + $0x28] sm:$0xff]
        %v364 = vld [vmem:[%s357 + $0x30] sm:$0xff]
        %v365 = vld [vmem:[%s357 + $0x38] sm:$0xff]
        %v366 = vld [vmem:[%s357 + $0x40] sm:$0xff]
        %v367 = vld [vmem:[%s357 + $0x48] sm:$0xff]
        %v368 = vld [vmem:[%s357 + $0x50] sm:$0xff]
        %v369 = vld [vmem:[%s357 + $0x58] sm:$0xff]
        %v370 = vld [vmem:[%s357 + $0x60] sm:$0xff]
        %v371 = vld [vmem:[%s357 + $0x68] sm:$0xff]
        %v372 = vld [vmem:[%s357 + $0x70] sm:$0xff]
        %v373 = vld [vmem:[%s357 + $0x78] sm:$0xff]
        %v374 = vrot.slane %v358, 4
        %v375 = vadd.f32 %v358, %v374
        %v376 = vrot.slane %v375, 2
        %v377 = vadd.f32 %v375, %v376
        %v378 = vrot.slane %v377, 1
        %v379 = vadd.f32 %v377, %v378
        %v380 = vrot.slane %v359, 4
        %v381 = vadd.f32 %v359, %v380
        %v382 = vrot.slane %v381, 2
        %v383 = vadd.f32 %v381, %v382
        %v384 = vrot.slane %v383, 1
        %v385 = vadd.f32 %v383, %v384
        %v386 = vrot.slane %v360, 4
        %v387 = vadd.f32 %v360, %v386
        %v388 = vrot.slane %v387, 2
        %v389 = vadd.f32 %v387, %v388
        %v390 = vrot.slane %v389, 1
        %v391 = vadd.f32 %v389, %v390
        %v392 = vrot.slane %v361, 4
        %v393 = vadd.f32 %v361, %v392
        %v394 = vrot.slane %v393, 2
        %v395 = vadd.f32 %v393, %v394
        %v396 = vrot.slane %v395, 1
        %v397 = vadd.f32 %v395, %v396
        %v398 = vrot.slane %v362, 4
        %v399 = vadd.f32 %v362, %v398
        %v400 = vrot.slane %v399, 2
        %v401 = vadd.f32 %v399, %v400
        %v402 = vrot.slane %v401, 1
        %v403 = vadd.f32 %v401, %v402
        %v404 = vrot.slane %v363, 4
        %v405 = vadd.f32 %v363, %v404
        %v406 = vrot.slane %v405, 2
        %v407 = vadd.f32 %v405, %v406
        %v408 = vrot.slane %v407, 1
        %v409 = vadd.f32 %v407, %v408
        %v410 = vrot.slane %v364, 4
        %v411 = vadd.f32 %v364, %v410
        %v412 = vrot.slane %v411, 2
        %v413 = vadd.f32 %v411, %v412
        %v414 = vrot.slane %v413, 1
        %v415 = vadd.f32 %v413, %v414
        %v416 = vrot.slane %v365, 4
        %v417 = vadd.f32 %v365, %v416
        %v418 = vrot.slane %v417, 2
        %v419 = vadd.f32 %v417, %v418
        %v420 = vrot.slane %v419, 1
        %v421 = vadd.f32 %v419, %v420
        %v422 = vrot.slane %v366, 4
        %v423 = vadd.f32 %v366, %v422
        %v424 = vrot.slane %v423, 2
        %v425 = vadd.f32 %v423, %v424
        %v426 = vrot.slane %v425, 1
        %v427 = vadd.f32 %v425, %v426
        %v428 = vrot.slane %v367, 4
        %v429 = vadd.f32 %v367, %v428
        %v430 = vrot.slane %v429, 2
        %v431 = vadd.f32 %v429, %v430
        %v432 = vrot.slane %v431, 1
        %v433 = vadd.f32 %v431, %v432
        %v434 = vrot.slane %v368, 4
        %v435 = vadd.f32 %v368, %v434
        %v436 = vrot.slane %v435, 2
        %v437 = vadd.f32 %v435, %v436
        %v438 = vrot.slane %v437, 1
        %v439 = vadd.f32 %v437, %v438
        %v440 = vrot.slane %v369, 4
        %v441 = vadd.f32 %v369, %v440
        %v442 = vrot.slane %v441, 2
        %v443 = vadd.f32 %v441, %v442
        %v444 = vrot.slane %v443, 1
        %v445 = vadd.f32 %v443, %v444
        %v446 = vrot.slane %v370, 4
        %v447 = vadd.f32 %v370, %v446
        %v448 = vrot.slane %v447, 2
        %v449 = vadd.f32 %v447, %v448
        %v450 = vrot.slane %v449, 1
        %v451 = vadd.f32 %v449, %v450
        %v452 = vrot.slane %v371, 4
        %v453 = vadd.f32 %v371, %v452
        %v454 = vrot.slane %v453, 2
        %v455 = vadd.f32 %v453, %v454
        %v456 = vrot.slane %v455, 1
        %v457 = vadd.f32 %v455, %v456
        %v458 = vrot.slane %v372, 4
        %v459 = vadd.f32 %v372, %v458
        %v460 = vrot.slane %v459, 2
        %v461 = vadd.f32 %v459, %v460
        %v462 = vrot.slane %v461, 1
        %v463 = vadd.f32 %v461, %v462
        %v464 = vrot.slane %v373, 4
        %v465 = vadd.f32 %v373, %v464
        %v466 = vrot.slane %v465, 2
        %v467 = vadd.f32 %v465, %v466
        %v468 = vrot.slane %v467, 1
        %v469 = vadd.f32 %v467, %v468
        %v470 = vrot.slane %v358, 4
        %v471 = vmax.f32 %v358, %v470
        %v472 = vrot.slane %v471, 2
        %v473 = vmax.f32 %v471, %v472
        %v474 = vrot.slane %v473, 1
        %v475 = vmax.f32 %v473, %v474
        %v476 = vrot.slane %v359, 4
        %v477 = vmax.f32 %v359, %v476
        %v478 = vrot.slane %v477, 2
        %v479 = vmax.f32 %v477, %v478
        %v480 = vrot.slane %v479, 1
        %v481 = vmax.f32 %v479, %v480
        %v482 = vrot.slane %v360, 4
        %v483 = vmax.f32 %v360, %v482
        %v484 = vrot.slane %v483, 2
        %v485 = vmax.f32 %v483, %v484
        %v486 = vrot.slane %v485, 1
        %v487 = vmax.f32 %v485, %v486
        %v488 = vrot.slane %v361, 4
        %v489 = vmax.f32 %v361, %v488
        %v490 = vrot.slane %v489, 2
        %v491 = vmax.f32 %v489, %v490
        %v492 = vrot.slane %v491, 1
        %v493 = vmax.f32 %v491, %v492
        %v494 = vrot.slane %v362, 4
        %v495 = vmax.f32 %v362, %v494
        %v496 = vrot.slane %v495, 2
        %v497 = vmax.f32 %v495, %v496
        %v498 = vrot.slane %v497, 1
        %v499 = vmax.f32 %v497, %v498
        %v500 = vrot.slane %v363, 4
        %v501 = vmax.f32 %v363, %v500
        %v502 = vrot.slane %v501, 2
        %v503 = vmax.f32 %v501, %v502
        %v504 = vrot.slane %v503, 1
        %v505 = vmax.f32 %v503, %v504
        %v506 = vrot.slane %v364, 4
        %v507 = vmax.f32 %v364, %v506
        %v508 = vrot.slane %v507, 2
        %v509 = vmax.f32 %v507, %v508
        %v510 = vrot.slane %v509, 1
        %v511 = vmax.f32 %v509, %v510
        %v512 = vrot.slane %v365, 4
        %v513 = vmax.f32 %v365, %v512
        %v514 = vrot.slane %v513, 2
        %v515 = vmax.f32 %v513, %v514
        %v516 = vrot.slane %v515, 1
        %v517 = vmax.f32 %v515, %v516
        %v518 = vrot.slane %v366, 4
        %v519 = vmax.f32 %v366, %v518
        %v520 = vrot.slane %v519, 2
        %v521 = vmax.f32 %v519, %v520
        %v522 = vrot.slane %v521, 1
        %v523 = vmax.f32 %v521, %v522
        %v524 = vrot.slane %v367, 4
        %v525 = vmax.f32 %v367, %v524
        %v526 = vrot.slane %v525, 2
        %v527 = vmax.f32 %v525, %v526
        %v528 = vrot.slane %v527, 1
        %v529 = vmax.f32 %v527, %v528
        %v530 = vrot.slane %v368, 4
        %v531 = vmax.f32 %v368, %v530
        %v532 = vrot.slane %v531, 2
        %v533 = vmax.f32 %v531, %v532
        %v534 = vrot.slane %v533, 1
        %v535 = vmax.f32 %v533, %v534
        %v536 = vrot.slane %v369, 4
        %v537 = vmax.f32 %v369, %v536
        %v538 = vrot.slane %v537, 2
        %v539 = vmax.f32 %v537, %v538
        %v540 = vrot.slane %v539, 1
        %v541 = vmax.f32 %v539, %v540
        %v542 = vrot.slane %v370, 4
        %v543 = vmax.f32 %v370, %v542
        %v544 = vrot.slane %v543, 2
        %v545 = vmax.f32 %v543, %v544
        %v546 = vrot.slane %v545, 1
        %v547 = vmax.f32 %v545, %v546
        %v548 = vrot.slane %v371, 4
        %v549 = vmax.f32 %v371, %v548
        %v550 = vrot.slane %v549, 2
        %v551 = vmax.f32 %v549, %v550
        %v552 = vrot.slane %v551, 1
        %v553 = vmax.f32 %v551, %v552
        %v554 = vrot.slane %v372, 4
        %v555 = vmax.f32 %v372, %v554
        %v556 = vrot.slane %v555, 2
        %v557 = vmax.f32 %v555, %v556
        %v558 = vrot.slane %v557, 1
        %v559 = vmax.f32 %v557, %v558
        %v560 = vrot.slane %v373, 4
        %v561 = vmax.f32 %v373, %v560
        %v562 = vrot.slane %v561, 2
        %v563 = vmax.f32 %v561, %v562
        %v564 = vrot.slane %v563, 1
        %v565 = vmax.f32 %v563, %v564
        %vm582 = vcmask 1041409
        %v583 = vsel %vm582, %v391, %v379
        %vm584 = vcmask 1042434
        %v585 = vsel %vm584, %v403, %v583
        %vm586 = vcmask 1043459
        %v587 = vsel %vm586, %v415, %v585
        %vm588 = vcmask 1044484
        %v589 = vsel %vm588, %v427, %v587
        %vm590 = vcmask 1045509
        %v591 = vsel %vm590, %v439, %v589
        %vm592 = vcmask 1046534
        %v593 = vsel %vm592, %v451, %v591
        %vm594 = vcmask 1047559
        %v595 = vsel %vm594, %v463, %v593
        %v596 = vsel %vm582, %v397, %v385
        %v597 = vsel %vm584, %v409, %v596
        %v598 = vsel %vm586, %v421, %v597
        %v599 = vsel %vm588, %v433, %v598
        %v600 = vsel %vm590, %v445, %v599
        %v601 = vsel %vm592, %v457, %v600
        %v602 = vsel %vm594, %v469, %v601
        %v605 = vadd.f32 %v595, %v602
        %606 = vadd.xlane.f32.xlu0 %v605
        %v607 = vpop.xlane.xlu0 %606
        %v624 = vsel %vm582, %v487, %v475
        %v625 = vsel %vm584, %v499, %v624
        %v626 = vsel %vm586, %v511, %v625
        %v627 = vsel %vm588, %v523, %v626
        %v628 = vsel %vm590, %v535, %v627
        %v629 = vsel %vm592, %v547, %v628
        %v630 = vsel %vm594, %v559, %v629
        %v631 = vsel %vm582, %v493, %v481
        %v632 = vsel %vm584, %v505, %v631
        %v633 = vsel %vm586, %v517, %v632
        %v634 = vsel %vm588, %v529, %v633
        %v635 = vsel %vm590, %v541, %v634
        %v636 = vsel %vm592, %v553, %v635
        %v637 = vsel %vm594, %v565, %v636
        %v640 = vmax.f32 %v630, %v637
        %641 = vmax.xlane.f32.xlu0 %v640
        %v642 = vpop.xlane.xlu0 %641
        %v643 = vmul.f32 %v607, 0.00048828125
        %vm644 = vcmask 7168
        %v645 = vsel %vm644, %v643, %v642
        %v646 = vld [vmem:[%s1] sm:$0xf]
        %v647 = vld [vmem:[%s2] sm:$0xf]
        %649 = vset.pattern.permute.xlu0 0
        %650 = vperm.xlu0 %649, %v647
        %v651 = vpop.permute.xlu0 %650
        %vm653 = vcmask 64512
        %v655 = vsel %vm653, %v646, 0
        %657 = vmatprep.subr.mxu0 0.0
        %658 = vmatpush1.msra.mxu0 0.0
        %659 = vmatprep.subr.mxu0 0.0
        %660 = vmatpush1.msra.mxu0 0.0
        %661 = vmatprep.subr.mxu0 0.0
        %662 = vmatpush1.msra.mxu0 0.0
        %663 = vmatprep.subr.mxu0 0.0
        %664 = vmatpush1.msra.mxu0 0.0
        %665 = vmatprep.subr.mxu0 0.0
        %666 = vmatpush1.msra.mxu0 0.0
        %667 = vmatprep.subr.mxu0 0.0
        %668 = vmatpush1.msra.mxu0 0.0
        %669 = vmatprep.subr.mxu0 0.0
        %670 = vmatpush1.msra.mxu0 0.0
        %671 = vmatprep.subr.mxu0 0.0
        %672 = vmatpush1.msra.mxu0 0.0
        %673 = vmatprep.subr.mxu0 0.0
        %674 = vmatpush1.msra.mxu0 0.0
        %675 = vmatprep.subr.mxu0 0.0
        %676 = vmatpush1.msra.mxu0 0.0
        %677 = vmatprep.subr.mxu0 0.0
        %678 = vmatpush1.msra.mxu0 0.0
        %679 = vmatprep.subr.mxu0 0.0
        %680 = vmatpush1.msra.mxu0 0.0
        %681 = vmatprep.subr.mxu0 0.0
        %682 = vmatpush1.msra.mxu0 0.0
        %683 = vmatprep.subr.mxu0 0.0
        %684 = vmatpush1.msra.mxu0 0.0
        %685 = vmatprep.subr.mxu0 0.0
        %686 = vmatpush1.msra.mxu0 0.0
        %687 = vmatprep.subr.mxu0 0.0
        %688 = vmatpush1.msra.mxu0 %v645
        %689 = vmatprep.subr.mxu0 0.0
        %690 = vmatpush2.msra.mxu0 0.0
        %691 = vmatprep.subr.mxu0 0.0
        %692 = vmatpush2.msra.mxu0 0.0
        %693 = vmatprep.subr.mxu0 0.0
        %694 = vmatpush2.msra.mxu0 0.0
        %695 = vmatprep.subr.mxu0 0.0
        %696 = vmatpush2.msra.mxu0 0.0
        %697 = vmatprep.subr.mxu0 0.0
        %698 = vmatpush2.msra.mxu0 0.0
        %699 = vmatprep.subr.mxu0 0.0
        %700 = vmatpush2.msra.mxu0 0.0
        %701 = vmatprep.subr.mxu0 0.0
        %702 = vmatpush2.msra.mxu0 0.0
        %703 = vmatprep.subr.mxu0 0.0
        %704 = vmatpush2.msra.mxu0 0.0
        %705 = vmatprep.subr.mxu0 0.0
        %706 = vmatpush2.msra.mxu0 0.0
        %707 = vmatprep.subr.mxu0 0.0
        %708 = vmatpush2.msra.mxu0 0.0
        %709 = vmatprep.subr.mxu0 0.0
        %710 = vmatpush2.msra.mxu0 0.0
        %711 = vmatprep.subr.mxu0 0.0
        %712 = vmatpush2.msra.mxu0 0.0
        %713 = vmatprep.subr.mxu0 0.0
        %714 = vmatpush2.msra.mxu0 0.0
        %715 = vmatprep.subr.mxu0 0.0
        %716 = vmatpush2.msra.mxu0 0.0
        %717 = vmatprep.subr.mxu0 0.0
        %718 = vmatpush2.msra.mxu0 0.0
        %719 = vmatprep.subr.mxu0 0.0
        %720 = vmatpush2.msra.mxu0 0.0
        %721 = vmatprep.mubr.f32.mxu0 0.0
        %722 = vmatmul.mubr.f32.gmra.mxu0 %v655
        %v723 = vpop.f32.mrf.mxu0
        %v724 = vadd.f32 %v651, %v723
        %v725 = vpop.f32.mrf.mxu0
        %726 = vdwg.mxu0
        %v727 = vmul.f32 %v724, 0.1
        %v728 = vmax.f32 %v724, %v727
        %v729 = vld [vmem:[%s3] sm:$0xff]
        %v730 = vld [vmem:[%s4] sm:$0xff]
        %732 = vset.pattern.permute.xlu0 0
        %733 = vperm.xlu0 %732, %v730
        %v734 = vpop.permute.xlu0 %733
        %vm736 = vcmask 31744
        %v738 = vsel %vm736, %v729, 0
        %vm740 = vcmask 1043456
        %v742 = vsel %vm740, %v728, 0
        %744 = vmatprep.subr.mxu0 0.0
        %745 = vmatpush1.msra.mxu0 0.0
        %746 = vmatprep.subr.mxu0 0.0
        %747 = vmatpush1.msra.mxu0 0.0
        %748 = vmatprep.subr.mxu0 0.0
        %749 = vmatpush1.msra.mxu0 0.0
        %750 = vmatprep.subr.mxu0 0.0
        %751 = vmatpush1.msra.mxu0 0.0
        %752 = vmatprep.subr.mxu0 0.0
        %753 = vmatpush1.msra.mxu0 0.0
        %754 = vmatprep.subr.mxu0 0.0
        %755 = vmatpush1.msra.mxu0 0.0
        %756 = vmatprep.subr.mxu0 0.0
        %757 = vmatpush1.msra.mxu0 0.0
        %758 = vmatprep.subr.mxu0 0.0
        %759 = vmatpush1.msra.mxu0 0.0
        %760 = vmatprep.subr.mxu0 0.0
        %761 = vmatpush1.msra.mxu0 0.0
        %762 = vmatprep.subr.mxu0 0.0
        %763 = vmatpush1.msra.mxu0 0.0
        %764 = vmatprep.subr.mxu0 0.0
        %765 = vmatpush1.msra.mxu0 0.0
        %766 = vmatprep.subr.mxu0 0.0
        %767 = vmatpush1.msra.mxu0 0.0
        %768 = vmatprep.subr.mxu0 0.0
        %769 = vmatpush1.msra.mxu0 0.0
        %770 = vmatprep.subr.mxu0 0.0
        %771 = vmatpush1.msra.mxu0 0.0
        %772 = vmatprep.subr.mxu0 0.0
        %773 = vmatpush1.msra.mxu0 0.0
        %774 = vmatprep.subr.mxu0 0.0
        %775 = vmatpush1.msra.mxu0 %v742
        %776 = vmatprep.subr.mxu0 0.0
        %777 = vmatpush2.msra.mxu0 0.0
        %778 = vmatprep.subr.mxu0 0.0
        %779 = vmatpush2.msra.mxu0 0.0
        %780 = vmatprep.subr.mxu0 0.0
        %781 = vmatpush2.msra.mxu0 0.0
        %782 = vmatprep.subr.mxu0 0.0
        %783 = vmatpush2.msra.mxu0 0.0
        %784 = vmatprep.subr.mxu0 0.0
        %785 = vmatpush2.msra.mxu0 0.0
        %786 = vmatprep.subr.mxu0 0.0
        %787 = vmatpush2.msra.mxu0 0.0
        %788 = vmatprep.subr.mxu0 0.0
        %789 = vmatpush2.msra.mxu0 0.0
        %790 = vmatprep.subr.mxu0 0.0
        %791 = vmatpush2.msra.mxu0 0.0
        %792 = vmatprep.subr.mxu0 0.0
        %793 = vmatpush2.msra.mxu0 0.0
        %794 = vmatprep.subr.mxu0 0.0
        %795 = vmatpush2.msra.mxu0 0.0
        %796 = vmatprep.subr.mxu0 0.0
        %797 = vmatpush2.msra.mxu0 0.0
        %798 = vmatprep.subr.mxu0 0.0
        %799 = vmatpush2.msra.mxu0 0.0
        %800 = vmatprep.subr.mxu0 0.0
        %801 = vmatpush2.msra.mxu0 0.0
        %802 = vmatprep.subr.mxu0 0.0
        %803 = vmatpush2.msra.mxu0 0.0
        %804 = vmatprep.subr.mxu0 0.0
        %805 = vmatpush2.msra.mxu0 0.0
        %806 = vmatprep.subr.mxu0 0.0
        %807 = vmatpush2.msra.mxu0 0.0
        %808 = vmatprep.mubr.f32.mxu0 0.0
        %809 = vmatmul.mubr.f32.gmra.mxu0 %v738
        %v810 = vpop.f32.mrf.mxu0
        %v811 = vadd.f32 %v734, %v810
        %v812 = vpop.f32.mrf.mxu0
        %813 = vdwg.mxu0
        %815 = vrot.lane.b32.xlu0 %v811, 127
        %v816 = vpop.permute.xlu0 %815
        %v818 = vadd.f32 %v811, %v816
        %v819 = vxor.u32 %v818, 2147483648
        %v820 = vmul.f32 %v819, 1.442695
        %v821 = vpow.pop %v820
        %v822 = vadd.f32 %v821, 1.0
        %v823 = vrcp.pop %v822
        %v824 = vmul.f32 1.0, %v823
        %825 = vst.msk [vmem:[#allocation2] sm:$0xff] %vm644, %v824
        %s826 = sld [smem:[#allocation6]]
        %s827 = sld [smem:[#allocation6 + $0x1]]
        loop: start=0, step=1, limit=8
        $region65: #{tpu_custom_call.1} parent=55 // loop_pre_header
          _
        $region66: #{tpu_custom_call.1} parent=55 // loop_header
          %s829 = sphi 0, %s833
          %p830 = scmp.ge.s32.totalorder %s829, 8
          %v834 = vphi 0.0, %v853
          %v835 = vphi 0.0, %v854
          %v836 = vphi -inf, %v855
          %v837 = vphi -inf, %v856
          %v838 = vphi 0.0, %v860
          %v839 = vphi 0.0, %v861
        $region67: #{tpu_custom_call.1} parent=55 // loop_header_branch
          %832 = sbr.rel (%p830) target = $region71
        $region68: #{tpu_custom_call.1} parent=55 // loop_body
          %s840 = smul.u32 %s829, 2
          %s841 = smul.addr %s840, 8
          %s842 = scalar_lea.vmem %s357, %s841
          %v843 = vld [vmem:[%s842] sm:$0xff]
          %v844 = vld [vmem:[%s842 + $0x8] sm:$0xff]
          %s845 = sshra.s32 %s829, 7
          %s846 = sand.u32 %s829, 127
          %s847 = sadd.s32 %s845, 4
          %s848 = smul.u32 %s847, 128
          %s849 = sshra.s32 %s829, 7
          %s850 = sand.u32 %s829, 127
          %s851 = sadd.s32 %s848, %s850
          %s852 = sld [smem:[#allocation3 + %s851]]
          %v853 = vadd.f32 %v834, %v843
          %v854 = vadd.f32 %v835, %v844
          %v855 = vmax.f32 %v836, %v843
          %v856 = vmax.f32 %v837, %v844
          %v857 = vstv %s852
          %v858 = vmul.f32 %v843, %v857
          %v859 = vmul.f32 %v844, %v857
          %v860 = vadd.f32 %v838, %v858
          %v861 = vadd.f32 %v839, %v859
        $region69: #{tpu_custom_call.1} parent=55 // loop_footer
          %s833 = sadd.s32 1, %s829
        $region70: #{tpu_custom_call.1} parent=55 // loop_footer_branch
          %828 = sbr.rel target = $region66
        $region71: #{tpu_custom_call.1} parent=55 // loop_exit
          _
        %v862 = vmul.f32 %v834, 0.125
        %v863 = vmul.f32 %v835, 0.125
        %v864 = vstv %s826
        %v865 = vadd.f32 %v838, %v864
        %v866 = vadd.f32 %v839, %v864
        %v869 = vrot.slane %v862, 5
        %v870 = vrot.slane %v863, 5
        %v875 = vrot.slane %v836, 7
        %v876 = vrot.slane %v837, 7
        %v881 = vrot.slane %v865, 1
        %v882 = vrot.slane %v866, 1
        %vm885 = vcmask 1042432
        %v886 = vsel %vm885, 0.0, %v869
        %v887 = vsel %vm885, 0.0, %v870
        %v888 = vsel %vm885, %v869, 0.0
        %v889 = vsel %vm885, %v870, 0.0
        %vm890 = vcmask 1045504
        %v891 = vsel %vm890, %v888, 0.0
        %v892 = vsel %vm890, %v889, 0.0
        %vm893 = vcmask 1040384
        %v894 = vsel %vm893, 0.0, %v875
        %v895 = vsel %vm893, 0.0, %v876
        %v896 = vsel %vm893, %v875, 0.0
        %v897 = vsel %vm893, %v876, 0.0
        %v898 = vsel %vm740, %v896, 0.0
        %v899 = vsel %vm740, %v897, 0.0
        %vm900 = vcmask 1046528
        %v901 = vsel %vm900, %v898, %v881
        %v902 = vsel %vm900, %v899, %v882
        %v903 = vsel %vm900, %v881, 0.0
        %v904 = vsel %vm900, %v882, 0.0
        %v905 = vld [vmem:[%s5] sm:$0xff]
        %v906 = vld [vmem:[%s5 + $0x8] sm:$0xff]
        %v907 = vld [vmem:[%s5 + $0x10] sm:$0xff]
        %v908 = vld [vmem:[%s5 + $0x18] sm:$0xff]
        %v909 = vld [vmem:[%s5 + $0x20] sm:$0xff]
        %v910 = vld [vmem:[%s5 + $0x28] sm:$0xff]
        %v911 = vld [vmem:[%s5 + $0x30] sm:$0xff]
        %v912 = vld [vmem:[%s5 + $0x38] sm:$0xff]
        %v913 = vld [vmem:[%s5 + $0x40] sm:$0xff]
        %v914 = vld [vmem:[%s5 + $0x48] sm:$0xff]
        %v915 = vld [vmem:[%s5 + $0x50] sm:$0xff]
        %v916 = vld [vmem:[%s5 + $0x58] sm:$0xff]
        %v917 = vld [vmem:[%s5 + $0x60] sm:$0xff]
        %v918 = vld [vmem:[%s5 + $0x68] sm:$0xff]
        %v919 = vld [vmem:[%s5 + $0x70] sm:$0xff]
        %v920 = vld [vmem:[%s5 + $0x78] sm:$0xff]
        %v921 = vld [vmem:[%s5 + $0x80] sm:$0xff]
        %v922 = vld [vmem:[%s5 + $0x88] sm:$0xff]
        %v923 = vld [vmem:[%s5 + $0x90] sm:$0xff]
        %v924 = vld [vmem:[%s5 + $0x98] sm:$0xff]
        %v925 = vld [vmem:[%s5 + $0xa0] sm:$0xff]
        %v926 = vld [vmem:[%s5 + $0xa8] sm:$0xff]
        %v927 = vld [vmem:[%s5 + $0xb0] sm:$0xff]
        %v928 = vld [vmem:[%s5 + $0xb8] sm:$0xff]
        %v929 = vld [vmem:[%s5 + $0xc0] sm:$0xff]
        %v930 = vld [vmem:[%s5 + $0xc8] sm:$0xff]
        %v931 = vld [vmem:[%s5 + $0xd0] sm:$0xff]
        %v932 = vld [vmem:[%s5 + $0xd8] sm:$0xff]
        %v933 = vld [vmem:[%s5 + $0xe0] sm:$0xff]
        %v934 = vld [vmem:[%s5 + $0xe8] sm:$0xff]
        %v935 = vld [vmem:[%s5 + $0xf0] sm:$0xff]
        %v936 = vld [vmem:[%s5 + $0xf8] sm:$0xff]
        %v937 = vld [vmem:[%s5 + $0x100] sm:$0xff]
        %v938 = vld [vmem:[%s5 + $0x108] sm:$0xff]
        %v939 = vld [vmem:[%s5 + $0x110] sm:$0xff]
        %v940 = vld [vmem:[%s5 + $0x118] sm:$0xff]
        %v941 = vld [vmem:[%s5 + $0x120] sm:$0xff]
        %v942 = vld [vmem:[%s5 + $0x128] sm:$0xff]
        %v943 = vld [vmem:[%s5 + $0x130] sm:$0xff]
        %v944 = vld [vmem:[%s5 + $0x138] sm:$0xff]
        %v945 = vld [vmem:[%s5 + $0x140] sm:$0xff]
        %v946 = vld [vmem:[%s5 + $0x148] sm:$0xff]
        %v947 = vld [vmem:[%s5 + $0x150] sm:$0xff]
        %v948 = vld [vmem:[%s5 + $0x158] sm:$0xff]
        %v949 = vld [vmem:[%s5 + $0x160] sm:$0xff]
        %v950 = vld [vmem:[%s5 + $0x168] sm:$0xff]
        %v951 = vld [vmem:[%s5 + $0x170] sm:$0xff]
        %v952 = vld [vmem:[%s5 + $0x178] sm:$0xff]
        %v953 = vld [vmem:[%s5 + $0x180] sm:$0xff]
        %vm954 = vcmask 343040
        %v956 = vsel %vm954, %v905, 0
        %v959 = vsel %vm954, %v906, 0
        %v962 = vsel %vm954, %v907, 0
        %v965 = vsel %vm954, %v908, 0
        %v968 = vsel %vm954, %v909, 0
        %v971 = vsel %vm954, %v910, 0
        %v974 = vsel %vm954, %v911, 0
        %v977 = vsel %vm954, %v912, 0
        %v980 = vsel %vm954, %v913, 0
        %v983 = vsel %vm954, %v914, 0
        %v986 = vsel %vm954, %v915, 0
        %v989 = vsel %vm954, %v916, 0
        %v992 = vsel %vm954, %v917, 0
        %v995 = vsel %vm954, %v918, 0
        %v998 = vsel %vm954, %v919, 0
        %v1001 = vsel %vm954, %v920, 0
        %v1004 = vsel %vm954, %v921, 0
        %v1007 = vsel %vm954, %v922, 0
        %v1010 = vsel %vm954, %v923, 0
        %v1013 = vsel %vm954, %v924, 0
        %v1016 = vsel %vm954, %v925, 0
        %v1019 = vsel %vm954, %v926, 0
        %v1022 = vsel %vm954, %v927, 0
        %v1025 = vsel %vm954, %v928, 0
        %v1028 = vsel %vm954, %v929, 0
        %v1031 = vsel %vm954, %v930, 0
        %v1034 = vsel %vm954, %v931, 0
        %v1037 = vsel %vm954, %v932, 0
        %v1040 = vsel %vm954, %v933, 0
        %v1043 = vsel %vm954, %v934, 0
        %v1046 = vsel %vm954, %v935, 0
        %v1049 = vsel %vm954, %v936, 0
        %v1052 = vsel %vm954, %v937, 0
        %v1055 = vsel %vm954, %v938, 0
        %v1058 = vsel %vm954, %v939, 0
        %v1061 = vsel %vm954, %v940, 0
        %v1064 = vsel %vm954, %v941, 0
        %v1067 = vsel %vm954, %v942, 0
        %v1070 = vsel %vm954, %v943, 0
        %v1073 = vsel %vm954, %v944, 0
        %v1076 = vsel %vm954, %v945, 0
        %v1079 = vsel %vm954, %v946, 0
        %v1082 = vsel %vm954, %v947, 0
        %v1085 = vsel %vm954, %v948, 0
        %v1088 = vsel %vm954, %v949, 0
        %v1091 = vsel %vm954, %v950, 0
        %v1094 = vsel %vm954, %v951, 0
        %v1097 = vsel %vm954, %v952, 0
        %v1100 = vsel %vm954, %v953, 0
        %vm1102 = vcmask 1041408
        %v1104 = vsel %vm1102, 0.0, 0
        %1106 = vmatprep.subr.mxu0 0.0
        %1107 = vmatpush1.msra.mxu0 0.0
        %1108 = vmatprep.subr.mxu0 0.0
        %1109 = vmatpush1.msra.mxu0 0.0
        %1110 = vmatprep.subr.mxu0 0.0
        %1111 = vmatpush1.msra.mxu0 0.0
        %1112 = vmatprep.subr.mxu0 0.0
        %1113 = vmatpush1.msra.mxu0 0.0
        %1114 = vmatprep.subr.mxu0 0.0
        %1115 = vmatpush1.msra.mxu0 0.0
        %1116 = vmatprep.subr.mxu0 0.0
        %1117 = vmatpush1.msra.mxu0 0.0
        %1118 = vmatprep.subr.mxu0 0.0
        %1119 = vmatpush1.msra.mxu0 0.0
        %1120 = vmatprep.subr.mxu0 0.0
        %1121 = vmatpush1.msra.mxu0 0.0
        %1122 = vmatprep.subr.mxu0 0.0
        %1123 = vmatpush1.msra.mxu0 0.0
        %1124 = vmatprep.subr.mxu0 0.0
        %1125 = vmatpush1.msra.mxu0 0.0
        %1126 = vmatprep.subr.mxu0 %v1104
        %1127 = vmatpush1.msra.mxu0 %v1104
        %1128 = vmatprep.subr.mxu0 %v904
        %1129 = vmatpush1.msra.mxu0 %v903
        %1130 = vmatprep.subr.mxu0 %v902
        %1131 = vmatpush1.msra.mxu0 %v901
        %1132 = vmatprep.subr.mxu0 %v895
        %1133 = vmatpush1.msra.mxu0 %v894
        %1134 = vmatprep.subr.mxu0 %v892
        %1135 = vmatpush1.msra.mxu0 %v891
        %1136 = vmatprep.subr.mxu0 %v887
        %1137 = vmatpush1.msra.mxu0 %v886
        %1138 = vmatprep.subr.mxu0 0.0
        %1139 = vmatpush2.msra.mxu0 0.0
        %1140 = vmatprep.subr.mxu0 0.0
        %1141 = vmatpush2.msra.mxu0 0.0
        %1142 = vmatprep.subr.mxu0 0.0
        %1143 = vmatpush2.msra.mxu0 0.0
        %1144 = vmatprep.subr.mxu0 0.0
        %1145 = vmatpush2.msra.mxu0 0.0
        %1146 = vmatprep.subr.mxu0 0.0
        %1147 = vmatpush2.msra.mxu0 0.0
        %1148 = vmatprep.subr.mxu0 0.0
        %1149 = vmatpush2.msra.mxu0 0.0
        %1150 = vmatprep.subr.mxu0 0.0
        %1151 = vmatpush2.msra.mxu0 0.0
        %1152 = vmatprep.subr.mxu0 0.0
        %1153 = vmatpush2.msra.mxu0 0.0
        %1154 = vmatprep.subr.mxu0 0.0
        %1155 = vmatpush2.msra.mxu0 0.0
        %1156 = vmatprep.subr.mxu0 0.0
        %1157 = vmatpush2.msra.mxu0 0.0
        %1158 = vmatprep.subr.mxu0 0.0
        %1159 = vmatpush2.msra.mxu0 0.0
        %1160 = vmatprep.subr.mxu0 0.0
        %1161 = vmatpush2.msra.mxu0 0.0
        %1162 = vmatprep.subr.mxu0 0.0
        %1163 = vmatpush2.msra.mxu0 0.0
        %1164 = vmatprep.subr.mxu0 0.0
        %1165 = vmatpush2.msra.mxu0 0.0
        %1166 = vmatprep.subr.mxu0 0.0
        %1167 = vmatpush2.msra.mxu0 0.0
        %1168 = vmatprep.subr.mxu0 0.0
        %1169 = vmatpush2.msra.mxu0 0.0
        %1170 = vmatprep.mubr.f32.mxu0 0.0
        %1171 = vmatmul.mubr.f32.gmra.mxu0 %v956
        %v1172 = vpop.f32.mrf.mxu0
        %v1173 = vadd.f32 0.0, %v1172
        %v1174 = vpop.f32.mrf.mxu0
        %v1175 = vadd.f32 0.0, %v1174
        %1176 = vmatprep.mubr.f32.mxu0 0.0
        %1177 = vmatmul.mubr.f32.gmra.mxu0 %v959
        %v1178 = vpop.f32.mrf.mxu0
        %v1179 = vadd.f32 0.0, %v1178
        %v1180 = vpop.f32.mrf.mxu0
        %v1181 = vadd.f32 0.0, %v1180
        %1182 = vmatprep.mubr.f32.mxu0 0.0
        %1183 = vmatmul.mubr.f32.gmra.mxu0 %v962
        %v1184 = vpop.f32.mrf.mxu0
        %v1185 = vadd.f32 0.0, %v1184
        %v1186 = vpop.f32.mrf.mxu0
        %v1187 = vadd.f32 0.0, %v1186
        %1188 = vmatprep.mubr.f32.mxu0 0.0
        %1189 = vmatmul.mubr.f32.gmra.mxu0 %v965
        %v1190 = vpop.f32.mrf.mxu0
        %v1191 = vadd.f32 0.0, %v1190
        %v1192 = vpop.f32.mrf.mxu0
        %v1193 = vadd.f32 0.0, %v1192
        %1194 = vmatprep.mubr.f32.mxu0 0.0
        %1195 = vmatmul.mubr.f32.gmra.mxu0 %v968
        %v1196 = vpop.f32.mrf.mxu0
        %v1197 = vadd.f32 0.0, %v1196
        %v1198 = vpop.f32.mrf.mxu0
        %v1199 = vadd.f32 0.0, %v1198
        %1200 = vmatprep.mubr.f32.mxu0 0.0
        %1201 = vmatmul.mubr.f32.gmra.mxu0 %v971
        %v1202 = vpop.f32.mrf.mxu0
        %v1203 = vadd.f32 0.0, %v1202
        %v1204 = vpop.f32.mrf.mxu0
        %v1205 = vadd.f32 0.0, %v1204
        %1206 = vmatprep.mubr.f32.mxu0 0.0
        %1207 = vmatmul.mubr.f32.gmra.mxu0 %v974
        %v1208 = vpop.f32.mrf.mxu0
        %v1209 = vadd.f32 0.0, %v1208
        %v1210 = vpop.f32.mrf.mxu0
        %v1211 = vadd.f32 0.0, %v1210
        %1212 = vmatprep.mubr.f32.mxu0 0.0
        %1213 = vmatmul.mubr.f32.gmra.mxu0 %v977
        %v1214 = vpop.f32.mrf.mxu0
        %v1215 = vadd.f32 0.0, %v1214
        %v1216 = vpop.f32.mrf.mxu0
        %v1217 = vadd.f32 0.0, %v1216
        %1218 = vmatprep.mubr.f32.mxu0 0.0
        %1219 = vmatmul.mubr.f32.gmra.mxu0 %v980
        %v1220 = vpop.f32.mrf.mxu0
        %v1221 = vadd.f32 0.0, %v1220
        %v1222 = vpop.f32.mrf.mxu0
        %v1223 = vadd.f32 0.0, %v1222
        %1224 = vmatprep.mubr.f32.mxu0 0.0
        %1225 = vmatmul.mubr.f32.gmra.mxu0 %v983
        %v1226 = vpop.f32.mrf.mxu0
        %v1227 = vadd.f32 0.0, %v1226
        %v1228 = vpop.f32.mrf.mxu0
        %v1229 = vadd.f32 0.0, %v1228
        %1230 = vmatprep.mubr.f32.mxu0 0.0
        %1231 = vmatmul.mubr.f32.gmra.mxu0 %v986
        %v1232 = vpop.f32.mrf.mxu0
        %v1233 = vadd.f32 0.0, %v1232
        %v1234 = vpop.f32.mrf.mxu0
        %v1235 = vadd.f32 0.0, %v1234
        %1236 = vmatprep.mubr.f32.mxu0 0.0
        %1237 = vmatmul.mubr.f32.gmra.mxu0 %v989
        %v1238 = vpop.f32.mrf.mxu0
        %v1239 = vadd.f32 0.0, %v1238
        %v1240 = vpop.f32.mrf.mxu0
        %v1241 = vadd.f32 0.0, %v1240
        %1242 = vmatprep.mubr.f32.mxu0 0.0
        %1243 = vmatmul.mubr.f32.gmra.mxu0 %v992
        %v1244 = vpop.f32.mrf.mxu0
        %v1245 = vadd.f32 0.0, %v1244
        %v1246 = vpop.f32.mrf.mxu0
        %v1247 = vadd.f32 0.0, %v1246
        %1248 = vmatprep.mubr.f32.mxu0 0.0
        %1249 = vmatmul.mubr.f32.gmra.mxu0 %v995
        %v1250 = vpop.f32.mrf.mxu0
        %v1251 = vadd.f32 0.0, %v1250
        %v1252 = vpop.f32.mrf.mxu0
        %v1253 = vadd.f32 0.0, %v1252
        %1254 = vmatprep.mubr.f32.mxu0 0.0
        %1255 = vmatmul.mubr.f32.gmra.mxu0 %v998
        %v1256 = vpop.f32.mrf.mxu0
        %v1257 = vadd.f32 0.0, %v1256
        %v1258 = vpop.f32.mrf.mxu0
        %v1259 = vadd.f32 0.0, %v1258
        %1260 = vmatprep.mubr.f32.mxu0 0.0
        %1261 = vmatmul.mubr.f32.gmra.mxu0 %v1001
        %v1262 = vpop.f32.mrf.mxu0
        %v1263 = vadd.f32 0.0, %v1262
        %v1264 = vpop.f32.mrf.mxu0
        %v1265 = vadd.f32 0.0, %v1264
        %1266 = vmatprep.mubr.f32.mxu0 0.0
        %1267 = vmatmul.mubr.f32.gmra.mxu0 %v1004
        %v1268 = vpop.f32.mrf.mxu0
        %v1269 = vadd.f32 0.0, %v1268
        %v1270 = vpop.f32.mrf.mxu0
        %v1271 = vadd.f32 0.0, %v1270
        %1272 = vmatprep.mubr.f32.mxu0 0.0
        %1273 = vmatmul.mubr.f32.gmra.mxu0 %v1007
        %v1274 = vpop.f32.mrf.mxu0
        %v1275 = vadd.f32 0.0, %v1274
        %v1276 = vpop.f32.mrf.mxu0
        %v1277 = vadd.f32 0.0, %v1276
        %1278 = vmatprep.mubr.f32.mxu0 0.0
        %1279 = vmatmul.mubr.f32.gmra.mxu0 %v1010
        %v1280 = vpop.f32.mrf.mxu0
        %v1281 = vadd.f32 0.0, %v1280
        %v1282 = vpop.f32.mrf.mxu0
        %v1283 = vadd.f32 0.0, %v1282
        %1284 = vmatprep.mubr.f32.mxu0 0.0
        %1285 = vmatmul.mubr.f32.gmra.mxu0 %v1013
        %v1286 = vpop.f32.mrf.mxu0
        %v1287 = vadd.f32 0.0, %v1286
        %v1288 = vpop.f32.mrf.mxu0
        %v1289 = vadd.f32 0.0, %v1288
        %1290 = vmatprep.mubr.f32.mxu0 0.0
        %1291 = vmatmul.mubr.f32.gmra.mxu0 %v1016
        %v1292 = vpop.f32.mrf.mxu0
        %v1293 = vadd.f32 0.0, %v1292
        %v1294 = vpop.f32.mrf.mxu0
        %v1295 = vadd.f32 0.0, %v1294
        %1296 = vmatprep.mubr.f32.mxu0 0.0
        %1297 = vmatmul.mubr.f32.gmra.mxu0 %v1019
        %v1298 = vpop.f32.mrf.mxu0
        %v1299 = vadd.f32 0.0, %v1298
        %v1300 = vpop.f32.mrf.mxu0
        %v1301 = vadd.f32 0.0, %v1300
        %1302 = vmatprep.mubr.f32.mxu0 0.0
        %1303 = vmatmul.mubr.f32.gmra.mxu0 %v1022
        %v1304 = vpop.f32.mrf.mxu0
        %v1305 = vadd.f32 0.0, %v1304
        %v1306 = vpop.f32.mrf.mxu0
        %v1307 = vadd.f32 0.0, %v1306
        %1308 = vmatprep.mubr.f32.mxu0 0.0
        %1309 = vmatmul.mubr.f32.gmra.mxu0 %v1025
        %v1310 = vpop.f32.mrf.mxu0
        %v1311 = vadd.f32 0.0, %v1310
        %v1312 = vpop.f32.mrf.mxu0
        %v1313 = vadd.f32 0.0, %v1312
        %1314 = vmatprep.mubr.f32.mxu0 0.0
        %1315 = vmatmul.mubr.f32.gmra.mxu0 %v1028
        %v1316 = vpop.f32.mrf.mxu0
        %v1317 = vadd.f32 0.0, %v1316
        %v1318 = vpop.f32.mrf.mxu0
        %v1319 = vadd.f32 0.0, %v1318
        %1320 = vmatprep.mubr.f32.mxu0 0.0
        %1321 = vmatmul.mubr.f32.gmra.mxu0 %v1031
        %v1322 = vpop.f32.mrf.mxu0
        %v1323 = vadd.f32 0.0, %v1322
        %v1324 = vpop.f32.mrf.mxu0
        %v1325 = vadd.f32 0.0, %v1324
        %1326 = vmatprep.mubr.f32.mxu0 0.0
        %1327 = vmatmul.mubr.f32.gmra.mxu0 %v1034
        %v1328 = vpop.f32.mrf.mxu0
        %v1329 = vadd.f32 0.0, %v1328
        %v1330 = vpop.f32.mrf.mxu0
        %v1331 = vadd.f32 0.0, %v1330
        %1332 = vmatprep.mubr.f32.mxu0 0.0
        %1333 = vmatmul.mubr.f32.gmra.mxu0 %v1037
        %v1334 = vpop.f32.mrf.mxu0
        %v1335 = vadd.f32 0.0, %v1334
        %v1336 = vpop.f32.mrf.mxu0
        %v1337 = vadd.f32 0.0, %v1336
        %1338 = vmatprep.mubr.f32.mxu0 0.0
        %1339 = vmatmul.mubr.f32.gmra.mxu0 %v1040
        %v1340 = vpop.f32.mrf.mxu0
        %v1341 = vadd.f32 0.0, %v1340
        %v1342 = vpop.f32.mrf.mxu0
        %v1343 = vadd.f32 0.0, %v1342
        %1344 = vmatprep.mubr.f32.mxu0 0.0
        %1345 = vmatmul.mubr.f32.gmra.mxu0 %v1043
        %v1346 = vpop.f32.mrf.mxu0
        %v1347 = vadd.f32 0.0, %v1346
        %v1348 = vpop.f32.mrf.mxu0
        %v1349 = vadd.f32 0.0, %v1348
        %1350 = vmatprep.mubr.f32.mxu0 0.0
        %1351 = vmatmul.mubr.f32.gmra.mxu0 %v1046
        %v1352 = vpop.f32.mrf.mxu0
        %v1353 = vadd.f32 0.0, %v1352
        %v1354 = vpop.f32.mrf.mxu0
        %v1355 = vadd.f32 0.0, %v1354
        %1356 = vmatprep.mubr.f32.mxu0 0.0
        %1357 = vmatmul.mubr.f32.gmra.mxu0 %v1049
        %v1358 = vpop.f32.mrf.mxu0
        %v1359 = vadd.f32 0.0, %v1358
        %v1360 = vpop.f32.mrf.mxu0
        %v1361 = vadd.f32 0.0, %v1360
        %1362 = vmatprep.mubr.f32.mxu0 0.0
        %1363 = vmatmul.mubr.f32.gmra.mxu0 %v1052
        %v1364 = vpop.f32.mrf.mxu0
        %v1365 = vadd.f32 0.0, %v1364
        %v1366 = vpop.f32.mrf.mxu0
        %v1367 = vadd.f32 0.0, %v1366
        %1368 = vmatprep.mubr.f32.mxu0 0.0
        %1369 = vmatmul.mubr.f32.gmra.mxu0 %v1055
        %v1370 = vpop.f32.mrf.mxu0
        %v1371 = vadd.f32 0.0, %v1370
        %v1372 = vpop.f32.mrf.mxu0
        %v1373 = vadd.f32 0.0, %v1372
        %1374 = vmatprep.mubr.f32.mxu0 0.0
        %1375 = vmatmul.mubr.f32.gmra.mxu0 %v1058
        %v1376 = vpop.f32.mrf.mxu0
        %v1377 = vadd.f32 0.0, %v1376
        %v1378 = vpop.f32.mrf.mxu0
        %v1379 = vadd.f32 0.0, %v1378
        %1380 = vmatprep.mubr.f32.mxu0 0.0
        %1381 = vmatmul.mubr.f32.gmra.mxu0 %v1061
        %v1382 = vpop.f32.mrf.mxu0
        %v1383 = vadd.f32 0.0, %v1382
        %v1384 = vpop.f32.mrf.mxu0
        %v1385 = vadd.f32 0.0, %v1384
        %1386 = vmatprep.mubr.f32.mxu0 0.0
        %1387 = vmatmul.mubr.f32.gmra.mxu0 %v1064
        %v1388 = vpop.f32.mrf.mxu0
        %v1389 = vadd.f32 0.0, %v1388
        %v1390 = vpop.f32.mrf.mxu0
        %v1391 = vadd.f32 0.0, %v1390
        %1392 = vmatprep.mubr.f32.mxu0 0.0
        %1393 = vmatmul.mubr.f32.gmra.mxu0 %v1067
        %v1394 = vpop.f32.mrf.mxu0
        %v1395 = vadd.f32 0.0, %v1394
        %v1396 = vpop.f32.mrf.mxu0
        %v1397 = vadd.f32 0.0, %v1396
        %1398 = vmatprep.mubr.f32.mxu0 0.0
        %1399 = vmatmul.mubr.f32.gmra.mxu0 %v1070
        %v1400 = vpop.f32.mrf.mxu0
        %v1401 = vadd.f32 0.0, %v1400
        %v1402 = vpop.f32.mrf.mxu0
        %v1403 = vadd.f32 0.0, %v1402
        %1404 = vmatprep.mubr.f32.mxu0 0.0
        %1405 = vmatmul.mubr.f32.gmra.mxu0 %v1073
        %v1406 = vpop.f32.mrf.mxu0
        %v1407 = vadd.f32 0.0, %v1406
        %v1408 = vpop.f32.mrf.mxu0
        %v1409 = vadd.f32 0.0, %v1408
        %1410 = vmatprep.mubr.f32.mxu0 0.0
        %1411 = vmatmul.mubr.f32.gmra.mxu0 %v1076
        %v1412 = vpop.f32.mrf.mxu0
        %v1413 = vadd.f32 0.0, %v1412
        %v1414 = vpop.f32.mrf.mxu0
        %v1415 = vadd.f32 0.0, %v1414
        %1416 = vmatprep.mubr.f32.mxu0 0.0
        %1417 = vmatmul.mubr.f32.gmra.mxu0 %v1079
        %v1418 = vpop.f32.mrf.mxu0
        %v1419 = vadd.f32 0.0, %v1418
        %v1420 = vpop.f32.mrf.mxu0
        %v1421 = vadd.f32 0.0, %v1420
        %1422 = vmatprep.mubr.f32.mxu0 0.0
        %1423 = vmatmul.mubr.f32.gmra.mxu0 %v1082
        %v1424 = vpop.f32.mrf.mxu0
        %v1425 = vadd.f32 0.0, %v1424
        %v1426 = vpop.f32.mrf.mxu0
        %v1427 = vadd.f32 0.0, %v1426
        %1428 = vmatprep.mubr.f32.mxu0 0.0
        %1429 = vmatmul.mubr.f32.gmra.mxu0 %v1085
        %v1430 = vpop.f32.mrf.mxu0
        %v1431 = vadd.f32 0.0, %v1430
        %v1432 = vpop.f32.mrf.mxu0
        %v1433 = vadd.f32 0.0, %v1432
        %1434 = vmatprep.mubr.f32.mxu0 0.0
        %1435 = vmatmul.mubr.f32.gmra.mxu0 %v1088
        %v1436 = vpop.f32.mrf.mxu0
        %v1437 = vadd.f32 0.0, %v1436
        %v1438 = vpop.f32.mrf.mxu0
        %v1439 = vadd.f32 0.0, %v1438
        %1440 = vmatprep.mubr.f32.mxu0 0.0
        %1441 = vmatmul.mubr.f32.gmra.mxu0 %v1091
        %v1442 = vpop.f32.mrf.mxu0
        %v1443 = vadd.f32 0.0, %v1442
        %v1444 = vpop.f32.mrf.mxu0
        %v1445 = vadd.f32 0.0, %v1444
        %1446 = vmatprep.mubr.f32.mxu0 0.0
        %1447 = vmatmul.mubr.f32.gmra.mxu0 %v1094
        %v1448 = vpop.f32.mrf.mxu0
        %v1449 = vadd.f32 0.0, %v1448
        %v1450 = vpop.f32.mrf.mxu0
        %v1451 = vadd.f32 0.0, %v1450
        %1452 = vmatprep.mubr.f32.mxu0 0.0
        %1453 = vmatmul.mubr.f32.gmra.mxu0 %v1097
        %v1454 = vpop.f32.mrf.mxu0
        %v1455 = vadd.f32 0.0, %v1454
        %v1456 = vpop.f32.mrf.mxu0
        %v1457 = vadd.f32 0.0, %v1456
        %1458 = vmatprep.mubr.f32.mxu0 0.0
        %1459 = vmatmul.mubr.f32.gmra.mxu0 %v1100
        %v1460 = vpop.f32.mrf.mxu0
        %v1461 = vadd.f32 0.0, %v1460
        %v1462 = vpop.f32.mrf.mxu0
        %v1463 = vadd.f32 0.0, %v1462
        %1464 = vdwg.mxu0
        %1466 = vrot.lane.b32.xlu0 %v1175, 51
        %v1467 = vpop.permute.xlu0 %1466
        %1470 = vrot.lane.b32.xlu0 %v1173, 51
        %v1471 = vpop.permute.xlu0 %1470
        %vm1472 = vcmask 416768
        %v1473 = vsel %vm1472, %v1471, %v1467
        %v1476 = vsel %vm1472, %v1467, %v1471
        %v1477 = vld [vmem:[%s6] ss:$8 sm:$0x3]
        %v1479 = vlaneseq
        %v1480 = vshrl.u32 %v1479, 7
        %v1481 = vsub.s32 0, %v1480
        %v1482 = vrot.slane %v1477, %v1481
        %v1483 = vlaneseq
        %v1484 = vshrl.u32 %v1483, 7
        %v1485 = vsub.s32 1, %v1484
        %v1486 = vrot.slane %v1477, %v1485
        %v1489 = vmul.f32 %v1476, %v1482
        %v1490 = vmul.f32 %v1473, %v1486
        %v1491 = vadd.f32 %v1489, 0.0
        %v1492 = vadd.f32 %v1490, 0.0
        %1494 = vrot.lane.b32.xlu0 %v1181, 50
        %v1495 = vpop.permute.xlu0 %1494
        %1498 = vrot.lane.b32.xlu0 %v1179, 50
        %v1499 = vpop.permute.xlu0 %1498
        %vm1500 = vcmask 408576
        %v1501 = vsel %vm1500, %v1499, %v1495
        %v1504 = vsel %vm1500, %v1495, %v1499
        %s1505 = scalar_lea.vmem %s6, 1
        %v1506 = vld [vmem:[%s1505] ss:$8 sm:$0x3]
        %v1508 = vlaneseq
        %v1509 = vshrl.u32 %v1508, 7
        %v1510 = vsub.s32 0, %v1509
        %v1511 = vrot.slane %v1506, %v1510
        %v1512 = vlaneseq
        %v1513 = vshrl.u32 %v1512, 7
        %v1514 = vsub.s32 1, %v1513
        %v1515 = vrot.slane %v1506, %v1514
        %v1518 = vmul.f32 %v1504, %v1511
        %v1519 = vmul.f32 %v1501, %v1515
        %v1520 = vadd.f32 %v1491, %v1518
        %v1521 = vadd.f32 %v1492, %v1519
        %1523 = vrot.lane.b32.xlu0 %v1187, 49
        %v1524 = vpop.permute.xlu0 %1523
        %1527 = vrot.lane.b32.xlu0 %v1185, 49
        %v1528 = vpop.permute.xlu0 %1527
        %vm1529 = vcmask 400384
        %v1530 = vsel %vm1529, %v1528, %v1524
        %v1533 = vsel %vm1529, %v1524, %v1528
        %s1534 = scalar_lea.vmem %s6, 2
        %v1535 = vld [vmem:[%s1534] ss:$8 sm:$0x3]
        %v1537 = vlaneseq
        %v1538 = vshrl.u32 %v1537, 7
        %v1539 = vsub.s32 0, %v1538
        %v1540 = vrot.slane %v1535, %v1539
        %v1541 = vlaneseq
        %v1542 = vshrl.u32 %v1541, 7
        %v1543 = vsub.s32 1, %v1542
        %v1544 = vrot.slane %v1535, %v1543
        %v1547 = vmul.f32 %v1533, %v1540
        %v1548 = vmul.f32 %v1530, %v1544
        %v1549 = vadd.f32 %v1520, %v1547
        %v1550 = vadd.f32 %v1521, %v1548
        %1552 = vrot.lane.b32.xlu0 %v1193, 48
        %v1553 = vpop.permute.xlu0 %1552
        %1556 = vrot.lane.b32.xlu0 %v1191, 48
        %v1557 = vpop.permute.xlu0 %1556
        %vm1558 = vcmask 392192
        %v1559 = vsel %vm1558, %v1557, %v1553
        %v1562 = vsel %vm1558, %v1553, %v1557
        %s1563 = scalar_lea.vmem %s6, 3
        %v1564 = vld [vmem:[%s1563] ss:$8 sm:$0x3]
        %v1566 = vlaneseq
        %v1567 = vshrl.u32 %v1566, 7
        %v1568 = vsub.s32 0, %v1567
        %v1569 = vrot.slane %v1564, %v1568
        %v1570 = vlaneseq
        %v1571 = vshrl.u32 %v1570, 7
        %v1572 = vsub.s32 1, %v1571
        %v1573 = vrot.slane %v1564, %v1572
        %v1576 = vmul.f32 %v1562, %v1569
        %v1577 = vmul.f32 %v1559, %v1573
        %v1578 = vadd.f32 %v1549, %v1576
        %v1579 = vadd.f32 %v1550, %v1577
        %1581 = vrot.lane.b32.xlu0 %v1199, 47
        %v1582 = vpop.permute.xlu0 %1581
        %1585 = vrot.lane.b32.xlu0 %v1197, 47
        %v1586 = vpop.permute.xlu0 %1585
        %vm1587 = vcmask 384000
        %v1588 = vsel %vm1587, %v1586, %v1582
        %v1591 = vsel %vm1587, %v1582, %v1586
        %s1592 = scalar_lea.vmem %s6, 4
        %v1593 = vld [vmem:[%s1592] ss:$8 sm:$0x3]
        %v1595 = vlaneseq
        %v1596 = vshrl.u32 %v1595, 7
        %v1597 = vsub.s32 0, %v1596
        %v1598 = vrot.slane %v1593, %v1597
        %v1599 = vlaneseq
        %v1600 = vshrl.u32 %v1599, 7
        %v1601 = vsub.s32 1, %v1600
        %v1602 = vrot.slane %v1593, %v1601
        %v1605 = vmul.f32 %v1591, %v1598
        %v1606 = vmul.f32 %v1588, %v1602
        %v1607 = vadd.f32 %v1578, %v1605
        %v1608 = vadd.f32 %v1579, %v1606
        %1610 = vrot.lane.b32.xlu0 %v1205, 46
        %v1611 = vpop.permute.xlu0 %1610
        %1614 = vrot.lane.b32.xlu0 %v1203, 46
        %v1615 = vpop.permute.xlu0 %1614
        %vm1616 = vcmask 375808
        %v1617 = vsel %vm1616, %v1615, %v1611
        %v1620 = vsel %vm1616, %v1611, %v1615
        %s1621 = scalar_lea.vmem %s6, 5
        %v1622 = vld [vmem:[%s1621] ss:$8 sm:$0x3]
        %v1624 = vlaneseq
        %v1625 = vshrl.u32 %v1624, 7
        %v1626 = vsub.s32 0, %v1625
        %v1627 = vrot.slane %v1622, %v1626
        %v1628 = vlaneseq
        %v1629 = vshrl.u32 %v1628, 7
        %v1630 = vsub.s32 1, %v1629
        %v1631 = vrot.slane %v1622, %v1630
        %v1634 = vmul.f32 %v1620, %v1627
        %v1635 = vmul.f32 %v1617, %v1631
        %v1636 = vadd.f32 %v1607, %v1634
        %v1637 = vadd.f32 %v1608, %v1635
        %1639 = vrot.lane.b32.xlu0 %v1211, 45
        %v1640 = vpop.permute.xlu0 %1639
        %1643 = vrot.lane.b32.xlu0 %v1209, 45
        %v1644 = vpop.permute.xlu0 %1643
        %vm1645 = vcmask 367616
        %v1646 = vsel %vm1645, %v1644, %v1640
        %v1649 = vsel %vm1645, %v1640, %v1644
        %s1650 = scalar_lea.vmem %s6, 6
        %v1651 = vld [vmem:[%s1650] ss:$8 sm:$0x3]
        %v1653 = vlaneseq
        %v1654 = vshrl.u32 %v1653, 7
        %v1655 = vsub.s32 0, %v1654
        %v1656 = vrot.slane %v1651, %v1655
        %v1657 = vlaneseq
        %v1658 = vshrl.u32 %v1657, 7
        %v1659 = vsub.s32 1, %v1658
        %v1660 = vrot.slane %v1651, %v1659
        %v1663 = vmul.f32 %v1649, %v1656
        %v1664 = vmul.f32 %v1646, %v1660
        %v1665 = vadd.f32 %v1636, %v1663
        %v1666 = vadd.f32 %v1637, %v1664
        %1668 = vrot.lane.b32.xlu0 %v1217, 35
        %v1669 = vpop.permute.xlu0 %1668
        %1672 = vrot.lane.b32.xlu0 %v1215, 35
        %v1673 = vpop.permute.xlu0 %1672
        %vm1674 = vcmask 285696
        %v1675 = vsel %vm1674, %v1673, %v1669
        %v1678 = vsel %vm1674, %v1669, %v1673
        %s1679 = scalar_lea.vmem %s6, 7
        %v1680 = vld [vmem:[%s1679] ss:$8 sm:$0x3]
        %v1682 = vlaneseq
        %v1683 = vshrl.u32 %v1682, 7
        %v1684 = vsub.s32 0, %v1683
        %v1685 = vrot.slane %v1680, %v1684
        %v1686 = vlaneseq
        %v1687 = vshrl.u32 %v1686, 7
        %v1688 = vsub.s32 1, %v1687
        %v1689 = vrot.slane %v1680, %v1688
        %v1692 = vmul.f32 %v1678, %v1685
        %v1693 = vmul.f32 %v1675, %v1689
        %v1694 = vadd.f32 %v1665, %v1692
        %v1695 = vadd.f32 %v1666, %v1693
        %1697 = vrot.lane.b32.xlu0 %v1223, 34
        %v1698 = vpop.permute.xlu0 %1697
        %1701 = vrot.lane.b32.xlu0 %v1221, 34
        %v1702 = vpop.permute.xlu0 %1701
        %vm1703 = vcmask 277504
        %v1704 = vsel %vm1703, %v1702, %v1698
        %v1707 = vsel %vm1703, %v1698, %v1702
        %s1708 = scalar_lea.vmem %s6, 16
        %v1709 = vld [vmem:[%s1708] ss:$8 sm:$0x3]
        %v1711 = vlaneseq
        %v1712 = vshrl.u32 %v1711, 7
        %v1713 = vsub.s32 0, %v1712
        %v1714 = vrot.slane %v1709, %v1713
        %v1715 = vlaneseq
        %v1716 = vshrl.u32 %v1715, 7
        %v1717 = vsub.s32 1, %v1716
        %v1718 = vrot.slane %v1709, %v1717
        %v1721 = vmul.f32 %v1707, %v1714
        %v1722 = vmul.f32 %v1704, %v1718
        %v1723 = vadd.f32 %v1694, %v1721
        %v1724 = vadd.f32 %v1695, %v1722
        %1726 = vrot.lane.b32.xlu0 %v1229, 33
        %v1727 = vpop.permute.xlu0 %1726
        %1730 = vrot.lane.b32.xlu0 %v1227, 33
        %v1731 = vpop.permute.xlu0 %1730
        %vm1732 = vcmask 269312
        %v1733 = vsel %vm1732, %v1731, %v1727
        %v1736 = vsel %vm1732, %v1727, %v1731
        %s1737 = scalar_lea.vmem %s6, 17
        %v1738 = vld [vmem:[%s1737] ss:$8 sm:$0x3]
        %v1740 = vlaneseq
        %v1741 = vshrl.u32 %v1740, 7
        %v1742 = vsub.s32 0, %v1741
        %v1743 = vrot.slane %v1738, %v1742
        %v1744 = vlaneseq
        %v1745 = vshrl.u32 %v1744, 7
        %v1746 = vsub.s32 1, %v1745
        %v1747 = vrot.slane %v1738, %v1746
        %v1750 = vmul.f32 %v1736, %v1743
        %v1751 = vmul.f32 %v1733, %v1747
        %v1752 = vadd.f32 %v1723, %v1750
        %v1753 = vadd.f32 %v1724, %v1751
        %1755 = vrot.lane.b32.xlu0 %v1235, 32
        %v1756 = vpop.permute.xlu0 %1755
        %1759 = vrot.lane.b32.xlu0 %v1233, 32
        %v1760 = vpop.permute.xlu0 %1759
        %vm1761 = vcmask 261120
        %v1762 = vsel %vm1761, %v1760, %v1756
        %v1765 = vsel %vm1761, %v1756, %v1760
        %s1766 = scalar_lea.vmem %s6, 18
        %v1767 = vld [vmem:[%s1766] ss:$8 sm:$0x3]
        %v1769 = vlaneseq
        %v1770 = vshrl.u32 %v1769, 7
        %v1771 = vsub.s32 0, %v1770
        %v1772 = vrot.slane %v1767, %v1771
        %v1773 = vlaneseq
        %v1774 = vshrl.u32 %v1773, 7
        %v1775 = vsub.s32 1, %v1774
        %v1776 = vrot.slane %v1767, %v1775
        %v1779 = vmul.f32 %v1765, %v1772
        %v1780 = vmul.f32 %v1762, %v1776
        %v1781 = vadd.f32 %v1752, %v1779
        %v1782 = vadd.f32 %v1753, %v1780
        %1784 = vrot.lane.b32.xlu0 %v1241, 31
        %v1785 = vpop.permute.xlu0 %1784
        %1788 = vrot.lane.b32.xlu0 %v1239, 31
        %v1789 = vpop.permute.xlu0 %1788
        %vm1790 = vcmask 252928
        %v1791 = vsel %vm1790, %v1789, %v1785
        %v1794 = vsel %vm1790, %v1785, %v1789
        %s1795 = scalar_lea.vmem %s6, 19
        %v1796 = vld [vmem:[%s1795] ss:$8 sm:$0x3]
        %v1798 = vlaneseq
        %v1799 = vshrl.u32 %v1798, 7
        %v1800 = vsub.s32 0, %v1799
        %v1801 = vrot.slane %v1796, %v1800
        %v1802 = vlaneseq
        %v1803 = vshrl.u32 %v1802, 7
        %v1804 = vsub.s32 1, %v1803
        %v1805 = vrot.slane %v1796, %v1804
        %v1808 = vmul.f32 %v1794, %v1801
        %v1809 = vmul.f32 %v1791, %v1805
        %v1810 = vadd.f32 %v1781, %v1808
        %v1811 = vadd.f32 %v1782, %v1809
        %1813 = vrot.lane.b32.xlu0 %v1247, 30
        %v1814 = vpop.permute.xlu0 %1813
        %1817 = vrot.lane.b32.xlu0 %v1245, 30
        %v1818 = vpop.permute.xlu0 %1817
        %vm1819 = vcmask 244736
        %v1820 = vsel %vm1819, %v1818, %v1814
        %v1823 = vsel %vm1819, %v1814, %v1818
        %s1824 = scalar_lea.vmem %s6, 20
        %v1825 = vld [vmem:[%s1824] ss:$8 sm:$0x3]
        %v1827 = vlaneseq
        %v1828 = vshrl.u32 %v1827, 7
        %v1829 = vsub.s32 0, %v1828
        %v1830 = vrot.slane %v1825, %v1829
        %v1831 = vlaneseq
        %v1832 = vshrl.u32 %v1831, 7
        %v1833 = vsub.s32 1, %v1832
        %v1834 = vrot.slane %v1825, %v1833
        %v1837 = vmul.f32 %v1823, %v1830
        %v1838 = vmul.f32 %v1820, %v1834
        %v1839 = vadd.f32 %v1810, %v1837
        %v1840 = vadd.f32 %v1811, %v1838
        %1842 = vrot.lane.b32.xlu0 %v1253, 29
        %v1843 = vpop.permute.xlu0 %1842
        %1846 = vrot.lane.b32.xlu0 %v1251, 29
        %v1847 = vpop.permute.xlu0 %1846
        %vm1848 = vcmask 236544
        %v1849 = vsel %vm1848, %v1847, %v1843
        %v1852 = vsel %vm1848, %v1843, %v1847
        %s1853 = scalar_lea.vmem %s6, 21
        %v1854 = vld [vmem:[%s1853] ss:$8 sm:$0x3]
        %v1856 = vlaneseq
        %v1857 = vshrl.u32 %v1856, 7
        %v1858 = vsub.s32 0, %v1857
        %v1859 = vrot.slane %v1854, %v1858
        %v1860 = vlaneseq
        %v1861 = vshrl.u32 %v1860, 7
        %v1862 = vsub.s32 1, %v1861
        %v1863 = vrot.slane %v1854, %v1862
        %v1866 = vmul.f32 %v1852, %v1859
        %v1867 = vmul.f32 %v1849, %v1863
        %v1868 = vadd.f32 %v1839, %v1866
        %v1869 = vadd.f32 %v1840, %v1867
        %1871 = vrot.lane.b32.xlu0 %v1259, 19
        %v1872 = vpop.permute.xlu0 %1871
        %1875 = vrot.lane.b32.xlu0 %v1257, 19
        %v1876 = vpop.permute.xlu0 %1875
        %vm1877 = vcmask 154624
        %v1878 = vsel %vm1877, %v1876, %v1872
        %v1881 = vsel %vm1877, %v1872, %v1876
        %s1882 = scalar_lea.vmem %s6, 22
        %v1883 = vld [vmem:[%s1882] ss:$8 sm:$0x3]
        %v1885 = vlaneseq
        %v1886 = vshrl.u32 %v1885, 7
        %v1887 = vsub.s32 0, %v1886
        %v1888 = vrot.slane %v1883, %v1887
        %v1889 = vlaneseq
        %v1890 = vshrl.u32 %v1889, 7
        %v1891 = vsub.s32 1, %v1890
        %v1892 = vrot.slane %v1883, %v1891
        %v1895 = vmul.f32 %v1881, %v1888
        %v1896 = vmul.f32 %v1878, %v1892
        %v1897 = vadd.f32 %v1868, %v1895
        %v1898 = vadd.f32 %v1869, %v1896
        %1900 = vrot.lane.b32.xlu0 %v1265, 18
        %v1901 = vpop.permute.xlu0 %1900
        %1904 = vrot.lane.b32.xlu0 %v1263, 18
        %v1905 = vpop.permute.xlu0 %1904
        %vm1906 = vcmask 146432
        %v1907 = vsel %vm1906, %v1905, %v1901
        %v1910 = vsel %vm1906, %v1901, %v1905
        %s1911 = scalar_lea.vmem %s6, 23
        %v1912 = vld [vmem:[%s1911] ss:$8 sm:$0x3]
        %v1914 = vlaneseq
        %v1915 = vshrl.u32 %v1914, 7
        %v1916 = vsub.s32 0, %v1915
        %v1917 = vrot.slane %v1912, %v1916
        %v1918 = vlaneseq
        %v1919 = vshrl.u32 %v1918, 7
        %v1920 = vsub.s32 1, %v1919
        %v1921 = vrot.slane %v1912, %v1920
        %v1924 = vmul.f32 %v1910, %v1917
        %v1925 = vmul.f32 %v1907, %v1921
        %v1926 = vadd.f32 %v1897, %v1924
        %v1927 = vadd.f32 %v1898, %v1925
        %1929 = vrot.lane.b32.xlu0 %v1271, 17
        %v1930 = vpop.permute.xlu0 %1929
        %1933 = vrot.lane.b32.xlu0 %v1269, 17
        %v1934 = vpop.permute.xlu0 %1933
        %vm1935 = vcmask 138240
        %v1936 = vsel %vm1935, %v1934, %v1930
        %v1939 = vsel %vm1935, %v1930, %v1934
        %s1940 = scalar_lea.vmem %s6, 32
        %v1941 = vld [vmem:[%s1940] ss:$8 sm:$0x3]
        %v1943 = vlaneseq
        %v1944 = vshrl.u32 %v1943, 7
        %v1945 = vsub.s32 0, %v1944
        %v1946 = vrot.slane %v1941, %v1945
        %v1947 = vlaneseq
        %v1948 = vshrl.u32 %v1947, 7
        %v1949 = vsub.s32 1, %v1948
        %v1950 = vrot.slane %v1941, %v1949
        %v1953 = vmul.f32 %v1939, %v1946
        %v1954 = vmul.f32 %v1936, %v1950
        %v1955 = vadd.f32 %v1926, %v1953
        %v1956 = vadd.f32 %v1927, %v1954
        %1958 = vrot.lane.b32.xlu0 %v1277, 16
        %v1959 = vpop.permute.xlu0 %1958
        %1962 = vrot.lane.b32.xlu0 %v1275, 16
        %v1963 = vpop.permute.xlu0 %1962
        %vm1964 = vcmask 130048
        %v1965 = vsel %vm1964, %v1963, %v1959
        %v1968 = vsel %vm1964, %v1959, %v1963
        %s1969 = scalar_lea.vmem %s6, 33
        %v1970 = vld [vmem:[%s1969] ss:$8 sm:$0x3]
        %v1972 = vlaneseq
        %v1973 = vshrl.u32 %v1972, 7
        %v1974 = vsub.s32 0, %v1973
        %v1975 = vrot.slane %v1970, %v1974
        %v1976 = vlaneseq
        %v1977 = vshrl.u32 %v1976, 7
        %v1978 = vsub.s32 1, %v1977
        %v1979 = vrot.slane %v1970, %v1978
        %v1982 = vmul.f32 %v1968, %v1975
        %v1983 = vmul.f32 %v1965, %v1979
        %v1984 = vadd.f32 %v1955, %v1982
        %v1985 = vadd.f32 %v1956, %v1983
        %1987 = vrot.lane.b32.xlu0 %v1283, 15
        %v1988 = vpop.permute.xlu0 %1987
        %1991 = vrot.lane.b32.xlu0 %v1281, 15
        %v1992 = vpop.permute.xlu0 %1991
        %vm1993 = vcmask 121856
        %v1994 = vsel %vm1993, %v1992, %v1988
        %v1997 = vsel %vm1993, %v1988, %v1992
        %s1998 = scalar_lea.vmem %s6, 34
        %v1999 = vld [vmem:[%s1998] ss:$8 sm:$0x3]
        %v2001 = vlaneseq
        %v2002 = vshrl.u32 %v2001, 7
        %v2003 = vsub.s32 0, %v2002
        %v2004 = vrot.slane %v1999, %v2003
        %v2005 = vlaneseq
        %v2006 = vshrl.u32 %v2005, 7
        %v2007 = vsub.s32 1, %v2006
        %v2008 = vrot.slane %v1999, %v2007
        %v2011 = vmul.f32 %v1997, %v2004
        %v2012 = vmul.f32 %v1994, %v2008
        %v2013 = vadd.f32 %v1984, %v2011
        %v2014 = vadd.f32 %v1985, %v2012
        %2016 = vrot.lane.b32.xlu0 %v1289, 14
        %v2017 = vpop.permute.xlu0 %2016
        %2020 = vrot.lane.b32.xlu0 %v1287, 14
        %v2021 = vpop.permute.xlu0 %2020
        %vm2022 = vcmask 113664
        %v2023 = vsel %vm2022, %v2021, %v2017
        %v2026 = vsel %vm2022, %v2017, %v2021
        %s2027 = scalar_lea.vmem %s6, 35
        %v2028 = vld [vmem:[%s2027] ss:$8 sm:$0x3]
        %v2030 = vlaneseq
        %v2031 = vshrl.u32 %v2030, 7
        %v2032 = vsub.s32 0, %v2031
        %v2033 = vrot.slane %v2028, %v2032
        %v2034 = vlaneseq
        %v2035 = vshrl.u32 %v2034, 7
        %v2036 = vsub.s32 1, %v2035
        %v2037 = vrot.slane %v2028, %v2036
        %v2040 = vmul.f32 %v2026, %v2033
        %v2041 = vmul.f32 %v2023, %v2037
        %v2042 = vadd.f32 %v2013, %v2040
        %v2043 = vadd.f32 %v2014, %v2041
        %2045 = vrot.lane.b32.xlu0 %v1295, 13
        %v2046 = vpop.permute.xlu0 %2045
        %2049 = vrot.lane.b32.xlu0 %v1293, 13
        %v2050 = vpop.permute.xlu0 %2049
        %vm2051 = vcmask 105472
        %v2052 = vsel %vm2051, %v2050, %v2046
        %v2055 = vsel %vm2051, %v2046, %v2050
        %s2056 = scalar_lea.vmem %s6, 36
        %v2057 = vld [vmem:[%s2056] ss:$8 sm:$0x3]
        %v2059 = vlaneseq
        %v2060 = vshrl.u32 %v2059, 7
        %v2061 = vsub.s32 0, %v2060
        %v2062 = vrot.slane %v2057, %v2061
        %v2063 = vlaneseq
        %v2064 = vshrl.u32 %v2063, 7
        %v2065 = vsub.s32 1, %v2064
        %v2066 = vrot.slane %v2057, %v2065
        %v2069 = vmul.f32 %v2055, %v2062
        %v2070 = vmul.f32 %v2052, %v2066
        %v2071 = vadd.f32 %v2042, %v2069
        %v2072 = vadd.f32 %v2043, %v2070
        %2074 = vrot.lane.b32.xlu0 %v1301, 3
        %v2075 = vpop.permute.xlu0 %2074
        %2078 = vrot.lane.b32.xlu0 %v1299, 3
        %v2079 = vpop.permute.xlu0 %2078
        %vm2080 = vcmask 23552
        %v2081 = vsel %vm2080, %v2079, %v2075
        %v2084 = vsel %vm2080, %v2075, %v2079
        %s2085 = scalar_lea.vmem %s6, 37
        %v2086 = vld [vmem:[%s2085] ss:$8 sm:$0x3]
        %v2088 = vlaneseq
        %v2089 = vshrl.u32 %v2088, 7
        %v2090 = vsub.s32 0, %v2089
        %v2091 = vrot.slane %v2086, %v2090
        %v2092 = vlaneseq
        %v2093 = vshrl.u32 %v2092, 7
        %v2094 = vsub.s32 1, %v2093
        %v2095 = vrot.slane %v2086, %v2094
        %v2098 = vmul.f32 %v2084, %v2091
        %v2099 = vmul.f32 %v2081, %v2095
        %v2100 = vadd.f32 %v2071, %v2098
        %v2101 = vadd.f32 %v2072, %v2099
        %2103 = vrot.lane.b32.xlu0 %v1307, 2
        %v2104 = vpop.permute.xlu0 %2103
        %2107 = vrot.lane.b32.xlu0 %v1305, 2
        %v2108 = vpop.permute.xlu0 %2107
        %vm2109 = vcmask 15360
        %v2110 = vsel %vm2109, %v2108, %v2104
        %v2113 = vsel %vm2109, %v2104, %v2108
        %s2114 = scalar_lea.vmem %s6, 38
        %v2115 = vld [vmem:[%s2114] ss:$8 sm:$0x3]
        %v2117 = vlaneseq
        %v2118 = vshrl.u32 %v2117, 7
        %v2119 = vsub.s32 0, %v2118
        %v2120 = vrot.slane %v2115, %v2119
        %v2121 = vlaneseq
        %v2122 = vshrl.u32 %v2121, 7
        %v2123 = vsub.s32 1, %v2122
        %v2124 = vrot.slane %v2115, %v2123
        %v2127 = vmul.f32 %v2113, %v2120
        %v2128 = vmul.f32 %v2110, %v2124
        %v2129 = vadd.f32 %v2100, %v2127
        %v2130 = vadd.f32 %v2101, %v2128
        %2132 = vrot.lane.b32.xlu0 %v1313, 1
        %v2133 = vpop.permute.xlu0 %2132
        %2136 = vrot.lane.b32.xlu0 %v1311, 1
        %v2137 = vpop.permute.xlu0 %2136
        %v2138 = vsel %vm644, %v2137, %v2133
        %v2141 = vsel %vm644, %v2133, %v2137
        %s2142 = scalar_lea.vmem %s6, 39
        %v2143 = vld [vmem:[%s2142] ss:$8 sm:$0x3]
        %v2145 = vlaneseq
        %v2146 = vshrl.u32 %v2145, 7
        %v2147 = vsub.s32 0, %v2146
        %v2148 = vrot.slane %v2143, %v2147
        %v2149 = vlaneseq
        %v2150 = vshrl.u32 %v2149, 7
        %v2151 = vsub.s32 1, %v2150
        %v2152 = vrot.slane %v2143, %v2151
        %v2155 = vmul.f32 %v2141, %v2148
        %v2156 = vmul.f32 %v2138, %v2152
        %v2157 = vadd.f32 %v2129, %v2155
        %v2158 = vadd.f32 %v2130, %v2156
        %s2159 = scalar_lea.vmem %s6, 48
        %v2160 = vld [vmem:[%s2159] ss:$8 sm:$0x3]
        %v2162 = vlaneseq
        %v2163 = vshrl.u32 %v2162, 7
        %v2164 = vsub.s32 0, %v2163
        %v2165 = vrot.slane %v2160, %v2164
        %v2166 = vlaneseq
        %v2167 = vshrl.u32 %v2166, 7
        %v2168 = vsub.s32 1, %v2167
        %v2169 = vrot.slane %v2160, %v2168
        %v2172 = vmul.f32 %v1317, %v2165
        %v2173 = vmul.f32 %v1319, %v2169
        %v2174 = vadd.f32 %v2157, %v2172
        %v2175 = vadd.f32 %v2158, %v2173
        %2178 = vrot.lane.b32.xlu0 %v1323, 127
        %v2179 = vpop.permute.xlu0 %2178
        %2180 = vrot.lane.b32.xlu0 %v1325, 127
        %v2181 = vpop.permute.xlu0 %2180
        %vm2182 = vcmask 1039360
        %v2183 = vsel %vm2182, %v2179, %v2181
        %v2187 = vsel %vm2182, %v2181, %v2179
        %s2188 = scalar_lea.vmem %s6, 49
        %v2189 = vld [vmem:[%s2188] ss:$8 sm:$0x3]
        %v2191 = vlaneseq
        %v2192 = vshrl.u32 %v2191, 7
        %v2193 = vsub.s32 0, %v2192
        %v2194 = vrot.slane %v2189, %v2193
        %v2195 = vlaneseq
        %v2196 = vshrl.u32 %v2195, 7
        %v2197 = vsub.s32 1, %v2196
        %v2198 = vrot.slane %v2189, %v2197
        %v2201 = vmul.f32 %v2183, %v2194
        %v2202 = vmul.f32 %v2187, %v2198
        %v2203 = vadd.f32 %v2174, %v2201
        %v2204 = vadd.f32 %v2175, %v2202
        %2207 = vrot.lane.b32.xlu0 %v1329, 126
        %v2208 = vpop.permute.xlu0 %2207
        %2209 = vrot.lane.b32.xlu0 %v1331, 126
        %v2210 = vpop.permute.xlu0 %2209
        %vm2211 = vcmask 1031168
        %v2212 = vsel %vm2211, %v2208, %v2210
        %v2216 = vsel %vm2211, %v2210, %v2208
        %s2217 = scalar_lea.vmem %s6, 50
        %v2218 = vld [vmem:[%s2217] ss:$8 sm:$0x3]
        %v2220 = vlaneseq
        %v2221 = vshrl.u32 %v2220, 7
        %v2222 = vsub.s32 0, %v2221
        %v2223 = vrot.slane %v2218, %v2222
        %v2224 = vlaneseq
        %v2225 = vshrl.u32 %v2224, 7
        %v2226 = vsub.s32 1, %v2225
        %v2227 = vrot.slane %v2218, %v2226
        %v2230 = vmul.f32 %v2212, %v2223
        %v2231 = vmul.f32 %v2216, %v2227
        %v2232 = vadd.f32 %v2203, %v2230
        %v2233 = vadd.f32 %v2204, %v2231
        %2236 = vrot.lane.b32.xlu0 %v1335, 125
        %v2237 = vpop.permute.xlu0 %2236
        %2238 = vrot.lane.b32.xlu0 %v1337, 125
        %v2239 = vpop.permute.xlu0 %2238
        %vm2240 = vcmask 1022976
        %v2241 = vsel %vm2240, %v2237, %v2239
        %v2245 = vsel %vm2240, %v2239, %v2237
        %s2246 = scalar_lea.vmem %s6, 51
        %v2247 = vld [vmem:[%s2246] ss:$8 sm:$0x3]
        %v2249 = vlaneseq
        %v2250 = vshrl.u32 %v2249, 7
        %v2251 = vsub.s32 0, %v2250
        %v2252 = vrot.slane %v2247, %v2251
        %v2253 = vlaneseq
        %v2254 = vshrl.u32 %v2253, 7
        %v2255 = vsub.s32 1, %v2254
        %v2256 = vrot.slane %v2247, %v2255
        %v2259 = vmul.f32 %v2241, %v2252
        %v2260 = vmul.f32 %v2245, %v2256
        %v2261 = vadd.f32 %v2232, %v2259
        %v2262 = vadd.f32 %v2233, %v2260
        %2265 = vrot.lane.b32.xlu0 %v1341, 115
        %v2266 = vpop.permute.xlu0 %2265
        %2267 = vrot.lane.b32.xlu0 %v1343, 115
        %v2268 = vpop.permute.xlu0 %2267
        %vm2269 = vcmask 941056
        %v2270 = vsel %vm2269, %v2266, %v2268
        %v2274 = vsel %vm2269, %v2268, %v2266
        %s2275 = scalar_lea.vmem %s6, 52
        %v2276 = vld [vmem:[%s2275] ss:$8 sm:$0x3]
        %v2278 = vlaneseq
        %v2279 = vshrl.u32 %v2278, 7
        %v2280 = vsub.s32 0, %v2279
        %v2281 = vrot.slane %v2276, %v2280
        %v2282 = vlaneseq
        %v2283 = vshrl.u32 %v2282, 7
        %v2284 = vsub.s32 1, %v2283
        %v2285 = vrot.slane %v2276, %v2284
        %v2288 = vmul.f32 %v2270, %v2281
        %v2289 = vmul.f32 %v2274, %v2285
        %v2290 = vadd.f32 %v2261, %v2288
        %v2291 = vadd.f32 %v2262, %v2289
        %2294 = vrot.lane.b32.xlu0 %v1347, 114
        %v2295 = vpop.permute.xlu0 %2294
        %2296 = vrot.lane.b32.xlu0 %v1349, 114
        %v2297 = vpop.permute.xlu0 %2296
        %vm2298 = vcmask 932864
        %v2299 = vsel %vm2298, %v2295, %v2297
        %v2303 = vsel %vm2298, %v2297, %v2295
        %s2304 = scalar_lea.vmem %s6, 53
        %v2305 = vld [vmem:[%s2304] ss:$8 sm:$0x3]
        %v2307 = vlaneseq
        %v2308 = vshrl.u32 %v2307, 7
        %v2309 = vsub.s32 0, %v2308
        %v2310 = vrot.slane %v2305, %v2309
        %v2311 = vlaneseq
        %v2312 = vshrl.u32 %v2311, 7
        %v2313 = vsub.s32 1, %v2312
        %v2314 = vrot.slane %v2305, %v2313
        %v2317 = vmul.f32 %v2299, %v2310
        %v2318 = vmul.f32 %v2303, %v2314
        %v2319 = vadd.f32 %v2290, %v2317
        %v2320 = vadd.f32 %v2291, %v2318
        %2323 = vrot.lane.b32.xlu0 %v1353, 113
        %v2324 = vpop.permute.xlu0 %2323
        %2325 = vrot.lane.b32.xlu0 %v1355, 113
        %v2326 = vpop.permute.xlu0 %2325
        %vm2327 = vcmask 924672
        %v2328 = vsel %vm2327, %v2324, %v2326
        %v2332 = vsel %vm2327, %v2326, %v2324
        %s2333 = scalar_lea.vmem %s6, 54
        %v2334 = vld [vmem:[%s2333] ss:$8 sm:$0x3]
        %v2336 = vlaneseq
        %v2337 = vshrl.u32 %v2336, 7
        %v2338 = vsub.s32 0, %v2337
        %v2339 = vrot.slane %v2334, %v2338
        %v2340 = vlaneseq
        %v2341 = vshrl.u32 %v2340, 7
        %v2342 = vsub.s32 1, %v2341
        %v2343 = vrot.slane %v2334, %v2342
        %v2346 = vmul.f32 %v2328, %v2339
        %v2347 = vmul.f32 %v2332, %v2343
        %v2348 = vadd.f32 %v2319, %v2346
        %v2349 = vadd.f32 %v2320, %v2347
        %2352 = vrot.lane.b32.xlu0 %v1359, 112
        %v2353 = vpop.permute.xlu0 %2352
        %2354 = vrot.lane.b32.xlu0 %v1361, 112
        %v2355 = vpop.permute.xlu0 %2354
        %vm2356 = vcmask 916480
        %v2357 = vsel %vm2356, %v2353, %v2355
        %v2361 = vsel %vm2356, %v2355, %v2353
        %s2362 = scalar_lea.vmem %s6, 55
        %v2363 = vld [vmem:[%s2362] ss:$8 sm:$0x3]
        %v2365 = vlaneseq
        %v2366 = vshrl.u32 %v2365, 7
        %v2367 = vsub.s32 0, %v2366
        %v2368 = vrot.slane %v2363, %v2367
        %v2369 = vlaneseq
        %v2370 = vshrl.u32 %v2369, 7
        %v2371 = vsub.s32 1, %v2370
        %v2372 = vrot.slane %v2363, %v2371
        %v2375 = vmul.f32 %v2357, %v2368
        %v2376 = vmul.f32 %v2361, %v2372
        %v2377 = vadd.f32 %v2348, %v2375
        %v2378 = vadd.f32 %v2349, %v2376
        %2381 = vrot.lane.b32.xlu0 %v1365, 111
        %v2382 = vpop.permute.xlu0 %2381
        %2383 = vrot.lane.b32.xlu0 %v1367, 111
        %v2384 = vpop.permute.xlu0 %2383
        %vm2385 = vcmask 908288
        %v2386 = vsel %vm2385, %v2382, %v2384
        %v2390 = vsel %vm2385, %v2384, %v2382
        %s2391 = scalar_lea.vmem %s6, 64
        %v2392 = vld [vmem:[%s2391] ss:$8 sm:$0x3]
        %v2394 = vlaneseq
        %v2395 = vshrl.u32 %v2394, 7
        %v2396 = vsub.s32 0, %v2395
        %v2397 = vrot.slane %v2392, %v2396
        %v2398 = vlaneseq
        %v2399 = vshrl.u32 %v2398, 7
        %v2400 = vsub.s32 1, %v2399
        %v2401 = vrot.slane %v2392, %v2400
        %v2404 = vmul.f32 %v2386, %v2397
        %v2405 = vmul.f32 %v2390, %v2401
        %v2406 = vadd.f32 %v2377, %v2404
        %v2407 = vadd.f32 %v2378, %v2405
        %2410 = vrot.lane.b32.xlu0 %v1371, 110
        %v2411 = vpop.permute.xlu0 %2410
        %2412 = vrot.lane.b32.xlu0 %v1373, 110
        %v2413 = vpop.permute.xlu0 %2412
        %vm2414 = vcmask 900096
        %v2415 = vsel %vm2414, %v2411, %v2413
        %v2419 = vsel %vm2414, %v2413, %v2411
        %s2420 = scalar_lea.vmem %s6, 65
        %v2421 = vld [vmem:[%s2420] ss:$8 sm:$0x3]
        %v2423 = vlaneseq
        %v2424 = vshrl.u32 %v2423, 7
        %v2425 = vsub.s32 0, %v2424
        %v2426 = vrot.slane %v2421, %v2425
        %v2427 = vlaneseq
        %v2428 = vshrl.u32 %v2427, 7
        %v2429 = vsub.s32 1, %v2428
        %v2430 = vrot.slane %v2421, %v2429
        %v2433 = vmul.f32 %v2415, %v2426
        %v2434 = vmul.f32 %v2419, %v2430
        %v2435 = vadd.f32 %v2406, %v2433
        %v2436 = vadd.f32 %v2407, %v2434
        %2439 = vrot.lane.b32.xlu0 %v1377, 109
        %v2440 = vpop.permute.xlu0 %2439
        %2441 = vrot.lane.b32.xlu0 %v1379, 109
        %v2442 = vpop.permute.xlu0 %2441
        %vm2443 = vcmask 891904
        %v2444 = vsel %vm2443, %v2440, %v2442
        %v2448 = vsel %vm2443, %v2442, %v2440
        %s2449 = scalar_lea.vmem %s6, 66
        %v2450 = vld [vmem:[%s2449] ss:$8 sm:$0x3]
        %v2452 = vlaneseq
        %v2453 = vshrl.u32 %v2452, 7
        %v2454 = vsub.s32 0, %v2453
        %v2455 = vrot.slane %v2450, %v2454
        %v2456 = vlaneseq
        %v2457 = vshrl.u32 %v2456, 7
        %v2458 = vsub.s32 1, %v2457
        %v2459 = vrot.slane %v2450, %v2458
        %v2462 = vmul.f32 %v2444, %v2455
        %v2463 = vmul.f32 %v2448, %v2459
        %v2464 = vadd.f32 %v2435, %v2462
        %v2465 = vadd.f32 %v2436, %v2463
        %2468 = vrot.lane.b32.xlu0 %v1383, 99
        %v2469 = vpop.permute.xlu0 %2468
        %2470 = vrot.lane.b32.xlu0 %v1385, 99
        %v2471 = vpop.permute.xlu0 %2470
        %vm2472 = vcmask 809984
        %v2473 = vsel %vm2472, %v2469, %v2471
        %v2477 = vsel %vm2472, %v2471, %v2469
        %s2478 = scalar_lea.vmem %s6, 67
        %v2479 = vld [vmem:[%s2478] ss:$8 sm:$0x3]
        %v2481 = vlaneseq
        %v2482 = vshrl.u32 %v2481, 7
        %v2483 = vsub.s32 0, %v2482
        %v2484 = vrot.slane %v2479, %v2483
        %v2485 = vlaneseq
        %v2486 = vshrl.u32 %v2485, 7
        %v2487 = vsub.s32 1, %v2486
        %v2488 = vrot.slane %v2479, %v2487
        %v2491 = vmul.f32 %v2473, %v2484
        %v2492 = vmul.f32 %v2477, %v2488
        %v2493 = vadd.f32 %v2464, %v2491
        %v2494 = vadd.f32 %v2465, %v2492
        %2497 = vrot.lane.b32.xlu0 %v1389, 98
        %v2498 = vpop.permute.xlu0 %2497
        %2499 = vrot.lane.b32.xlu0 %v1391, 98
        %v2500 = vpop.permute.xlu0 %2499
        %vm2501 = vcmask 801792
        %v2502 = vsel %vm2501, %v2498, %v2500
        %v2506 = vsel %vm2501, %v2500, %v2498
        %s2507 = scalar_lea.vmem %s6, 68
        %v2508 = vld [vmem:[%s2507] ss:$8 sm:$0x3]
        %v2510 = vlaneseq
        %v2511 = vshrl.u32 %v2510, 7
        %v2512 = vsub.s32 0, %v2511
        %v2513 = vrot.slane %v2508, %v2512
        %v2514 = vlaneseq
        %v2515 = vshrl.u32 %v2514, 7
        %v2516 = vsub.s32 1, %v2515
        %v2517 = vrot.slane %v2508, %v2516
        %v2520 = vmul.f32 %v2502, %v2513
        %v2521 = vmul.f32 %v2506, %v2517
        %v2522 = vadd.f32 %v2493, %v2520
        %v2523 = vadd.f32 %v2494, %v2521
        %2526 = vrot.lane.b32.xlu0 %v1395, 97
        %v2527 = vpop.permute.xlu0 %2526
        %2528 = vrot.lane.b32.xlu0 %v1397, 97
        %v2529 = vpop.permute.xlu0 %2528
        %vm2530 = vcmask 793600
        %v2531 = vsel %vm2530, %v2527, %v2529
        %v2535 = vsel %vm2530, %v2529, %v2527
        %s2536 = scalar_lea.vmem %s6, 69
        %v2537 = vld [vmem:[%s2536] ss:$8 sm:$0x3]
        %v2539 = vlaneseq
        %v2540 = vshrl.u32 %v2539, 7
        %v2541 = vsub.s32 0, %v2540
        %v2542 = vrot.slane %v2537, %v2541
        %v2543 = vlaneseq
        %v2544 = vshrl.u32 %v2543, 7
        %v2545 = vsub.s32 1, %v2544
        %v2546 = vrot.slane %v2537, %v2545
        %v2549 = vmul.f32 %v2531, %v2542
        %v2550 = vmul.f32 %v2535, %v2546
        %v2551 = vadd.f32 %v2522, %v2549
        %v2552 = vadd.f32 %v2523, %v2550
        %2555 = vrot.lane.b32.xlu0 %v1401, 96
        %v2556 = vpop.permute.xlu0 %2555
        %2557 = vrot.lane.b32.xlu0 %v1403, 96
        %v2558 = vpop.permute.xlu0 %2557
        %vm2559 = vcmask 785408
        %v2560 = vsel %vm2559, %v2556, %v2558
        %v2564 = vsel %vm2559, %v2558, %v2556
        %s2565 = scalar_lea.vmem %s6, 70
        %v2566 = vld [vmem:[%s2565] ss:$8 sm:$0x3]
        %v2568 = vlaneseq
        %v2569 = vshrl.u32 %v2568, 7
        %v2570 = vsub.s32 0, %v2569
        %v2571 = vrot.slane %v2566, %v2570
        %v2572 = vlaneseq
        %v2573 = vshrl.u32 %v2572, 7
        %v2574 = vsub.s32 1, %v2573
        %v2575 = vrot.slane %v2566, %v2574
        %v2578 = vmul.f32 %v2560, %v2571
        %v2579 = vmul.f32 %v2564, %v2575
        %v2580 = vadd.f32 %v2551, %v2578
        %v2581 = vadd.f32 %v2552, %v2579
        %2584 = vrot.lane.b32.xlu0 %v1407, 95
        %v2585 = vpop.permute.xlu0 %2584
        %2586 = vrot.lane.b32.xlu0 %v1409, 95
        %v2587 = vpop.permute.xlu0 %2586
        %vm2588 = vcmask 777216
        %v2589 = vsel %vm2588, %v2585, %v2587
        %v2593 = vsel %vm2588, %v2587, %v2585
        %s2594 = scalar_lea.vmem %s6, 71
        %v2595 = vld [vmem:[%s2594] ss:$8 sm:$0x3]
        %v2597 = vlaneseq
        %v2598 = vshrl.u32 %v2597, 7
        %v2599 = vsub.s32 0, %v2598
        %v2600 = vrot.slane %v2595, %v2599
        %v2601 = vlaneseq
        %v2602 = vshrl.u32 %v2601, 7
        %v2603 = vsub.s32 1, %v2602
        %v2604 = vrot.slane %v2595, %v2603
        %v2607 = vmul.f32 %v2589, %v2600
        %v2608 = vmul.f32 %v2593, %v2604
        %v2609 = vadd.f32 %v2580, %v2607
        %v2610 = vadd.f32 %v2581, %v2608
        %2613 = vrot.lane.b32.xlu0 %v1413, 94
        %v2614 = vpop.permute.xlu0 %2613
        %2615 = vrot.lane.b32.xlu0 %v1415, 94
        %v2616 = vpop.permute.xlu0 %2615
        %vm2617 = vcmask 769024
        %v2618 = vsel %vm2617, %v2614, %v2616
        %v2622 = vsel %vm2617, %v2616, %v2614
        %s2623 = scalar_lea.vmem %s6, 80
        %v2624 = vld [vmem:[%s2623] ss:$8 sm:$0x3]
        %v2626 = vlaneseq
        %v2627 = vshrl.u32 %v2626, 7
        %v2628 = vsub.s32 0, %v2627
        %v2629 = vrot.slane %v2624, %v2628
        %v2630 = vlaneseq
        %v2631 = vshrl.u32 %v2630, 7
        %v2632 = vsub.s32 1, %v2631
        %v2633 = vrot.slane %v2624, %v2632
        %v2636 = vmul.f32 %v2618, %v2629
        %v2637 = vmul.f32 %v2622, %v2633
        %v2638 = vadd.f32 %v2609, %v2636
        %v2639 = vadd.f32 %v2610, %v2637
        %2642 = vrot.lane.b32.xlu0 %v1419, 93
        %v2643 = vpop.permute.xlu0 %2642
        %2644 = vrot.lane.b32.xlu0 %v1421, 93
        %v2645 = vpop.permute.xlu0 %2644
        %vm2646 = vcmask 760832
        %v2647 = vsel %vm2646, %v2643, %v2645
        %v2651 = vsel %vm2646, %v2645, %v2643
        %s2652 = scalar_lea.vmem %s6, 81
        %v2653 = vld [vmem:[%s2652] ss:$8 sm:$0x3]
        %v2655 = vlaneseq
        %v2656 = vshrl.u32 %v2655, 7
        %v2657 = vsub.s32 0, %v2656
        %v2658 = vrot.slane %v2653, %v2657
        %v2659 = vlaneseq
        %v2660 = vshrl.u32 %v2659, 7
        %v2661 = vsub.s32 1, %v2660
        %v2662 = vrot.slane %v2653, %v2661
        %v2665 = vmul.f32 %v2647, %v2658
        %v2666 = vmul.f32 %v2651, %v2662
        %v2667 = vadd.f32 %v2638, %v2665
        %v2668 = vadd.f32 %v2639, %v2666
        %2671 = vrot.lane.b32.xlu0 %v1425, 83
        %v2672 = vpop.permute.xlu0 %2671
        %2673 = vrot.lane.b32.xlu0 %v1427, 83
        %v2674 = vpop.permute.xlu0 %2673
        %vm2675 = vcmask 678912
        %v2676 = vsel %vm2675, %v2672, %v2674
        %v2680 = vsel %vm2675, %v2674, %v2672
        %s2681 = scalar_lea.vmem %s6, 82
        %v2682 = vld [vmem:[%s2681] ss:$8 sm:$0x3]
        %v2684 = vlaneseq
        %v2685 = vshrl.u32 %v2684, 7
        %v2686 = vsub.s32 0, %v2685
        %v2687 = vrot.slane %v2682, %v2686
        %v2688 = vlaneseq
        %v2689 = vshrl.u32 %v2688, 7
        %v2690 = vsub.s32 1, %v2689
        %v2691 = vrot.slane %v2682, %v2690
        %v2694 = vmul.f32 %v2676, %v2687
        %v2695 = vmul.f32 %v2680, %v2691
        %v2696 = vadd.f32 %v2667, %v2694
        %v2697 = vadd.f32 %v2668, %v2695
        %2700 = vrot.lane.b32.xlu0 %v1431, 82
        %v2701 = vpop.permute.xlu0 %2700
        %2702 = vrot.lane.b32.xlu0 %v1433, 82
        %v2703 = vpop.permute.xlu0 %2702
        %vm2704 = vcmask 670720
        %v2705 = vsel %vm2704, %v2701, %v2703
        %v2709 = vsel %vm2704, %v2703, %v2701
        %s2710 = scalar_lea.vmem %s6, 83
        %v2711 = vld [vmem:[%s2710] ss:$8 sm:$0x3]
        %v2713 = vlaneseq
        %v2714 = vshrl.u32 %v2713, 7
        %v2715 = vsub.s32 0, %v2714
        %v2716 = vrot.slane %v2711, %v2715
        %v2717 = vlaneseq
        %v2718 = vshrl.u32 %v2717, 7
        %v2719 = vsub.s32 1, %v2718
        %v2720 = vrot.slane %v2711, %v2719
        %v2723 = vmul.f32 %v2705, %v2716
        %v2724 = vmul.f32 %v2709, %v2720
        %v2725 = vadd.f32 %v2696, %v2723
        %v2726 = vadd.f32 %v2697, %v2724
        %2729 = vrot.lane.b32.xlu0 %v1437, 81
        %v2730 = vpop.permute.xlu0 %2729
        %2731 = vrot.lane.b32.xlu0 %v1439, 81
        %v2732 = vpop.permute.xlu0 %2731
        %vm2733 = vcmask 662528
        %v2734 = vsel %vm2733, %v2730, %v2732
        %v2738 = vsel %vm2733, %v2732, %v2730
        %s2739 = scalar_lea.vmem %s6, 84
        %v2740 = vld [vmem:[%s2739] ss:$8 sm:$0x3]
        %v2742 = vlaneseq
        %v2743 = vshrl.u32 %v2742, 7
        %v2744 = vsub.s32 0, %v2743
        %v2745 = vrot.slane %v2740, %v2744
        %v2746 = vlaneseq
        %v2747 = vshrl.u32 %v2746, 7
        %v2748 = vsub.s32 1, %v2747
        %v2749 = vrot.slane %v2740, %v2748
        %v2752 = vmul.f32 %v2734, %v2745
        %v2753 = vmul.f32 %v2738, %v2749
        %v2754 = vadd.f32 %v2725, %v2752
        %v2755 = vadd.f32 %v2726, %v2753
        %2758 = vrot.lane.b32.xlu0 %v1443, 80
        %v2759 = vpop.permute.xlu0 %2758
        %2760 = vrot.lane.b32.xlu0 %v1445, 80
        %v2761 = vpop.permute.xlu0 %2760
        %vm2762 = vcmask 654336
        %v2763 = vsel %vm2762, %v2759, %v2761
        %v2767 = vsel %vm2762, %v2761, %v2759
        %s2768 = scalar_lea.vmem %s6, 85
        %v2769 = vld [vmem:[%s2768] ss:$8 sm:$0x3]
        %v2771 = vlaneseq
        %v2772 = vshrl.u32 %v2771, 7
        %v2773 = vsub.s32 0, %v2772
        %v2774 = vrot.slane %v2769, %v2773
        %v2775 = vlaneseq
        %v2776 = vshrl.u32 %v2775, 7
        %v2777 = vsub.s32 1, %v2776
        %v2778 = vrot.slane %v2769, %v2777
        %v2781 = vmul.f32 %v2763, %v2774
        %v2782 = vmul.f32 %v2767, %v2778
        %v2783 = vadd.f32 %v2754, %v2781
        %v2784 = vadd.f32 %v2755, %v2782
        %2787 = vrot.lane.b32.xlu0 %v1449, 79
        %v2788 = vpop.permute.xlu0 %2787
        %2789 = vrot.lane.b32.xlu0 %v1451, 79
        %v2790 = vpop.permute.xlu0 %2789
        %vm2791 = vcmask 646144
        %v2792 = vsel %vm2791, %v2788, %v2790
        %v2796 = vsel %vm2791, %v2790, %v2788
        %s2797 = scalar_lea.vmem %s6, 86
        %v2798 = vld [vmem:[%s2797] ss:$8 sm:$0x3]
        %v2800 = vlaneseq
        %v2801 = vshrl.u32 %v2800, 7
        %v2802 = vsub.s32 0, %v2801
        %v2803 = vrot.slane %v2798, %v2802
        %v2804 = vlaneseq
        %v2805 = vshrl.u32 %v2804, 7
        %v2806 = vsub.s32 1, %v2805
        %v2807 = vrot.slane %v2798, %v2806
        %v2810 = vmul.f32 %v2792, %v2803
        %v2811 = vmul.f32 %v2796, %v2807
        %v2812 = vadd.f32 %v2783, %v2810
        %v2813 = vadd.f32 %v2784, %v2811
        %2816 = vrot.lane.b32.xlu0 %v1455, 78
        %v2817 = vpop.permute.xlu0 %2816
        %2818 = vrot.lane.b32.xlu0 %v1457, 78
        %v2819 = vpop.permute.xlu0 %2818
        %vm2820 = vcmask 637952
        %v2821 = vsel %vm2820, %v2817, %v2819
        %v2825 = vsel %vm2820, %v2819, %v2817
        %s2826 = scalar_lea.vmem %s6, 87
        %v2827 = vld [vmem:[%s2826] ss:$8 sm:$0x3]
        %v2829 = vlaneseq
        %v2830 = vshrl.u32 %v2829, 7
        %v2831 = vsub.s32 0, %v2830
        %v2832 = vrot.slane %v2827, %v2831
        %v2833 = vlaneseq
        %v2834 = vshrl.u32 %v2833, 7
        %v2835 = vsub.s32 1, %v2834
        %v2836 = vrot.slane %v2827, %v2835
        %v2839 = vmul.f32 %v2821, %v2832
        %v2840 = vmul.f32 %v2825, %v2836
        %v2841 = vadd.f32 %v2812, %v2839
        %v2842 = vadd.f32 %v2813, %v2840
        %2845 = vrot.lane.b32.xlu0 %v1461, 77
        %v2846 = vpop.permute.xlu0 %2845
        %2847 = vrot.lane.b32.xlu0 %v1463, 77
        %v2848 = vpop.permute.xlu0 %2847
        %vm2849 = vcmask 629760
        %v2850 = vsel %vm2849, %v2846, %v2848
        %v2854 = vsel %vm2849, %v2848, %v2846
        %s2855 = scalar_lea.vmem %s6, 96
        %v2856 = vld [vmem:[%s2855] ss:$8 sm:$0x3]
        %v2858 = vlaneseq
        %v2859 = vshrl.u32 %v2858, 7
        %v2860 = vsub.s32 0, %v2859
        %v2861 = vrot.slane %v2856, %v2860
        %v2862 = vlaneseq
        %v2863 = vshrl.u32 %v2862, 7
        %v2864 = vsub.s32 1, %v2863
        %v2865 = vrot.slane %v2856, %v2864
        %v2868 = vmul.f32 %v2850, %v2861
        %v2869 = vmul.f32 %v2854, %v2865
        %v2870 = vadd.f32 %v2841, %v2868
        %v2871 = vadd.f32 %v2842, %v2869
        %v2872 = vstv %s827
        %v2873 = vadd.f32 %v2870, %v2872
        %v2874 = vadd.f32 %v2871, %v2872
        %v2875 = vxor.u32 %v2873, 2147483648
        %v2876 = vxor.u32 %v2874, 2147483648
        %v2877 = vmul.f32 %v2875, 1.442695
        %v2878 = vpow.pop %v2877
        %v2879 = vmul.f32 %v2876, 1.442695
        %v2880 = vpow.pop %v2879
        %v2881 = vadd.f32 %v2878, 1.0
        %v2882 = vadd.f32 %v2880, 1.0
        %v2883 = vrcp.pop %v2881
        %v2884 = vmul.f32 1.0, %v2883
        %v2885 = vrcp.pop %v2882
        %v2886 = vmul.f32 1.0, %v2885
        loop: start=0, step=1, limit=8
        $region72: #{tpu_custom_call.1} parent=55 // loop_pre_header
          _
        $region73: #{tpu_custom_call.1} parent=55 // loop_header
          %s2888 = sphi 0, %s2892
          %p2889 = scmp.ge.s32.totalorder %s2888, 8
        $region74: #{tpu_custom_call.1} parent=55 // loop_header_branch
          %2891 = sbr.rel (%p2889) target = $region78
        $region75: #{tpu_custom_call.1} parent=55 // loop_body
          %s2893 = smul.u32 %s2888, 2
          %s2894 = smul.addr %s2893, 8
          %s2895 = scalar_lea.vmem %s357, %s2894
          %v2896 = vld [vmem:[%s2895] sm:$0xff]
          %v2897 = vld [vmem:[%s2895 + $0x8] sm:$0xff]
          %s2898 = scalar_lea.vmem [#allocation2], %s2888
          %v2899 = vld [vmem:[%s2898] sm:$0x1]
          %s2900 = sld [smem:[#allocation3 + %s2888]]
          %s2901 = sshra.s32 %s2888, 7
          %s2902 = sand.u32 %s2888, 127
          %s2903 = sadd.s32 %s2901, 1
          %s2904 = smul.u32 %s2903, 128
          %s2905 = sshra.s32 %s2888, 7
          %s2906 = sand.u32 %s2888, 127
          %s2907 = sadd.s32 %s2904, %s2906
          %s2908 = sld [smem:[#allocation3 + %s2907]]
          %s2909 = sadd.s32 %s2901, 2
          %s2910 = smul.u32 %s2909, 128
          %s2911 = sadd.s32 %s2910, %s2906
          %s2912 = sld [smem:[#allocation3 + %s2911]]
          %s2913 = sadd.s32 %s2901, 3
          %s2914 = smul.u32 %s2913, 128
          %s2915 = sadd.s32 %s2914, %s2906
          %s2916 = sld [smem:[#allocation3 + %s2915]]
          %v2917 = vstv %s2900
          %v2918 = vmul.f32 %v2896, %v2917
          %v2919 = vmul.f32 %v2897, %v2917
          %v2920 = vstv %s2908
          %v2921 = vadd.f32 %v2918, %v2920
          %v2922 = vadd.f32 %v2919, %v2920
          %s2924 = vtos %v2899
          %v2925 = vstv %s2924
          %v2927 = vmul.f32 %v2921, %v2925
          %v2928 = vmul.f32 %v2922, %v2925
          %v2929 = vstv %s2912
          %v2930 = vmul.f32 %v2896, %v2929
          %v2931 = vmul.f32 %v2897, %v2929
          %v2932 = vstv %s2916
          %v2933 = vadd.f32 %v2930, %v2932
          %v2934 = vadd.f32 %v2931, %v2932
          %v2935 = vmul.f32 %v2933, %v2884
          %v2936 = vmul.f32 %v2934, %v2886
          %v2937 = vmax.f32 %v2927, %v2935
          %v2938 = vmax.f32 %v2928, %v2936
          %s2939 = smul.addr %s2893, 8
          %s2940 = scalar_lea.vmem %s352, %s2939 [#allocation8]
          %2941 = vst [vmem:[%s2940] sm:$0xff] %v2937
          %2942 = vst [vmem:[%s2940 + $0x8] sm:$0xff] %v2938
        $region76: #{tpu_custom_call.1} parent=55 // loop_footer
          %s2892 = sadd.s32 1, %s2888
        $region77: #{tpu_custom_call.1} parent=55 // loop_footer_branch
          %2887 = sbr.rel target = $region73
        $region78: #{tpu_custom_call.1} parent=55 // loop_exit
          _
        %s2943 = sand.u32 %s227, 1
        %s2944 = scalar_lea.sflag [#allocation4], %s2943
        %s2945 = sand.u32 %s227, 1
        %s2946 = smul.addr %s2945, 128
        %s2947 = scalar_lea.vmem [#allocation8], %s2946
        // Predicated region
        $region79: #{tpu_custom_call.1} parent=55 // pred_check
          %p2948 = pneg %p237
        $region80: #{tpu_custom_call.1} parent=55 // pred_check_branch
          %2950 = sbr.rel (%p2948) target = $region82
        $region81: #{tpu_custom_call.1} parent=55 // pred_region
          %s2952 = ssub.s32 2048, 2048
          %2953 = vsyncadd %s2944, %s2952
          %s2954 = smul.addr %s25, 16
          %s2955 = smul.addr %s2954, 128
          %s2956 = scalar_lea.hbm %s9, %s2955
          %s2957 = sshll.u32 %s2947, 4
          %s2958 = int_to_ptr.vmem [resolvable:$true] %s2957
          %2963 = dma.vmem_to_hbm [thread:$0]  %s2958, 2048, %s2956, %s2944, 256, 256, 16
        $region82: #{tpu_custom_call.1} parent=55 // pred_fallthru
          _
      $region56: #{tpu_custom_call.1} parent=5 // pred_fallthru
        _
      %p2964 = scmp.le.s32.totalorder 2, %s20
      // Predicated region
      $region83: #{tpu_custom_call.1} parent=5 // pred_check
        %p2965 = pneg %p2964
      $region84: #{tpu_custom_call.1} parent=5 // pred_check_branch
        %2967 = sbr.rel (%p2965) target = $region86
      $region85: #{tpu_custom_call.1} parent=5 // pred_region
        %s2968 = ssub.s32 %s20, 2
        // Predicated region
        $region87: #{tpu_custom_call.1} parent=85 // pred_check
          %p2969 = pneg %p243
        $region88: #{tpu_custom_call.1} parent=85 // pred_check_branch
          %2971 = sbr.rel (%p2969) target = $region90
        $region89: #{tpu_custom_call.1} parent=85 // pred_region
          %s2972 = sand.u32 %s228, 1
          %s2973 = scalar_lea.sflag [#allocation4], %s2972
          %s2974 = sand.u32 %s228, 1
          %s2975 = smul.addr %s2974, 128
          %s2976 = scalar_lea.vmem [#allocation8], %s2975
          %2977 = dma.done %s2973, 2048
        $region90: #{tpu_custom_call.1} parent=85 // pred_fallthru
          _
      $region86: #{tpu_custom_call.1} parent=5 // pred_fallthru
        _
    $region6: #{tpu_custom_call.1} parent=1 // loop_footer
      %s24 = sadd.s32 1, %s20
    $region7: #{tpu_custom_call.1} parent=1 // loop_footer_branch
      %19 = sbr.rel target = $region3
    $region8: #{tpu_custom_call.1} parent=1 // loop_exit
      _
    %2978 = vsyncpa [#allocation4], 1
    %s2979 = scalar_lea.sflag [#allocation4], 1
    %2980 = vsyncpa %s2979, 1
    %2981 = vsyncpa [#allocation5], 1
    %s2982 = scalar_lea.sflag [#allocation5], 1
    %2983 = vsyncpa %s2982, 1
    %2984 = vsyncpa [#allocation7], 1

</llo_original>
